<compile_context>
chip_gen: v6e
topology: v6e:2x2x1
jax: 0.10.0
libtpu: 0.0.40
codegen_flags: <defaults>
</compile_context>

<pallas_src>
import math
import jax
import jax.numpy as jnp
from jax.experimental import pallas as pl
from jax.experimental.pallas import tpu as pltpu

C_IN = 768    # conv_1 in_channels
C_HID = 768   # conv_1 out_channels / conv_2 in_channels
C_OUT = 128   # conv_2 out_channels


def _round_up(x, m):
    return ((x + m - 1) // m) * m


def _cost_estimate(n_pixels, x_itemsize, w_itemsize):
    return pl.CostEstimate(
        flops=2 * n_pixels * (C_IN * C_HID + C_HID * C_OUT),
        transcendentals=0,
        bytes_accessed=(n_pixels * C_IN * x_itemsize          # activation in
                        + n_pixels * C_OUT * 4                # output
                        + (C_IN * C_HID + C_HID * C_OUT) * w_itemsize
                        + (C_HID + C_OUT) * 4),
    )


# ----------------------------- kernels --------------------------------------

def _proj_head_tokens_kernel(x_ref, w1_ref, b1_ref, w2_ref, b2_ref, o_ref):
    # x_ref:  (tm, C_IN)   original dtype (f32); cast in-kernel (VPU filler)
    # w1_ref: (C_IN, C_HID)  compute dtype (bf16 default)
    # b1_ref: (1, C_HID)     f32
    # w2_ref: (C_HID, C_OUT) compute dtype
    # b2_ref: (1, C_OUT)     f32
    # o_ref:  (tm, C_OUT)    f32
    cdt = w1_ref.dtype
    x = x_ref[...].astype(cdt)
    h = jnp.dot(x, w1_ref[...], preferred_element_type=jnp.float32)
    h = jnp.maximum(h + b1_ref[...], 0.0).astype(cdt)
    out = jnp.dot(h, w2_ref[...], preferred_element_type=jnp.float32) + b2_ref[...]
    o_ref[...] = out.astype(o_ref.dtype)


def _proj_head_cm_kernel(x_ref, w1_ref, b1_ref, w2_ref, b2_ref, o_ref):
    # Channel-major variant: pixels on the lane axis, weights in (out, in).
    # x_ref:  (C_IN, t_hw)   original dtype
    # w1_ref: (C_HID, C_IN)  compute dtype
    # b1_ref: (C_HID, 1)     f32
    # w2_ref: (C_OUT, C_HID) compute dtype
    # b2_ref: (C_OUT, 1)     f32
    # o_ref:  (C_OUT, t_hw)  f32
    cdt = w1_ref.dtype
    x = x_ref[...].astype(cdt)
    h = jnp.dot(w1_ref[...], x, preferred_element_type=jnp.float32)
    h = jnp.maximum(h + b1_ref[...], 0.0).astype(cdt)
    out = jnp.dot(w2_ref[...], h, preferred_element_type=jnp.float32) + b2_ref[...]
    o_ref[...] = out.astype(o_ref.dtype)


# ----------------------------- wrappers -------------------------------------

def projection_head_tokens(x2d, w1, b1, w2, b2, *, tm=None,
                           compute_dtype=jnp.bfloat16, vmem_limit_bytes=None):
    """Fused projection head on token-major activations.

    x2d: (M, 768) -> (M, 128) float32.
    w1: (C_IN, C_HID) (transposed from torch (out, in, 1, 1)); b1: (C_HID,)
    w2: (C_HID, C_OUT); b2: (C_OUT,)
    """
    M, C = x2d.shape
    assert C == C_IN

    if tm is None:
        # <=512 rows -> single (padded) block; larger M -> 512-row tiles so the
        # grid has >=2 steps (v7x megacore) and rows fill the 2x256 MXU.
        tm = min(512, _round_up(M, 32))
    else:
        tm = max(32, _round_up(int(tm), 32))
        tm = min(tm, _round_up(M, 32))

    cdt = jnp.dtype(compute_dtype)
    w1c = w1.astype(cdt)
    w2c = w2.astype(cdt)
    b1_2d = b1.reshape(1, C_HID).astype(jnp.float32)
    b2_2d = b2.reshape(1, C_OUT).astype(jnp.float32)

    grid = (pl.cdiv(M, tm),)   # ragged last block handled by Pallas masking

    out2d = pl.pallas_call(
        _proj_head_tokens_kernel,
        out_shape=jax.ShapeDtypeStruct((M, C_OUT), jnp.float32),
        grid_spec=pltpu.PrefetchScalarGridSpec(
            num_scalar_prefetch=0,
            grid=grid,
            in_specs=[
                # Activations stream through, one row tile per grid step.
                pl.BlockSpec((tm, C_IN), lambda i: (i, 0)),
                # Weights / biases: constant block index -> DMA'd once, resident.
                pl.BlockSpec((C_IN, C_HID), lambda i: (0, 0)),
                pl.BlockSpec((1, C_HID), lambda i: (0, 0)),
                pl.BlockSpec((C_HID, C_OUT), lambda i: (0, 0)),
                pl.BlockSpec((1, C_OUT), lambda i: (0, 0)),
            ],
            out_specs=pl.BlockSpec((tm, C_OUT), lambda i: (i, 0)),
        ),
        compiler_params=pltpu.CompilerParams(
            dimension_semantics=("parallel",),
            vmem_limit_bytes=vmem_limit_bytes,
        ),
        cost_estimate=_cost_estimate(M, jnp.dtype(x2d.dtype).itemsize,
                                     cdt.itemsize),
    )(x2d, w1c, b1_2d, w2c, b2_2d)

    return out2d


def projection_head_pallas(x_nchw, w1, b1, w2, b2, *, t_hw=None,
                           compute_dtype=jnp.bfloat16, vmem_limit_bytes=None):
    """NCHW interface matching the torch module: (N, 768, H, W) -> (N, 128, H, W).

    Uses the channel-major kernel so NO transpose passes over the activation
    are needed: (N,C,H,W) -> (N,C,H*W) is a free reshape, pixels land on the
    128-lane axis, and the (C_OUT, t_hw) result writes straight into the NCHW
    output.
    """
    N, C, H, W = x_nchw.shape
    assert C == C_IN
    HW = H * W

    if t_hw is None:
        # Whole spatial extent per block when small (always a legal block dim),
        # otherwise 512-pixel lane tiles (multiple of 128, ragged tail masked).
        t_hw = HW if HW <= 512 else 512
    else:
        t_hw = min(int(t_hw), HW)
        if t_hw < HW:
            t_hw = max(128, (t_hw // 128) * 128)

    cdt = jnp.dtype(compute_dtype)
    # Channel-major weights = torch layout (out, in); canonical storage is (in, out).
    w1_cm = jnp.transpose(w1).astype(cdt)          # (C_HID, C_IN)
    w2_cm = jnp.transpose(w2).astype(cdt)          # (C_OUT, C_HID)
    b1_cm = b1.reshape(C_HID, 1).astype(jnp.float32)
    b2_cm = b2.reshape(C_OUT, 1).astype(jnp.float32)

    x3d = x_nchw.reshape(N, C_IN, HW)              # free reshape (contiguous dims)

    grid = (N, pl.cdiv(HW, t_hw))

    out3d = pl.pallas_call(
        _proj_head_cm_kernel,
        out_shape=jax.ShapeDtypeStruct((N, C_OUT, HW), jnp.float32),
        grid_spec=pltpu.PrefetchScalarGridSpec(
            num_scalar_prefetch=0,
            grid=grid,
            in_specs=[
                pl.BlockSpec((None, C_IN, t_hw), lambda n, j: (n, 0, j)),
                pl.BlockSpec((C_HID, C_IN), lambda n, j: (0, 0)),
                pl.BlockSpec((C_HID, 1), lambda n, j: (0, 0)),
                pl.BlockSpec((C_OUT, C_HID), lambda n, j: (0, 0)),
                pl.BlockSpec((C_OUT, 1), lambda n, j: (0, 0)),
            ],
            out_specs=pl.BlockSpec((None, C_OUT, t_hw), lambda n, j: (n, 0, j)),
        ),
        compiler_params=pltpu.CompilerParams(
            dimension_semantics=("parallel", "parallel"),
            vmem_limit_bytes=vmem_limit_bytes,
        ),
        cost_estimate=_cost_estimate(N * HW, jnp.dtype(x_nchw.dtype).itemsize,
                                     cdt.itemsize),
    )(x3d, w1_cm, b1_cm, w2_cm, b2_cm)

    return out3d.reshape(N, C_OUT, H, W)


# ----------------------------- init / reference -----------------------------

def init_params(key):
    """Mirror torch init_weights(): kaiming_normal_(fan_in, relu) for weights,
    bias ~ U(-1/sqrt(fan_in), 1/sqrt(fan_in)).  Stored as (in, out)."""
    k1, k2, k3, k4 = jax.random.split(key, 4)

    std1 = math.sqrt(2.0 / C_IN)
    bound1 = 1.0 / math.sqrt(C_IN)
    w1 = std1 * jax.random.normal(k1, (C_IN, C_HID), dtype=jnp.float32)
    b1 = jax.random.uniform(k2, (C_HID,), minval=-bound1, maxval=bound1,
                            dtype=jnp.float32)

    std2 = math.sqrt(2.0 / C_HID)
    bound2 = 1.0 / math.sqrt(C_HID)
    w2 = std2 * jax.random.normal(k3, (C_HID, C_OUT), dtype=jnp.float32)
    b2 = jax.random.uniform(k4, (C_OUT,), minval=-bound2, maxval=bound2,
                            dtype=jnp.float32)

    return w1, b1, w2, b2


def _ref_forward_nchw(x_nchw, w1, b1, w2, b2):
    N, _, H, W = x_nchw.shape
    x2d = jnp.transpose(x_nchw, (0, 2, 3, 1)).reshape(-1, C_IN)
    ref2d = jnp.maximum(x2d @ w1 + b1, 0.0) @ w2 + b2
    return jnp.transpose(ref2d.reshape(N, H, W, C_OUT), (0, 3, 1, 2))


if __name__ == "__main__":
    key = jax.random.PRNGKey(0)
    k_x, k_x2, k_p = jax.random.split(key, 3)
    w1, b1, w2, b2 = init_params(k_p)

    # --- NCHW path (channel-major kernel), small spatial: (2, 768, 8, 8) -----
    N, H, W = 2, 8, 8
    x = jax.random.normal(k_x, (N, C_IN, H, W), dtype=jnp.float32)
    ref = _ref_forward_nchw(x, w1, b1, w2, b2)

    # f32 MXU-operand path (closest to the torch module's numerics)
    out_f32 = jax.block_until_ready(
        projection_head_pallas(x, w1, b1, w2, b2, compute_dtype=jnp.float32))
    assert out_f32.shape == (N, C_OUT, H, W)
    assert jnp.allclose(out_f32, ref, atol=5e-2, rtol=1e-2)

    # default bf16 MXU-operand path (f32 accumulation)
    out_bf16 = jax.block_until_ready(projection_head_pallas(x, w1, b1, w2, b2))
    assert out_bf16.shape == (N, C_OUT, H, W)
    assert jnp.allclose(out_bf16, ref, atol=2e-1, rtol=5e-2)

    # --- token-major path, ragged M: 968 rows -> tm=512, 2 grid steps,
    #     last block masked (no jnp.pad). ------------------------------------
    M = 968
    x2d = jax.random.normal(k_x2, (M, C_IN), dtype=jnp.float32)
    ref2d = jnp.maximum(x2d @ w1 + b1, 0.0) @ w2 + b2
    out2d = jax.block_until_ready(projection_head_tokens(x2d, w1, b1, w2, b2))
    assert out2d.shape == (M, C_OUT)
    assert jnp.allclose(out2d, ref2d, atol=2e-1, rtol=5e-2)

    print("KERNEL_OK")
</pallas_src>

<mosaic_0001>
module attributes {stable_mosaic.version = 11 : i64} {
  func.func @_proj_head_cm_kernel(%arg0: i32, %arg1: i32, %arg2: memref<1x768x64xf32, #tpu.memory_space<vmem>>, %arg3: memref<768x768xf32, #tpu.memory_space<vmem>>, %arg4: memref<768x1xf32, #tpu.memory_space<vmem>>, %arg5: memref<128x768xf32, #tpu.memory_space<vmem>>, %arg6: memref<128x1xf32, #tpu.memory_space<vmem>>, %arg7: memref<1x128x64xf32, #tpu.memory_space<vmem>>) attributes {dimension_semantics = [#tpu.dimension_semantics<parallel>, #tpu.dimension_semantics<parallel>], iteration_bounds = array<i64: 2, 1>, scalar_prefetch = 0 : i64, scratch_operands = 0 : i64, tpu.core_type = #tpu.core_type<tc>, window_params = [{transform_indices = @transform_0, window_bounds = array<i64: 1, 768, 64>}, {pipeline_mode = #tpu.pipeline_mode<synchronous>, transform_indices = @transform_1, window_bounds = array<i64: 768, 768>}, {pipeline_mode = #tpu.pipeline_mode<synchronous>, transform_indices = @transform_2, window_bounds = array<i64: 768, 1>}, {pipeline_mode = #tpu.pipeline_mode<synchronous>, transform_indices = @transform_3, window_bounds = array<i64: 128, 768>}, {pipeline_mode = #tpu.pipeline_mode<synchronous>, transform_indices = @transform_4, window_bounds = array<i64: 128, 1>}, {transform_indices = @transform_5, window_bounds = array<i64: 1, 128, 64>}]} {
    %c0 = arith.constant 0 : index
    %c0_0 = arith.constant 0 : index
    %c0_1 = arith.constant 0 : index
    %0 = vector.load %arg2[%c0, %c0_0, %c0_1] : memref<1x768x64xf32, #tpu.memory_space<vmem>>, vector<1x768x64xf32>
    %1 = vector.shape_cast %0 : vector<1x768x64xf32> to vector<768x64xf32>
    %c0_2 = arith.constant 0 : index
    %c0_3 = arith.constant 0 : index
    %2 = vector.load %arg3[%c0_2, %c0_3] : memref<768x768xf32, #tpu.memory_space<vmem>>, vector<768x768xf32>
    %cst = arith.constant dense<0.000000e+00> : vector<768x64xf32>
    %3 = tpu.matmul %2, %1, %cst {dimension_numbers = #tpu.dot_dimension_numbers<[1], [0], [0], [1], [0, 0, 1, 1], [], []>} : vector<768x768xf32>, vector<768x64xf32>, vector<768x64xf32> -> vector<768x64xf32>
    %c0_4 = arith.constant 0 : index
    %c0_5 = arith.constant 0 : index
    %4 = vector.load %arg4[%c0_4, %c0_5] : memref<768x1xf32, #tpu.memory_space<vmem>>, vector<768x1xf32>
    %5 = vector.broadcast %4 : vector<768x1xf32> to vector<768x64xf32>
    %6 = arith.addf %3, %5 : vector<768x64xf32>
    %cst_6 = arith.constant 0.000000e+00 : f32
    %7 = vector.broadcast %cst_6 : f32 to vector<768x64xf32>
    %8 = arith.maximumf %6, %7 : vector<768x64xf32>
    %c0_7 = arith.constant 0 : index
    %c0_8 = arith.constant 0 : index
    %9 = vector.load %arg5[%c0_7, %c0_8] : memref<128x768xf32, #tpu.memory_space<vmem>>, vector<128x768xf32>
    %cst_9 = arith.constant dense<0.000000e+00> : vector<128x64xf32>
    %10 = tpu.matmul %9, %8, %cst_9 {dimension_numbers = #tpu.dot_dimension_numbers<[1], [0], [0], [1], [0, 0, 1, 1], [], []>} : vector<128x768xf32>, vector<768x64xf32>, vector<128x64xf32> -> vector<128x64xf32>
    %c0_10 = arith.constant 0 : index
    %c0_11 = arith.constant 0 : index
    %11 = vector.load %arg6[%c0_10, %c0_11] : memref<128x1xf32, #tpu.memory_space<vmem>>, vector<128x1xf32>
    %12 = vector.broadcast %11 : vector<128x1xf32> to vector<128x64xf32>
    %13 = arith.addf %10, %12 : vector<128x64xf32>
    %c0_12 = arith.constant 0 : index
    %c0_13 = arith.constant 0 : index
    %c0_14 = arith.constant 0 : index
    %14 = vector.load %arg7[%c0_12, %c0_13, %c0_14] : memref<1x128x64xf32, #tpu.memory_space<vmem>>, vector<1x128x64xf32>
    %15 = vector.shape_cast %14 : vector<1x128x64xf32> to vector<128x64xf32>
    %16 = vector.shape_cast %13 : vector<128x64xf32> to vector<1x128x64xf32>
    tpu.vector_store %arg7[%c0_12, %c0_13, %c0_14], %16 {strides = array<i32>} : memref<1x128x64xf32, #tpu.memory_space<vmem>>, vector<1x128x64xf32>,
    return
  }
  func.func @transform_0(%arg0: i32, %arg1: i32) -> (i32, i32, i32) {
    %c0_i32 = arith.constant 0 : i32
    %c0_i32_0 = arith.constant 0 : i32
    return %arg0, %c0_i32, %arg1 : i32, i32, i32
  }
  func.func @transform_1(%arg0: i32, %arg1: i32) -> (i32, i32) {
    %c0_i32 = arith.constant 0 : i32
    %c0_i32_0 = arith.constant 0 : i32
    %c0_i32_1 = arith.constant 0 : i32
    return %c0_i32, %c0_i32_0 : i32, i32
  }
  func.func @transform_2(%arg0: i32, %arg1: i32) -> (i32, i32) {
    %c0_i32 = arith.constant 0 : i32
    %c0_i32_0 = arith.constant 0 : i32
    %c0_i32_1 = arith.constant 0 : i32
    return %c0_i32, %c0_i32_0 : i32, i32
  }
  func.func @transform_3(%arg0: i32, %arg1: i32) -> (i32, i32) {
    %c0_i32 = arith.constant 0 : i32
    %c0_i32_0 = arith.constant 0 : i32
    %c0_i32_1 = arith.constant 0 : i32
    return %c0_i32, %c0_i32_0 : i32, i32
  }
  func.func @transform_4(%arg0: i32, %arg1: i32) -> (i32, i32) {
    %c0_i32 = arith.constant 0 : i32
    %c0_i32_0 = arith.constant 0 : i32
    %c0_i32_1 = arith.constant 0 : i32
    return %c0_i32, %c0_i32_0 : i32, i32
  }
  func.func @transform_5(%arg0: i32, %arg1: i32) -> (i32, i32, i32) {
    %c0_i32 = arith.constant 0 : i32
    %c0_i32_0 = arith.constant 0 : i32
    return %arg0, %c0_i32, %arg1 : i32, i32, i32
  }
}

</mosaic_0001>

<llo_original>
// kernel: tpu_custom_call.1
$region0: #{tpu_custom_call.1}
  #allocation0 [shape = 'u32[]', space=smem, size = 0x4, offset = 0x4, fixed_abs, tag = 'smem constant byte address 0x4 - core index']
  #allocation1 [shape = 'u32[144,128]{1,0:T(1,128)}', space=vmem, size = 0x12000, scoped, tag = 'internal scratch']
  %s0 = inlined_call_operand.vmem [shape: f32[2,768,64], index: 0, kind: input, shape index: {}]
  %s1 = inlined_call_operand.hbm [shape: f32[768,768], index: 1, kind: input, shape index: {}]
  %s2 = inlined_call_operand.vmem [shape: f32[768,1], index: 2, kind: input, shape index: {}]
  %s3 = inlined_call_operand.hbm [shape: f32[128,768], index: 3, kind: input, shape index: {}]
  %s4 = inlined_call_operand.vmem [shape: f32[128,1], index: 4, kind: input, shape index: {}]
  %s5 = inlined_call_operand.vmem [shape: f32[2,128,64], index: 5, kind: output, shape index: {}]
  %s6 = sld [smem:[#allocation0]]
  $region61: #{tpu_custom_call.1} parent=0
    _
  %s8 = ssub.s32 1, %s6
  %s9 = scalar_select 0, %s8, %s6
  $region1: #{tpu_custom_call.1} parent=0
    #allocation2 [shape = 'u8[2359296]{0}', space=vmem, size = 0x240000, scoped, tag = 'input window, operand 1, single buffered']
    #allocation3 [shape = 's32[2]{0}', space=sflag, size = 0x8, scoped, tag = 'scoped memory for tpu_custom_call.1']
    #allocation4 [shape = 'u8[393216]{0}', space=vmem, size = 0x60000, scoped, tag = 'input window, operand 3, single buffered']
    #allocation5 [shape = 's32[1]{0}', space=sflag, size = 0x4, scoped, tag = 'scoped memory for tpu_custom_call.1']
    %10 = vsyncpa [#allocation3], 0
    %11 = vsyncpa [#allocation5], 0
    loop: start=0, step=1, limit=4
    $region2: #{tpu_custom_call.1} parent=1 // loop_pre_header
      _
    $region3: #{tpu_custom_call.1} parent=1 // loop_header
      %s13 = sphi 0, %s17
      %p14 = scmp.ge.s32.totalorder %s13, 4
      %s20 = sphi 0, %s32
      %s21 = sphi 0, %s28
      %s22 = sphi 0, %s20
      %s23 = sphi 0, %s21
      %s24 = sphi 0, %s22
      %s25 = sphi 0, %s23
      %s37 = sphi 0, %s39
      %s40 = sphi 0, %s37
      %s41 = sphi 0, %s40
      %s57 = sphi 0, %s41
      %s61 = sphi 0, %s61
      %s63 = sphi 0, %s61
      %s64 = sphi 0, %s63
      %s78 = sphi 0, %s64
      %s82 = sphi 0, %s82
      %s84 = sphi 0, %s82
      %s85 = sphi 0, %s84
      %s99 = sphi 0, %s85
      %s103 = sphi 0, %s103
      %s105 = sphi 0, %s103
      %s106 = sphi 0, %s105
      %s120 = sphi 0, %s106
      %s124 = sphi 0, %s124
      %s126 = sphi 0, %s124
      %s127 = sphi 0, %s126
      %s141 = sphi 0, %s127
      %s149 = sphi 0, %s151
      %s152 = sphi 0, %s149
      %s153 = sphi 0, %s152
      %s169 = sphi 0, %s153
    $region4: #{tpu_custom_call.1} parent=1 // loop_header_branch
      %16 = sbr.rel (%p14) target = $region8
    $region5: #{tpu_custom_call.1} parent=1 // loop_body
      %s18 = ssub.s32 %s13, 1
      %s19 = ssub.s32 %s13, 2
      %s26 = sadd.s32 1, %s21
      %p27 = scmp.ge.s32.totalorder %s26, 1
      %s28 = scalar_select %p27, 0, %s26
      %s29 = sadd.s32 1, %s20
      %s30 = scalar_select %p27, %s29, %s20
      %p31 = scmp.ge.s32.totalorder %s30, 2
      %s32 = scalar_select %p31, 0, %s30
      %s33 = ssub.s32 %s20, %s32
      %s34 = ssub.s32 %s21, %s28
      %s35 = sor.u32 %s33, %s34
      %p36 = scmp.eq.s32.totalorder %s35, 0
      %s38 = sadd.s32 %s37, 1
      %s39 = scalar_select %p36, %s37, %s38
      %p42 = pneg %p36
      %p43 = scmp.eq.s32.totalorder %s13, 1
      %p44 = por %p42, %p43
      %p45 = scmp.ne.s32.totalorder %s37, %s40
      %p46 = scmp.eq.s32.totalorder %s13, 0
      %p47 = por %p45, %p46
      %p48 = scmp.ne.s32.totalorder %s37, %s40
      %p49 = scmp.eq.s32.totalorder %s18, 1
      %p50 = por %p48, %p49
      %p51 = scmp.ne.s32.totalorder %s40, %s41
      %p52 = scmp.eq.s32.totalorder %s18, 0
      %p53 = por %p51, %p52
      %p54 = scmp.ne.s32.totalorder %s40, %s41
      %p55 = scmp.eq.s32.totalorder %s19, 1
      %p56 = por %p54, %p55
      %p58 = scmp.ne.s32.totalorder %s41, %s57
      %p59 = scmp.eq.s32.totalorder %s19, 0
      %p60 = por %p58, %p59
      %s62 = sadd.s32 %s61, 1
      %p65 = scmp.eq.s32.totalorder %s13, 1
      %p66 = scmp.ne.s32.totalorder %s61, %s63
      %p67 = scmp.eq.s32.totalorder %s13, 0
      %p68 = por %p66, %p67
      %p69 = scmp.ne.s32.totalorder %s61, %s63
      %p70 = scmp.eq.s32.totalorder %s18, 1
      %p71 = por %p69, %p70
      %p72 = scmp.ne.s32.totalorder %s63, %s64
      %p73 = scmp.eq.s32.totalorder %s18, 0
      %p74 = por %p72, %p73
      %p75 = scmp.ne.s32.totalorder %s63, %s64
      %p76 = scmp.eq.s32.totalorder %s19, 1
      %p77 = por %p75, %p76
      %p79 = scmp.ne.s32.totalorder %s64, %s78
      %p80 = scmp.eq.s32.totalorder %s19, 0
      %p81 = por %p79, %p80
      %s83 = sadd.s32 %s82, 1
      %p86 = scmp.eq.s32.totalorder %s13, 1
      %p87 = scmp.ne.s32.totalorder %s82, %s84
      %p88 = scmp.eq.s32.totalorder %s13, 0
      %p89 = por %p87, %p88
      %p90 = scmp.ne.s32.totalorder %s82, %s84
      %p91 = scmp.eq.s32.totalorder %s18, 1
      %p92 = por %p90, %p91
      %p93 = scmp.ne.s32.totalorder %s84, %s85
      %p94 = scmp.eq.s32.totalorder %s18, 0
      %p95 = por %p93, %p94
      %p96 = scmp.ne.s32.totalorder %s84, %s85
      %p97 = scmp.eq.s32.totalorder %s19, 1
      %p98 = por %p96, %p97
      %p100 = scmp.ne.s32.totalorder %s85, %s99
      %p101 = scmp.eq.s32.totalorder %s19, 0
      %p102 = por %p100, %p101
      %s104 = sadd.s32 %s103, 1
      %p107 = scmp.eq.s32.totalorder %s13, 1
      %p108 = scmp.ne.s32.totalorder %s103, %s105
      %p109 = scmp.eq.s32.totalorder %s13, 0
      %p110 = por %p108, %p109
      %p111 = scmp.ne.s32.totalorder %s103, %s105
      %p112 = scmp.eq.s32.totalorder %s18, 1
      %p113 = por %p111, %p112
      %p114 = scmp.ne.s32.totalorder %s105, %s106
      %p115 = scmp.eq.s32.totalorder %s18, 0
      %p116 = por %p114, %p115
      %p117 = scmp.ne.s32.totalorder %s105, %s106
      %p118 = scmp.eq.s32.totalorder %s19, 1
      %p119 = por %p117, %p118
      %p121 = scmp.ne.s32.totalorder %s106, %s120
      %p122 = scmp.eq.s32.totalorder %s19, 0
      %p123 = por %p121, %p122
      %s125 = sadd.s32 %s124, 1
      %p128 = scmp.eq.s32.totalorder %s13, 1
      %p129 = scmp.ne.s32.totalorder %s124, %s126
      %p130 = scmp.eq.s32.totalorder %s13, 0
      %p131 = por %p129, %p130
      %p132 = scmp.ne.s32.totalorder %s124, %s126
      %p133 = scmp.eq.s32.totalorder %s18, 1
      %p134 = por %p132, %p133
      %p135 = scmp.ne.s32.totalorder %s126, %s127
      %p136 = scmp.eq.s32.totalorder %s18, 0
      %p137 = por %p135, %p136
      %p138 = scmp.ne.s32.totalorder %s126, %s127
      %p139 = scmp.eq.s32.totalorder %s19, 1
      %p140 = por %p138, %p139
      %p142 = scmp.ne.s32.totalorder %s127, %s141
      %p143 = scmp.eq.s32.totalorder %s19, 0
      %p144 = por %p142, %p143
      %s145 = ssub.s32 %s20, %s32
      %s146 = ssub.s32 %s21, %s28
      %s147 = sor.u32 %s145, %s146
      %p148 = scmp.eq.s32.totalorder %s147, 0
      %s150 = sadd.s32 %s149, 1
      %s151 = scalar_select %p148, %s149, %s150
      %p154 = pneg %p148
      %p155 = scmp.eq.s32.totalorder %s13, 1
      %p156 = por %p154, %p155
      %p157 = scmp.ne.s32.totalorder %s149, %s152
      %p158 = scmp.eq.s32.totalorder %s13, 0
      %p159 = por %p157, %p158
      %p160 = scmp.ne.s32.totalorder %s149, %s152
      %p161 = scmp.eq.s32.totalorder %s18, 1
      %p162 = por %p160, %p161
      %p163 = scmp.ne.s32.totalorder %s152, %s153
      %p164 = scmp.eq.s32.totalorder %s18, 0
      %p165 = por %p163, %p164
      %p166 = scmp.ne.s32.totalorder %s152, %s153
      %p167 = scmp.eq.s32.totalorder %s19, 1
      %p168 = por %p166, %p167
      %p170 = scmp.ne.s32.totalorder %s153, %s169
      %p171 = scmp.eq.s32.totalorder %s19, 0
      %p172 = por %p170, %p171
      %p173 = scmp.le.s32.totalorder 1, %s13
      %p174 = scmp.lt.s32.totalorder %s13, 3
      %p175 = pnand %p173, %p174
      %p176 = pneg %p175
      // Predicated region
      $region9: #{tpu_custom_call.1} parent=5 // pred_check
        _
      $region10: #{tpu_custom_call.1} parent=5 // pred_check_branch
        %178 = sbr.rel (%p175) target = $region12
      $region11: #{tpu_custom_call.1} parent=5 // pred_region
        %s179 = ssub.s32 %s13, 1
        // Predicated region
        $region13: #{tpu_custom_call.1} parent=11 // pred_check
          %p180 = pneg %p74
        $region14: #{tpu_custom_call.1} parent=11 // pred_check_branch
          %182 = sbr.rel (%p180) target = $region16
        $region15: #{tpu_custom_call.1} parent=11 // pred_region
          %s184 = ssub.s32 73728, 73728
          %185 = vsyncadd [#allocation3], %s184
          %s186 = sshll.u32 [#allocation2], 4
          %s187 = int_to_ptr.vmem [resolvable:$true] %s186
          %192 = dma.hbm_to_vmem [thread:$0]  %s1, 73728, %s187, [#allocation3], 768, 768, 48
        $region16: #{tpu_custom_call.1} parent=11 // pred_fallthru
          _
        // Predicated region
        $region17: #{tpu_custom_call.1} parent=11 // pred_check
          %p193 = pneg %p95
        $region18: #{tpu_custom_call.1} parent=11 // pred_check_branch
          %195 = sbr.rel (%p193) target = $region20
        $region19: #{tpu_custom_call.1} parent=11 // pred_region
          _
        $region20: #{tpu_custom_call.1} parent=11 // pred_fallthru
          _
        // Predicated region
        $region21: #{tpu_custom_call.1} parent=11 // pred_check
          %p196 = pneg %p116
        $region22: #{tpu_custom_call.1} parent=11 // pred_check_branch
          %198 = sbr.rel (%p196) target = $region24
        $region23: #{tpu_custom_call.1} parent=11 // pred_region
          %s200 = ssub.s32 12288, 12288
          %201 = vsyncadd [#allocation5], %s200
          %s202 = sshll.u32 [#allocation4], 4
          %s203 = int_to_ptr.vmem [resolvable:$true] %s202
          %208 = dma.hbm_to_vmem [thread:$0]  %s3, 12288, %s203, [#allocation5], 768, 768, 48
        $region24: #{tpu_custom_call.1} parent=11 // pred_fallthru
          _
        // Predicated region
        $region25: #{tpu_custom_call.1} parent=11 // pred_check
          %p209 = pneg %p137
        $region26: #{tpu_custom_call.1} parent=11 // pred_check_branch
          %211 = sbr.rel (%p209) target = $region28
        $region27: #{tpu_custom_call.1} parent=11 // pred_region
          _
        $region28: #{tpu_custom_call.1} parent=11 // pred_fallthru
          _
      $region12: #{tpu_custom_call.1} parent=5 // pred_fallthru
        _
      %p212 = scmp.lt.s32.totalorder %s13, 2
      // Predicated region
      $region29: #{tpu_custom_call.1} parent=5 // pred_check
        %p213 = pneg %p212
      $region30: #{tpu_custom_call.1} parent=5 // pred_check_branch
        %215 = sbr.rel (%p213) target = $region32
      $region31: #{tpu_custom_call.1} parent=5 // pred_region
        // Predicated region
        $region33: #{tpu_custom_call.1} parent=31 // pred_check
          %p216 = pneg %p47
        $region34: #{tpu_custom_call.1} parent=31 // pred_check_branch
          %218 = sbr.rel (%p216) target = $region36
        $region35: #{tpu_custom_call.1} parent=31 // pred_region
          %p219 = scmp.lt.s32.totalorder %s20, 1
          %s220 = scalar_select %p219, %s20, 1
          %p221 = scmp.lt.s32.totalorder %s21, 0
          %s222 = scalar_select %p221, %s21, 0
          %s223 = smul.addr %s220, 96
          %s224 = sadd.s32 %s222, %s223
          %s225 = smul.addr %s224, 8
          %s226 = scalar_lea.vmem %s0, %s225
        $region36: #{tpu_custom_call.1} parent=31 // pred_fallthru
          _
      $region32: #{tpu_custom_call.1} parent=5 // pred_fallthru
        _
      %p227 = scmp.le.s32.totalorder 1, %s13
      %p228 = scmp.lt.s32.totalorder %s13, 3
      %p229 = pnand %p227, %p228
      %p230 = pneg %p229
      // Predicated region
      $region37: #{tpu_custom_call.1} parent=5 // pred_check
        _
      $region38: #{tpu_custom_call.1} parent=5 // pred_check_branch
        %232 = sbr.rel (%p229) target = $region40
      $region39: #{tpu_custom_call.1} parent=5 // pred_region
        %s233 = ssub.s32 %s13, 1
        // Predicated region
        $region41: #{tpu_custom_call.1} parent=39 // pred_check
          %p234 = pneg %p74
        $region42: #{tpu_custom_call.1} parent=39 // pred_check_branch
          %236 = sbr.rel (%p234) target = $region44
        $region43: #{tpu_custom_call.1} parent=39 // pred_region
          %237 = dma.done [#allocation3], 73728
        $region44: #{tpu_custom_call.1} parent=39 // pred_fallthru
          _
        // Predicated region
        $region45: #{tpu_custom_call.1} parent=39 // pred_check
          %p238 = pneg %p116
        $region46: #{tpu_custom_call.1} parent=39 // pred_check_branch
          %240 = sbr.rel (%p238) target = $region48
        $region47: #{tpu_custom_call.1} parent=39 // pred_region
          %241 = dma.done [#allocation5], 12288
        $region48: #{tpu_custom_call.1} parent=39 // pred_fallthru
          _
        %p242 = scmp.lt.s32.totalorder %s22, 1
        %s243 = scalar_select %p242, %s22, 1
        %p244 = scmp.lt.s32.totalorder %s23, 0
        %s245 = scalar_select %p244, %s23, 0
        %s246 = smul.addr %s243, 96
        %s247 = sadd.s32 %s245, %s246
        %s248 = smul.addr %s247, 8
        %s249 = scalar_lea.vmem %s0, %s248
        %p250 = pneg %p53
        %p251 = pneg %p50
        %p252 = pneg %p74
        %p253 = pneg %p71
        %p254 = pneg %p95
        %p255 = pneg %p92
        %p256 = pneg %p116
        %p257 = pneg %p113
        %p258 = pneg %p137
        %p259 = pneg %p134
        %p260 = pneg %p165
        %p261 = pneg %p162
        %p262 = scmp.lt.s32.totalorder %s22, 1
        %s263 = scalar_select %p262, %s22, 1
        %p264 = scmp.lt.s32.totalorder %s23, 0
        %s265 = scalar_select %p264, %s23, 0
        %s266 = smul.addr %s263, 16
        %s267 = sadd.s32 %s265, %s266
        %s268 = smul.addr %s267, 8
        %s269 = scalar_lea.vmem %s5, %s268
        %p270 = scmp.lt.s32.totalorder %s22, 1
        %s271 = scalar_select %p270, %s22, 1
        %p272 = scmp.lt.s32.totalorder %s23, 0
        %s273 = scalar_select %p272, %s23, 0
        %s274 = smul.addr %s271, 96
        %s275 = sadd.s32 %s273, %s274
        %s276 = smul.addr %s275, 8
        %s277 = scalar_lea.vmem %s0, %s276
        %p278 = scmp.lt.s32.totalorder %s22, 1
        %s279 = scalar_select %p278, %s22, 1
        %p280 = scmp.lt.s32.totalorder %s23, 0
        %s281 = scalar_select %p280, %s23, 0
        %s282 = smul.addr %s279, 16
        %s283 = sadd.s32 %s281, %s282
        %s284 = smul.addr %s283, 8
        %s285 = scalar_lea.vmem %s5, %s284
        %v286 = vld [vmem:[%s277] sm:$0xff]
        %v287 = vld [vmem:[%s277 + $0x8] sm:$0xff]
        %v288 = vld [vmem:[%s277 + $0x10] sm:$0xff]
        %v289 = vld [vmem:[%s277 + $0x18] sm:$0xff]
        %v290 = vld [vmem:[%s277 + $0x20] sm:$0xff]
        %v291 = vld [vmem:[%s277 + $0x28] sm:$0xff]
        %v292 = vld [vmem:[%s277 + $0x30] sm:$0xff]
        %v293 = vld [vmem:[%s277 + $0x38] sm:$0xff]
        %v294 = vld [vmem:[%s277 + $0x40] sm:$0xff]
        %v295 = vld [vmem:[%s277 + $0x48] sm:$0xff]
        %v296 = vld [vmem:[%s277 + $0x50] sm:$0xff]
        %v297 = vld [vmem:[%s277 + $0x58] sm:$0xff]
        %v298 = vld [vmem:[%s277 + $0x60] sm:$0xff]
        %v299 = vld [vmem:[%s277 + $0x68] sm:$0xff]
        %v300 = vld [vmem:[%s277 + $0x70] sm:$0xff]
        %v301 = vld [vmem:[%s277 + $0x78] sm:$0xff]
        %v302 = vld [vmem:[%s277 + $0x80] sm:$0xff]
        %v303 = vld [vmem:[%s277 + $0x88] sm:$0xff]
        %v304 = vld [vmem:[%s277 + $0x90] sm:$0xff]
        %v305 = vld [vmem:[%s277 + $0x98] sm:$0xff]
        %v306 = vld [vmem:[%s277 + $0xa0] sm:$0xff]
        %v307 = vld [vmem:[%s277 + $0xa8] sm:$0xff]
        %v308 = vld [vmem:[%s277 + $0xb0] sm:$0xff]
        %v309 = vld [vmem:[%s277 + $0xb8] sm:$0xff]
        %v310 = vld [vmem:[%s277 + $0xc0] sm:$0xff]
        %v311 = vld [vmem:[%s277 + $0xc8] sm:$0xff]
        %v312 = vld [vmem:[%s277 + $0xd0] sm:$0xff]
        %v313 = vld [vmem:[%s277 + $0xd8] sm:$0xff]
        %v314 = vld [vmem:[%s277 + $0xe0] sm:$0xff]
        %v315 = vld [vmem:[%s277 + $0xe8] sm:$0xff]
        %v316 = vld [vmem:[%s277 + $0xf0] sm:$0xff]
        %v317 = vld [vmem:[%s277 + $0xf8] sm:$0xff]
        %v318 = vld [vmem:[%s277 + $0x100] sm:$0xff]
        %v319 = vld [vmem:[%s277 + $0x108] sm:$0xff]
        %v320 = vld [vmem:[%s277 + $0x110] sm:$0xff]
        %v321 = vld [vmem:[%s277 + $0x118] sm:$0xff]
        %v322 = vld [vmem:[%s277 + $0x120] sm:$0xff]
        %v323 = vld [vmem:[%s277 + $0x128] sm:$0xff]
        %v324 = vld [vmem:[%s277 + $0x130] sm:$0xff]
        %v325 = vld [vmem:[%s277 + $0x138] sm:$0xff]
        %v326 = vld [vmem:[%s277 + $0x140] sm:$0xff]
        %v327 = vld [vmem:[%s277 + $0x148] sm:$0xff]
        %v328 = vld [vmem:[%s277 + $0x150] sm:$0xff]
        %v329 = vld [vmem:[%s277 + $0x158] sm:$0xff]
        %v330 = vld [vmem:[%s277 + $0x160] sm:$0xff]
        %v331 = vld [vmem:[%s277 + $0x168] sm:$0xff]
        %v332 = vld [vmem:[%s277 + $0x170] sm:$0xff]
        %v333 = vld [vmem:[%s277 + $0x178] sm:$0xff]
        %v334 = vld [vmem:[%s277 + $0x180] sm:$0xff]
        %v335 = vld [vmem:[%s277 + $0x188] sm:$0xff]
        %v336 = vld [vmem:[%s277 + $0x190] sm:$0xff]
        %v337 = vld [vmem:[%s277 + $0x198] sm:$0xff]
        %v338 = vld [vmem:[%s277 + $0x1a0] sm:$0xff]
        %v339 = vld [vmem:[%s277 + $0x1a8] sm:$0xff]
        %v340 = vld [vmem:[%s277 + $0x1b0] sm:$0xff]
        %v341 = vld [vmem:[%s277 + $0x1b8] sm:$0xff]
        %v342 = vld [vmem:[%s277 + $0x1c0] sm:$0xff]
        %v343 = vld [vmem:[%s277 + $0x1c8] sm:$0xff]
        %v344 = vld [vmem:[%s277 + $0x1d0] sm:$0xff]
        %v345 = vld [vmem:[%s277 + $0x1d8] sm:$0xff]
        %v346 = vld [vmem:[%s277 + $0x1e0] sm:$0xff]
        %v347 = vld [vmem:[%s277 + $0x1e8] sm:$0xff]
        %v348 = vld [vmem:[%s277 + $0x1f0] sm:$0xff]
        %v349 = vld [vmem:[%s277 + $0x1f8] sm:$0xff]
        %v350 = vld [vmem:[%s277 + $0x200] sm:$0xff]
        %v351 = vld [vmem:[%s277 + $0x208] sm:$0xff]
        %v352 = vld [vmem:[%s277 + $0x210] sm:$0xff]
        %v353 = vld [vmem:[%s277 + $0x218] sm:$0xff]
        %v354 = vld [vmem:[%s277 + $0x220] sm:$0xff]
        %v355 = vld [vmem:[%s277 + $0x228] sm:$0xff]
        %v356 = vld [vmem:[%s277 + $0x230] sm:$0xff]
        %v357 = vld [vmem:[%s277 + $0x238] sm:$0xff]
        %v358 = vld [vmem:[%s277 + $0x240] sm:$0xff]
        %v359 = vld [vmem:[%s277 + $0x248] sm:$0xff]
        %v360 = vld [vmem:[%s277 + $0x250] sm:$0xff]
        %v361 = vld [vmem:[%s277 + $0x258] sm:$0xff]
        %v362 = vld [vmem:[%s277 + $0x260] sm:$0xff]
        %v363 = vld [vmem:[%s277 + $0x268] sm:$0xff]
        %v364 = vld [vmem:[%s277 + $0x270] sm:$0xff]
        %v365 = vld [vmem:[%s277 + $0x278] sm:$0xff]
        %v366 = vld [vmem:[%s277 + $0x280] sm:$0xff]
        %v367 = vld [vmem:[%s277 + $0x288] sm:$0xff]
        %v368 = vld [vmem:[%s277 + $0x290] sm:$0xff]
        %v369 = vld [vmem:[%s277 + $0x298] sm:$0xff]
        %v370 = vld [vmem:[%s277 + $0x2a0] sm:$0xff]
        %v371 = vld [vmem:[%s277 + $0x2a8] sm:$0xff]
        %v372 = vld [vmem:[%s277 + $0x2b0] sm:$0xff]
        %v373 = vld [vmem:[%s277 + $0x2b8] sm:$0xff]
        %v374 = vld [vmem:[%s277 + $0x2c0] sm:$0xff]
        %v375 = vld [vmem:[%s277 + $0x2c8] sm:$0xff]
        %v376 = vld [vmem:[%s277 + $0x2d0] sm:$0xff]
        %v377 = vld [vmem:[%s277 + $0x2d8] sm:$0xff]
        %v378 = vld [vmem:[%s277 + $0x2e0] sm:$0xff]
        %v379 = vld [vmem:[%s277 + $0x2e8] sm:$0xff]
        %v380 = vld [vmem:[%s277 + $0x2f0] sm:$0xff]
        %v381 = vld [vmem:[%s277 + $0x2f8] sm:$0xff]
        %v382 = vld [vmem:[#allocation2] sm:$0xff]
        %v383 = vld [vmem:[#allocation2 + $0x8] sm:$0xff]
        %v384 = vld [vmem:[#allocation2 + $0x10] sm:$0xff]
        %v385 = vld [vmem:[#allocation2 + $0x18] sm:$0xff]
        %v386 = vld [vmem:[#allocation2 + $0x20] sm:$0xff]
        %v387 = vld [vmem:[#allocation2 + $0x28] sm:$0xff]
        %v388 = vld [vmem:[#allocation2 + $0x30] sm:$0xff]
        %v389 = vld [vmem:[#allocation2 + $0x38] sm:$0xff]
        %v390 = vld [vmem:[#allocation2 + $0x40] sm:$0xff]
        %v391 = vld [vmem:[#allocation2 + $0x48] sm:$0xff]
        %v392 = vld [vmem:[#allocation2 + $0x50] sm:$0xff]
        %v393 = vld [vmem:[#allocation2 + $0x58] sm:$0xff]
        %v394 = vld [vmem:[#allocation2 + $0x60] sm:$0xff]
        %v395 = vld [vmem:[#allocation2 + $0x68] sm:$0xff]
        %v396 = vld [vmem:[#allocation2 + $0x70] sm:$0xff]
        %v397 = vld [vmem:[#allocation2 + $0x78] sm:$0xff]
        %v398 = vld [vmem:[#allocation2 + $0x80] sm:$0xff]
        %v399 = vld [vmem:[#allocation2 + $0x88] sm:$0xff]
        %v400 = vld [vmem:[#allocation2 + $0x90] sm:$0xff]
        %v401 = vld [vmem:[#allocation2 + $0x98] sm:$0xff]
        %v402 = vld [vmem:[#allocation2 + $0xa0] sm:$0xff]
        %v403 = vld [vmem:[#allocation2 + $0xa8] sm:$0xff]
        %v404 = vld [vmem:[#allocation2 + $0xb0] sm:$0xff]
        %v405 = vld [vmem:[#allocation2 + $0xb8] sm:$0xff]
        %v406 = vld [vmem:[#allocation2 + $0xc0] sm:$0xff]
        %v407 = vld [vmem:[#allocation2 + $0xc8] sm:$0xff]
        %v408 = vld [vmem:[#allocation2 + $0xd0] sm:$0xff]
        %v409 = vld [vmem:[#allocation2 + $0xd8] sm:$0xff]
        %v410 = vld [vmem:[#allocation2 + $0xe0] sm:$0xff]
        %v411 = vld [vmem:[#allocation2 + $0xe8] sm:$0xff]
        %v412 = vld [vmem:[#allocation2 + $0xf0] sm:$0xff]
        %v413 = vld [vmem:[#allocation2 + $0xf8] sm:$0xff]
        %v414 = vld [vmem:[#allocation2 + $0x100] sm:$0xff]
        %v415 = vld [vmem:[#allocation2 + $0x108] sm:$0xff]
        %v416 = vld [vmem:[#allocation2 + $0x110] sm:$0xff]
        %v417 = vld [vmem:[#allocation2 + $0x118] sm:$0xff]
        %v418 = vld [vmem:[#allocation2 + $0x120] sm:$0xff]
        %v419 = vld [vmem:[#allocation2 + $0x128] sm:$0xff]
        %v420 = vld [vmem:[#allocation2 + $0x130] sm:$0xff]
        %v421 = vld [vmem:[#allocation2 + $0x138] sm:$0xff]
        %v422 = vld [vmem:[#allocation2 + $0x140] sm:$0xff]
        %v423 = vld [vmem:[#allocation2 + $0x148] sm:$0xff]
        %v424 = vld [vmem:[#allocation2 + $0x150] sm:$0xff]
        %v425 = vld [vmem:[#allocation2 + $0x158] sm:$0xff]
        %v426 = vld [vmem:[#allocation2 + $0x160] sm:$0xff]
        %v427 = vld [vmem:[#allocation2 + $0x168] sm:$0xff]
        %v428 = vld [vmem:[#allocation2 + $0x170] sm:$0xff]
        %v429 = vld [vmem:[#allocation2 + $0x178] sm:$0xff]
        %v430 = vld [vmem:[#allocation2 + $0x180] sm:$0xff]
        %v431 = vld [vmem:[#allocation2 + $0x188] sm:$0xff]
        %v432 = vld [vmem:[#allocation2 + $0x190] sm:$0xff]
        %v433 = vld [vmem:[#allocation2 + $0x198] sm:$0xff]
        %v434 = vld [vmem:[#allocation2 + $0x1a0] sm:$0xff]
        %v435 = vld [vmem:[#allocation2 + $0x1a8] sm:$0xff]
        %v436 = vld [vmem:[#allocation2 + $0x1b0] sm:$0xff]
        %v437 = vld [vmem:[#allocation2 + $0x1b8] sm:$0xff]
        %v438 = vld [vmem:[#allocation2 + $0x1c0] sm:$0xff]
        %v439 = vld [vmem:[#allocation2 + $0x1c8] sm:$0xff]
        %v440 = vld [vmem:[#allocation2 + $0x1d0] sm:$0xff]
        %v441 = vld [vmem:[#allocation2 + $0x1d8] sm:$0xff]
        %v442 = vld [vmem:[#allocation2 + $0x1e0] sm:$0xff]
        %v443 = vld [vmem:[#allocation2 + $0x1e8] sm:$0xff]
        %v444 = vld [vmem:[#allocation2 + $0x1f0] sm:$0xff]
        %v445 = vld [vmem:[#allocation2 + $0x1f8] sm:$0xff]
        %v446 = vld [vmem:[#allocation2 + $0x200] sm:$0xff]
        %v447 = vld [vmem:[#allocation2 + $0x208] sm:$0xff]
        %v448 = vld [vmem:[#allocation2 + $0x210] sm:$0xff]
        %v449 = vld [vmem:[#allocation2 + $0x218] sm:$0xff]
        %v450 = vld [vmem:[#allocation2 + $0x220] sm:$0xff]
        %v451 = vld [vmem:[#allocation2 + $0x228] sm:$0xff]
        %v452 = vld [vmem:[#allocation2 + $0x230] sm:$0xff]
        %v453 = vld [vmem:[#allocation2 + $0x238] sm:$0xff]
        %v454 = vld [vmem:[#allocation2 + $0x240] sm:$0xff]
        %v455 = vld [vmem:[#allocation2 + $0x248] sm:$0xff]
        %v456 = vld [vmem:[#allocation2 + $0x250] sm:$0xff]
        %v457 = vld [vmem:[#allocation2 + $0x258] sm:$0xff]
        %v458 = vld [vmem:[#allocation2 + $0x260] sm:$0xff]
        %v459 = vld [vmem:[#allocation2 + $0x268] sm:$0xff]
        %v460 = vld [vmem:[#allocation2 + $0x270] sm:$0xff]
        %v461 = vld [vmem:[#allocation2 + $0x278] sm:$0xff]
        %v462 = vld [vmem:[#allocation2 + $0x280] sm:$0xff]
        %v463 = vld [vmem:[#allocation2 + $0x288] sm:$0xff]
        %v464 = vld [vmem:[#allocation2 + $0x290] sm:$0xff]
        %v465 = vld [vmem:[#allocation2 + $0x298] sm:$0xff]
        %v466 = vld [vmem:[#allocation2 + $0x2a0] sm:$0xff]
        %v467 = vld [vmem:[#allocation2 + $0x2a8] sm:$0xff]
        %v468 = vld [vmem:[#allocation2 + $0x2b0] sm:$0xff]
        %v469 = vld [vmem:[#allocation2 + $0x2b8] sm:$0xff]
        %v470 = vld [vmem:[#allocation2 + $0x2c0] sm:$0xff]
        %v471 = vld [vmem:[#allocation2 + $0x2c8] sm:$0xff]
        %v472 = vld [vmem:[#allocation2 + $0x2d0] sm:$0xff]
        %v473 = vld [vmem:[#allocation2 + $0x2d8] sm:$0xff]
        %v474 = vld [vmem:[#allocation2 + $0x2e0] sm:$0xff]
        %v475 = vld [vmem:[#allocation2 + $0x2e8] sm:$0xff]
        %v476 = vld [vmem:[#allocation2 + $0x2f0] sm:$0xff]
        %v477 = vld [vmem:[#allocation2 + $0x2f8] sm:$0xff]
        %v478 = vld [vmem:[#allocation2 + $0x300] sm:$0xff]
        %v479 = vld [vmem:[#allocation2 + $0x308] sm:$0xff]
        %v480 = vld [vmem:[#allocation2 + $0x310] sm:$0xff]
        %v481 = vld [vmem:[#allocation2 + $0x318] sm:$0xff]
        %v482 = vld [vmem:[#allocation2 + $0x320] sm:$0xff]
        %v483 = vld [vmem:[#allocation2 + $0x328] sm:$0xff]
        %v484 = vld [vmem:[#allocation2 + $0x330] sm:$0xff]
        %v485 = vld [vmem:[#allocation2 + $0x338] sm:$0xff]
        %v486 = vld [vmem:[#allocation2 + $0x340] sm:$0xff]
        %v487 = vld [vmem:[#allocation2 + $0x348] sm:$0xff]
        %v488 = vld [vmem:[#allocation2 + $0x350] sm:$0xff]
        %v489 = vld [vmem:[#allocation2 + $0x358] sm:$0xff]
        %v490 = vld [vmem:[#allocation2 + $0x360] sm:$0xff]
        %v491 = vld [vmem:[#allocation2 + $0x368] sm:$0xff]
        %v492 = vld [vmem:[#allocation2 + $0x370] sm:$0xff]
        %v493 = vld [vmem:[#allocation2 + $0x378] sm:$0xff]
        %v494 = vld [vmem:[#allocation2 + $0x380] sm:$0xff]
        %v495 = vld [vmem:[#allocation2 + $0x388] sm:$0xff]
        %v496 = vld [vmem:[#allocation2 + $0x390] sm:$0xff]
        %v497 = vld [vmem:[#allocation2 + $0x398] sm:$0xff]
        %v498 = vld [vmem:[#allocation2 + $0x3a0] sm:$0xff]
        %v499 = vld [vmem:[#allocation2 + $0x3a8] sm:$0xff]
        %v500 = vld [vmem:[#allocation2 + $0x3b0] sm:$0xff]
        %v501 = vld [vmem:[#allocation2 + $0x3b8] sm:$0xff]
        %v502 = vld [vmem:[#allocation2 + $0x3c0] sm:$0xff]
        %v503 = vld [vmem:[#allocation2 + $0x3c8] sm:$0xff]
        %v504 = vld [vmem:[#allocation2 + $0x3d0] sm:$0xff]
        %v505 = vld [vmem:[#allocation2 + $0x3d8] sm:$0xff]
        %v506 = vld [vmem:[#allocation2 + $0x3e0] sm:$0xff]
        %v507 = vld [vmem:[#allocation2 + $0x3e8] sm:$0xff]
        %v508 = vld [vmem:[#allocation2 + $0x3f0] sm:$0xff]
        %v509 = vld [vmem:[#allocation2 + $0x3f8] sm:$0xff]
        %v510 = vld [vmem:[#allocation2 + $0x400] sm:$0xff]
        %v511 = vld [vmem:[#allocation2 + $0x408] sm:$0xff]
        %v512 = vld [vmem:[#allocation2 + $0x410] sm:$0xff]
        %v513 = vld [vmem:[#allocation2 + $0x418] sm:$0xff]
        %v514 = vld [vmem:[#allocation2 + $0x420] sm:$0xff]
        %v515 = vld [vmem:[#allocation2 + $0x428] sm:$0xff]
        %v516 = vld [vmem:[#allocation2 + $0x430] sm:$0xff]
        %v517 = vld [vmem:[#allocation2 + $0x438] sm:$0xff]
        %v518 = vld [vmem:[#allocation2 + $0x440] sm:$0xff]
        %v519 = vld [vmem:[#allocation2 + $0x448] sm:$0xff]
        %v520 = vld [vmem:[#allocation2 + $0x450] sm:$0xff]
        %v521 = vld [vmem:[#allocation2 + $0x458] sm:$0xff]
        %v522 = vld [vmem:[#allocation2 + $0x460] sm:$0xff]
        %v523 = vld [vmem:[#allocation2 + $0x468] sm:$0xff]
        %v524 = vld [vmem:[#allocation2 + $0x470] sm:$0xff]
        %v525 = vld [vmem:[#allocation2 + $0x478] sm:$0xff]
        %v526 = vld [vmem:[#allocation2 + $0x480] sm:$0xff]
        %v527 = vld [vmem:[#allocation2 + $0x488] sm:$0xff]
        %v528 = vld [vmem:[#allocation2 + $0x490] sm:$0xff]
        %v529 = vld [vmem:[#allocation2 + $0x498] sm:$0xff]
        %v530 = vld [vmem:[#allocation2 + $0x4a0] sm:$0xff]
        %v531 = vld [vmem:[#allocation2 + $0x4a8] sm:$0xff]
        %v532 = vld [vmem:[#allocation2 + $0x4b0] sm:$0xff]
        %v533 = vld [vmem:[#allocation2 + $0x4b8] sm:$0xff]
        %v534 = vld [vmem:[#allocation2 + $0x4c0] sm:$0xff]
        %v535 = vld [vmem:[#allocation2 + $0x4c8] sm:$0xff]
        %v536 = vld [vmem:[#allocation2 + $0x4d0] sm:$0xff]
        %v537 = vld [vmem:[#allocation2 + $0x4d8] sm:$0xff]
        %v538 = vld [vmem:[#allocation2 + $0x4e0] sm:$0xff]
        %v539 = vld [vmem:[#allocation2 + $0x4e8] sm:$0xff]
        %v540 = vld [vmem:[#allocation2 + $0x4f0] sm:$0xff]
        %v541 = vld [vmem:[#allocation2 + $0x4f8] sm:$0xff]
        %v542 = vld [vmem:[#allocation2 + $0x500] sm:$0xff]
        %v543 = vld [vmem:[#allocation2 + $0x508] sm:$0xff]
        %v544 = vld [vmem:[#allocation2 + $0x510] sm:$0xff]
        %v545 = vld [vmem:[#allocation2 + $0x518] sm:$0xff]
        %v546 = vld [vmem:[#allocation2 + $0x520] sm:$0xff]
        %v547 = vld [vmem:[#allocation2 + $0x528] sm:$0xff]
        %v548 = vld [vmem:[#allocation2 + $0x530] sm:$0xff]
        %v549 = vld [vmem:[#allocation2 + $0x538] sm:$0xff]
        %v550 = vld [vmem:[#allocation2 + $0x540] sm:$0xff]
        %v551 = vld [vmem:[#allocation2 + $0x548] sm:$0xff]
        %v552 = vld [vmem:[#allocation2 + $0x550] sm:$0xff]
        %v553 = vld [vmem:[#allocation2 + $0x558] sm:$0xff]
        %v554 = vld [vmem:[#allocation2 + $0x560] sm:$0xff]
        %v555 = vld [vmem:[#allocation2 + $0x568] sm:$0xff]
        %v556 = vld [vmem:[#allocation2 + $0x570] sm:$0xff]
        %v557 = vld [vmem:[#allocation2 + $0x578] sm:$0xff]
        %v558 = vld [vmem:[#allocation2 + $0x580] sm:$0xff]
        %v559 = vld [vmem:[#allocation2 + $0x588] sm:$0xff]
        %v560 = vld [vmem:[#allocation2 + $0x590] sm:$0xff]
        %v561 = vld [vmem:[#allocation2 + $0x598] sm:$0xff]
        %v562 = vld [vmem:[#allocation2 + $0x5a0] sm:$0xff]
        %v563 = vld [vmem:[#allocation2 + $0x5a8] sm:$0xff]
        %v564 = vld [vmem:[#allocation2 + $0x5b0] sm:$0xff]
        %v565 = vld [vmem:[#allocation2 + $0x5b8] sm:$0xff]
        %v566 = vld [vmem:[#allocation2 + $0x5c0] sm:$0xff]
        %v567 = vld [vmem:[#allocation2 + $0x5c8] sm:$0xff]
        %v568 = vld [vmem:[#allocation2 + $0x5d0] sm:$0xff]
        %v569 = vld [vmem:[#allocation2 + $0x5d8] sm:$0xff]
        %v570 = vld [vmem:[#allocation2 + $0x5e0] sm:$0xff]
        %v571 = vld [vmem:[#allocation2 + $0x5e8] sm:$0xff]
        %v572 = vld [vmem:[#allocation2 + $0x5f0] sm:$0xff]
        %v573 = vld [vmem:[#allocation2 + $0x5f8] sm:$0xff]
        %v574 = vld [vmem:[#allocation2 + $0x600] sm:$0xff]
        %v575 = vld [vmem:[#allocation2 + $0x608] sm:$0xff]
        %v576 = vld [vmem:[#allocation2 + $0x610] sm:$0xff]
        %v577 = vld [vmem:[#allocation2 + $0x618] sm:$0xff]
        %v578 = vld [vmem:[#allocation2 + $0x620] sm:$0xff]
        %v579 = vld [vmem:[#allocation2 + $0x628] sm:$0xff]
        %v580 = vld [vmem:[#allocation2 + $0x630] sm:$0xff]
        %v581 = vld [vmem:[#allocation2 + $0x638] sm:$0xff]
        %v582 = vld [vmem:[#allocation2 + $0x640] sm:$0xff]
        %v583 = vld [vmem:[#allocation2 + $0x648] sm:$0xff]
        %v584 = vld [vmem:[#allocation2 + $0x650] sm:$0xff]
        %v585 = vld [vmem:[#allocation2 + $0x658] sm:$0xff]
        %v586 = vld [vmem:[#allocation2 + $0x660] sm:$0xff]
        %v587 = vld [vmem:[#allocation2 + $0x668] sm:$0xff]
        %v588 = vld [vmem:[#allocation2 + $0x670] sm:$0xff]
        %v589 = vld [vmem:[#allocation2 + $0x678] sm:$0xff]
        %v590 = vld [vmem:[#allocation2 + $0x680] sm:$0xff]
        %v591 = vld [vmem:[#allocation2 + $0x688] sm:$0xff]
        %v592 = vld [vmem:[#allocation2 + $0x690] sm:$0xff]
        %v593 = vld [vmem:[#allocation2 + $0x698] sm:$0xff]
        %v594 = vld [vmem:[#allocation2 + $0x6a0] sm:$0xff]
        %v595 = vld [vmem:[#allocation2 + $0x6a8] sm:$0xff]
        %v596 = vld [vmem:[#allocation2 + $0x6b0] sm:$0xff]
        %v597 = vld [vmem:[#allocation2 + $0x6b8] sm:$0xff]
        %v598 = vld [vmem:[#allocation2 + $0x6c0] sm:$0xff]
        %v599 = vld [vmem:[#allocation2 + $0x6c8] sm:$0xff]
        %v600 = vld [vmem:[#allocation2 + $0x6d0] sm:$0xff]
        %v601 = vld [vmem:[#allocation2 + $0x6d8] sm:$0xff]
        %v602 = vld [vmem:[#allocation2 + $0x6e0] sm:$0xff]
        %v603 = vld [vmem:[#allocation2 + $0x6e8] sm:$0xff]
        %v604 = vld [vmem:[#allocation2 + $0x6f0] sm:$0xff]
        %v605 = vld [vmem:[#allocation2 + $0x6f8] sm:$0xff]
        %v606 = vld [vmem:[#allocation2 + $0x700] sm:$0xff]
        %v607 = vld [vmem:[#allocation2 + $0x708] sm:$0xff]
        %v608 = vld [vmem:[#allocation2 + $0x710] sm:$0xff]
        %v609 = vld [vmem:[#allocation2 + $0x718] sm:$0xff]
        %v610 = vld [vmem:[#allocation2 + $0x720] sm:$0xff]
        %v611 = vld [vmem:[#allocation2 + $0x728] sm:$0xff]
        %v612 = vld [vmem:[#allocation2 + $0x730] sm:$0xff]
        %v613 = vld [vmem:[#allocation2 + $0x738] sm:$0xff]
        %v614 = vld [vmem:[#allocation2 + $0x740] sm:$0xff]
        %v615 = vld [vmem:[#allocation2 + $0x748] sm:$0xff]
        %v616 = vld [vmem:[#allocation2 + $0x750] sm:$0xff]
        %v617 = vld [vmem:[#allocation2 + $0x758] sm:$0xff]
        %v618 = vld [vmem:[#allocation2 + $0x760] sm:$0xff]
        %v619 = vld [vmem:[#allocation2 + $0x768] sm:$0xff]
        %v620 = vld [vmem:[#allocation2 + $0x770] sm:$0xff]
        %v621 = vld [vmem:[#allocation2 + $0x778] sm:$0xff]
        %v622 = vld [vmem:[#allocation2 + $0x780] sm:$0xff]
        %v623 = vld [vmem:[#allocation2 + $0x788] sm:$0xff]
        %v624 = vld [vmem:[#allocation2 + $0x790] sm:$0xff]
        %v625 = vld [vmem:[#allocation2 + $0x798] sm:$0xff]
        %v626 = vld [vmem:[#allocation2 + $0x7a0] sm:$0xff]
        %v627 = vld [vmem:[#allocation2 + $0x7a8] sm:$0xff]
        %v628 = vld [vmem:[#allocation2 + $0x7b0] sm:$0xff]
        %v629 = vld [vmem:[#allocation2 + $0x7b8] sm:$0xff]
        %v630 = vld [vmem:[#allocation2 + $0x7c0] sm:$0xff]
        %v631 = vld [vmem:[#allocation2 + $0x7c8] sm:$0xff]
        %v632 = vld [vmem:[#allocation2 + $0x7d0] sm:$0xff]
        %v633 = vld [vmem:[#allocation2 + $0x7d8] sm:$0xff]
        %v634 = vld [vmem:[#allocation2 + $0x7e0] sm:$0xff]
        %v635 = vld [vmem:[#allocation2 + $0x7e8] sm:$0xff]
        %v636 = vld [vmem:[#allocation2 + $0x7f0] sm:$0xff]
        %v637 = vld [vmem:[#allocation2 + $0x7f8] sm:$0xff]
        %v638 = vld [vmem:[#allocation2 + $0x800] sm:$0xff]
        %v639 = vld [vmem:[#allocation2 + $0x808] sm:$0xff]
        %v640 = vld [vmem:[#allocation2 + $0x810] sm:$0xff]
        %v641 = vld [vmem:[#allocation2 + $0x818] sm:$0xff]
        %v642 = vld [vmem:[#allocation2 + $0x820] sm:$0xff]
        %v643 = vld [vmem:[#allocation2 + $0x828] sm:$0xff]
        %v644 = vld [vmem:[#allocation2 + $0x830] sm:$0xff]
        %v645 = vld [vmem:[#allocation2 + $0x838] sm:$0xff]
        %v646 = vld [vmem:[#allocation2 + $0x840] sm:$0xff]
        %v647 = vld [vmem:[#allocation2 + $0x848] sm:$0xff]
        %v648 = vld [vmem:[#allocation2 + $0x850] sm:$0xff]
        %v649 = vld [vmem:[#allocation2 + $0x858] sm:$0xff]
        %v650 = vld [vmem:[#allocation2 + $0x860] sm:$0xff]
        %v651 = vld [vmem:[#allocation2 + $0x868] sm:$0xff]
        %v652 = vld [vmem:[#allocation2 + $0x870] sm:$0xff]
        %v653 = vld [vmem:[#allocation2 + $0x878] sm:$0xff]
        %v654 = vld [vmem:[#allocation2 + $0x880] sm:$0xff]
        %v655 = vld [vmem:[#allocation2 + $0x888] sm:$0xff]
        %v656 = vld [vmem:[#allocation2 + $0x890] sm:$0xff]
        %v657 = vld [vmem:[#allocation2 + $0x898] sm:$0xff]
        %v658 = vld [vmem:[#allocation2 + $0x8a0] sm:$0xff]
        %v659 = vld [vmem:[#allocation2 + $0x8a8] sm:$0xff]
        %v660 = vld [vmem:[#allocation2 + $0x8b0] sm:$0xff]
        %v661 = vld [vmem:[#allocation2 + $0x8b8] sm:$0xff]
        %v662 = vld [vmem:[#allocation2 + $0x8c0] sm:$0xff]
        %v663 = vld [vmem:[#allocation2 + $0x8c8] sm:$0xff]
        %v664 = vld [vmem:[#allocation2 + $0x8d0] sm:$0xff]
        %v665 = vld [vmem:[#allocation2 + $0x8d8] sm:$0xff]
        %v666 = vld [vmem:[#allocation2 + $0x8e0] sm:$0xff]
        %v667 = vld [vmem:[#allocation2 + $0x8e8] sm:$0xff]
        %v668 = vld [vmem:[#allocation2 + $0x8f0] sm:$0xff]
        %v669 = vld [vmem:[#allocation2 + $0x8f8] sm:$0xff]
        %v670 = vld [vmem:[#allocation2 + $0x900] sm:$0xff]
        %v671 = vld [vmem:[#allocation2 + $0x908] sm:$0xff]
        %v672 = vld [vmem:[#allocation2 + $0x910] sm:$0xff]
        %v673 = vld [vmem:[#allocation2 + $0x918] sm:$0xff]
        %v674 = vld [vmem:[#allocation2 + $0x920] sm:$0xff]
        %v675 = vld [vmem:[#allocation2 + $0x928] sm:$0xff]
        %v676 = vld [vmem:[#allocation2 + $0x930] sm:$0xff]
        %v677 = vld [vmem:[#allocation2 + $0x938] sm:$0xff]
        %v678 = vld [vmem:[#allocation2 + $0x940] sm:$0xff]
        %v679 = vld [vmem:[#allocation2 + $0x948] sm:$0xff]
        %v680 = vld [vmem:[#allocation2 + $0x950] sm:$0xff]
        %v681 = vld [vmem:[#allocation2 + $0x958] sm:$0xff]
        %v682 = vld [vmem:[#allocation2 + $0x960] sm:$0xff]
        %v683 = vld [vmem:[#allocation2 + $0x968] sm:$0xff]
        %v684 = vld [vmem:[#allocation2 + $0x970] sm:$0xff]
        %v685 = vld [vmem:[#allocation2 + $0x978] sm:$0xff]
        %v686 = vld [vmem:[#allocation2 + $0x980] sm:$0xff]
        %v687 = vld [vmem:[#allocation2 + $0x988] sm:$0xff]
        %v688 = vld [vmem:[#allocation2 + $0x990] sm:$0xff]
        %v689 = vld [vmem:[#allocation2 + $0x998] sm:$0xff]
        %v690 = vld [vmem:[#allocation2 + $0x9a0] sm:$0xff]
        %v691 = vld [vmem:[#allocation2 + $0x9a8] sm:$0xff]
        %v692 = vld [vmem:[#allocation2 + $0x9b0] sm:$0xff]
        %v693 = vld [vmem:[#allocation2 + $0x9b8] sm:$0xff]
        %v694 = vld [vmem:[#allocation2 + $0x9c0] sm:$0xff]
        %v695 = vld [vmem:[#allocation2 + $0x9c8] sm:$0xff]
        %v696 = vld [vmem:[#allocation2 + $0x9d0] sm:$0xff]
        %v697 = vld [vmem:[#allocation2 + $0x9d8] sm:$0xff]
        %v698 = vld [vmem:[#allocation2 + $0x9e0] sm:$0xff]
        %v699 = vld [vmem:[#allocation2 + $0x9e8] sm:$0xff]
        %v700 = vld [vmem:[#allocation2 + $0x9f0] sm:$0xff]
        %v701 = vld [vmem:[#allocation2 + $0x9f8] sm:$0xff]
        %v702 = vld [vmem:[#allocation2 + $0xa00] sm:$0xff]
        %v703 = vld [vmem:[#allocation2 + $0xa08] sm:$0xff]
        %v704 = vld [vmem:[#allocation2 + $0xa10] sm:$0xff]
        %v705 = vld [vmem:[#allocation2 + $0xa18] sm:$0xff]
        %v706 = vld [vmem:[#allocation2 + $0xa20] sm:$0xff]
        %v707 = vld [vmem:[#allocation2 + $0xa28] sm:$0xff]
        %v708 = vld [vmem:[#allocation2 + $0xa30] sm:$0xff]
        %v709 = vld [vmem:[#allocation2 + $0xa38] sm:$0xff]
        %v710 = vld [vmem:[#allocation2 + $0xa40] sm:$0xff]
        %v711 = vld [vmem:[#allocation2 + $0xa48] sm:$0xff]
        %v712 = vld [vmem:[#allocation2 + $0xa50] sm:$0xff]
        %v713 = vld [vmem:[#allocation2 + $0xa58] sm:$0xff]
        %v714 = vld [vmem:[#allocation2 + $0xa60] sm:$0xff]
        %v715 = vld [vmem:[#allocation2 + $0xa68] sm:$0xff]
        %v716 = vld [vmem:[#allocation2 + $0xa70] sm:$0xff]
        %v717 = vld [vmem:[#allocation2 + $0xa78] sm:$0xff]
        %v718 = vld [vmem:[#allocation2 + $0xa80] sm:$0xff]
        %v719 = vld [vmem:[#allocation2 + $0xa88] sm:$0xff]
        %v720 = vld [vmem:[#allocation2 + $0xa90] sm:$0xff]
        %v721 = vld [vmem:[#allocation2 + $0xa98] sm:$0xff]
        %v722 = vld [vmem:[#allocation2 + $0xaa0] sm:$0xff]
        %v723 = vld [vmem:[#allocation2 + $0xaa8] sm:$0xff]
        %v724 = vld [vmem:[#allocation2 + $0xab0] sm:$0xff]
        %v725 = vld [vmem:[#allocation2 + $0xab8] sm:$0xff]
        %v726 = vld [vmem:[#allocation2 + $0xac0] sm:$0xff]
        %v727 = vld [vmem:[#allocation2 + $0xac8] sm:$0xff]
        %v728 = vld [vmem:[#allocation2 + $0xad0] sm:$0xff]
        %v729 = vld [vmem:[#allocation2 + $0xad8] sm:$0xff]
        %v730 = vld [vmem:[#allocation2 + $0xae0] sm:$0xff]
        %v731 = vld [vmem:[#allocation2 + $0xae8] sm:$0xff]
        %v732 = vld [vmem:[#allocation2 + $0xaf0] sm:$0xff]
        %v733 = vld [vmem:[#allocation2 + $0xaf8] sm:$0xff]
        %v734 = vld [vmem:[#allocation2 + $0xb00] sm:$0xff]
        %v735 = vld [vmem:[#allocation2 + $0xb08] sm:$0xff]
        %v736 = vld [vmem:[#allocation2 + $0xb10] sm:$0xff]
        %v737 = vld [vmem:[#allocation2 + $0xb18] sm:$0xff]
        %v738 = vld [vmem:[#allocation2 + $0xb20] sm:$0xff]
        %v739 = vld [vmem:[#allocation2 + $0xb28] sm:$0xff]
        %v740 = vld [vmem:[#allocation2 + $0xb30] sm:$0xff]
        %v741 = vld [vmem:[#allocation2 + $0xb38] sm:$0xff]
        %v742 = vld [vmem:[#allocation2 + $0xb40] sm:$0xff]
        %v743 = vld [vmem:[#allocation2 + $0xb48] sm:$0xff]
        %v744 = vld [vmem:[#allocation2 + $0xb50] sm:$0xff]
        %v745 = vld [vmem:[#allocation2 + $0xb58] sm:$0xff]
        %v746 = vld [vmem:[#allocation2 + $0xb60] sm:$0xff]
        %v747 = vld [vmem:[#allocation2 + $0xb68] sm:$0xff]
        %v748 = vld [vmem:[#allocation2 + $0xb70] sm:$0xff]
        %v749 = vld [vmem:[#allocation2 + $0xb78] sm:$0xff]
        %v750 = vld [vmem:[#allocation2 + $0xb80] sm:$0xff]
        %v751 = vld [vmem:[#allocation2 + $0xb88] sm:$0xff]
        %v752 = vld [vmem:[#allocation2 + $0xb90] sm:$0xff]
        %v753 = vld [vmem:[#allocation2 + $0xb98] sm:$0xff]
        %v754 = vld [vmem:[#allocation2 + $0xba0] sm:$0xff]
        %v755 = vld [vmem:[#allocation2 + $0xba8] sm:$0xff]
        %v756 = vld [vmem:[#allocation2 + $0xbb0] sm:$0xff]
        %v757 = vld [vmem:[#allocation2 + $0xbb8] sm:$0xff]
        %v758 = vld [vmem:[#allocation2 + $0xbc0] sm:$0xff]
        %v759 = vld [vmem:[#allocation2 + $0xbc8] sm:$0xff]
        %v760 = vld [vmem:[#allocation2 + $0xbd0] sm:$0xff]
        %v761 = vld [vmem:[#allocation2 + $0xbd8] sm:$0xff]
        %v762 = vld [vmem:[#allocation2 + $0xbe0] sm:$0xff]
        %v763 = vld [vmem:[#allocation2 + $0xbe8] sm:$0xff]
        %v764 = vld [vmem:[#allocation2 + $0xbf0] sm:$0xff]
        %v765 = vld [vmem:[#allocation2 + $0xbf8] sm:$0xff]
        %v766 = vld [vmem:[#allocation2 + $0xc00] sm:$0xff]
        %v767 = vld [vmem:[#allocation2 + $0xc08] sm:$0xff]
        %v768 = vld [vmem:[#allocation2 + $0xc10] sm:$0xff]
        %v769 = vld [vmem:[#allocation2 + $0xc18] sm:$0xff]
        %v770 = vld [vmem:[#allocation2 + $0xc20] sm:$0xff]
        %v771 = vld [vmem:[#allocation2 + $0xc28] sm:$0xff]
        %v772 = vld [vmem:[#allocation2 + $0xc30] sm:$0xff]
        %v773 = vld [vmem:[#allocation2 + $0xc38] sm:$0xff]
        %v774 = vld [vmem:[#allocation2 + $0xc40] sm:$0xff]
        %v775 = vld [vmem:[#allocation2 + $0xc48] sm:$0xff]
        %v776 = vld [vmem:[#allocation2 + $0xc50] sm:$0xff]
        %v777 = vld [vmem:[#allocation2 + $0xc58] sm:$0xff]
        %v778 = vld [vmem:[#allocation2 + $0xc60] sm:$0xff]
        %v779 = vld [vmem:[#allocation2 + $0xc68] sm:$0xff]
        %v780 = vld [vmem:[#allocation2 + $0xc70] sm:$0xff]
        %v781 = vld [vmem:[#allocation2 + $0xc78] sm:$0xff]
        %v782 = vld [vmem:[#allocation2 + $0xc80] sm:$0xff]
        %v783 = vld [vmem:[#allocation2 + $0xc88] sm:$0xff]
        %v784 = vld [vmem:[#allocation2 + $0xc90] sm:$0xff]
        %v785 = vld [vmem:[#allocation2 + $0xc98] sm:$0xff]
        %v786 = vld [vmem:[#allocation2 + $0xca0] sm:$0xff]
        %v787 = vld [vmem:[#allocation2 + $0xca8] sm:$0xff]
        %v788 = vld [vmem:[#allocation2 + $0xcb0] sm:$0xff]
        %v789 = vld [vmem:[#allocation2 + $0xcb8] sm:$0xff]
        %v790 = vld [vmem:[#allocation2 + $0xcc0] sm:$0xff]
        %v791 = vld [vmem:[#allocation2 + $0xcc8] sm:$0xff]
        %v792 = vld [vmem:[#allocation2 + $0xcd0] sm:$0xff]
        %v793 = vld [vmem:[#allocation2 + $0xcd8] sm:$0xff]
        %v794 = vld [vmem:[#allocation2 + $0xce0] sm:$0xff]
        %v795 = vld [vmem:[#allocation2 + $0xce8] sm:$0xff]
        %v796 = vld [vmem:[#allocation2 + $0xcf0] sm:$0xff]
        %v797 = vld [vmem:[#allocation2 + $0xcf8] sm:$0xff]
        %v798 = vld [vmem:[#allocation2 + $0xd00] sm:$0xff]
        %v799 = vld [vmem:[#allocation2 + $0xd08] sm:$0xff]
        %v800 = vld [vmem:[#allocation2 + $0xd10] sm:$0xff]
        %v801 = vld [vmem:[#allocation2 + $0xd18] sm:$0xff]
        %v802 = vld [vmem:[#allocation2 + $0xd20] sm:$0xff]
        %v803 = vld [vmem:[#allocation2 + $0xd28] sm:$0xff]
        %v804 = vld [vmem:[#allocation2 + $0xd30] sm:$0xff]
        %v805 = vld [vmem:[#allocation2 + $0xd38] sm:$0xff]
        %v806 = vld [vmem:[#allocation2 + $0xd40] sm:$0xff]
        %v807 = vld [vmem:[#allocation2 + $0xd48] sm:$0xff]
        %v808 = vld [vmem:[#allocation2 + $0xd50] sm:$0xff]
        %v809 = vld [vmem:[#allocation2 + $0xd58] sm:$0xff]
        %v810 = vld [vmem:[#allocation2 + $0xd60] sm:$0xff]
        %v811 = vld [vmem:[#allocation2 + $0xd68] sm:$0xff]
        %v812 = vld [vmem:[#allocation2 + $0xd70] sm:$0xff]
        %v813 = vld [vmem:[#allocation2 + $0xd78] sm:$0xff]
        %v814 = vld [vmem:[#allocation2 + $0xd80] sm:$0xff]
        %v815 = vld [vmem:[#allocation2 + $0xd88] sm:$0xff]
        %v816 = vld [vmem:[#allocation2 + $0xd90] sm:$0xff]
        %v817 = vld [vmem:[#allocation2 + $0xd98] sm:$0xff]
        %v818 = vld [vmem:[#allocation2 + $0xda0] sm:$0xff]
        %v819 = vld [vmem:[#allocation2 + $0xda8] sm:$0xff]
        %v820 = vld [vmem:[#allocation2 + $0xdb0] sm:$0xff]
        %v821 = vld [vmem:[#allocation2 + $0xdb8] sm:$0xff]
        %v822 = vld [vmem:[#allocation2 + $0xdc0] sm:$0xff]
        %v823 = vld [vmem:[#allocation2 + $0xdc8] sm:$0xff]
        %v824 = vld [vmem:[#allocation2 + $0xdd0] sm:$0xff]
        %v825 = vld [vmem:[#allocation2 + $0xdd8] sm:$0xff]
        %v826 = vld [vmem:[#allocation2 + $0xde0] sm:$0xff]
        %v827 = vld [vmem:[#allocation2 + $0xde8] sm:$0xff]
        %v828 = vld [vmem:[#allocation2 + $0xdf0] sm:$0xff]
        %v829 = vld [vmem:[#allocation2 + $0xdf8] sm:$0xff]
        %v830 = vld [vmem:[#allocation2 + $0xe00] sm:$0xff]
        %v831 = vld [vmem:[#allocation2 + $0xe08] sm:$0xff]
        %v832 = vld [vmem:[#allocation2 + $0xe10] sm:$0xff]
        %v833 = vld [vmem:[#allocation2 + $0xe18] sm:$0xff]
        %v834 = vld [vmem:[#allocation2 + $0xe20] sm:$0xff]
        %v835 = vld [vmem:[#allocation2 + $0xe28] sm:$0xff]
        %v836 = vld [vmem:[#allocation2 + $0xe30] sm:$0xff]
        %v837 = vld [vmem:[#allocation2 + $0xe38] sm:$0xff]
        %v838 = vld [vmem:[#allocation2 + $0xe40] sm:$0xff]
        %v839 = vld [vmem:[#allocation2 + $0xe48] sm:$0xff]
        %v840 = vld [vmem:[#allocation2 + $0xe50] sm:$0xff]
        %v841 = vld [vmem:[#allocation2 + $0xe58] sm:$0xff]
        %v842 = vld [vmem:[#allocation2 + $0xe60] sm:$0xff]
        %v843 = vld [vmem:[#allocation2 + $0xe68] sm:$0xff]
        %v844 = vld [vmem:[#allocation2 + $0xe70] sm:$0xff]
        %v845 = vld [vmem:[#allocation2 + $0xe78] sm:$0xff]
        %v846 = vld [vmem:[#allocation2 + $0xe80] sm:$0xff]
        %v847 = vld [vmem:[#allocation2 + $0xe88] sm:$0xff]
        %v848 = vld [vmem:[#allocation2 + $0xe90] sm:$0xff]
        %v849 = vld [vmem:[#allocation2 + $0xe98] sm:$0xff]
        %v850 = vld [vmem:[#allocation2 + $0xea0] sm:$0xff]
        %v851 = vld [vmem:[#allocation2 + $0xea8] sm:$0xff]
        %v852 = vld [vmem:[#allocation2 + $0xeb0] sm:$0xff]
        %v853 = vld [vmem:[#allocation2 + $0xeb8] sm:$0xff]
        %v854 = vld [vmem:[#allocation2 + $0xec0] sm:$0xff]
        %v855 = vld [vmem:[#allocation2 + $0xec8] sm:$0xff]
        %v856 = vld [vmem:[#allocation2 + $0xed0] sm:$0xff]
        %v857 = vld [vmem:[#allocation2 + $0xed8] sm:$0xff]
        %v858 = vld [vmem:[#allocation2 + $0xee0] sm:$0xff]
        %v859 = vld [vmem:[#allocation2 + $0xee8] sm:$0xff]
        %v860 = vld [vmem:[#allocation2 + $0xef0] sm:$0xff]
        %v861 = vld [vmem:[#allocation2 + $0xef8] sm:$0xff]
        %v862 = vld [vmem:[#allocation2 + $0xf00] sm:$0xff]
        %v863 = vld [vmem:[#allocation2 + $0xf08] sm:$0xff]
        %v864 = vld [vmem:[#allocation2 + $0xf10] sm:$0xff]
        %v865 = vld [vmem:[#allocation2 + $0xf18] sm:$0xff]
        %v866 = vld [vmem:[#allocation2 + $0xf20] sm:$0xff]
        %v867 = vld [vmem:[#allocation2 + $0xf28] sm:$0xff]
        %v868 = vld [vmem:[#allocation2 + $0xf30] sm:$0xff]
        %v869 = vld [vmem:[#allocation2 + $0xf38] sm:$0xff]
        %v870 = vld [vmem:[#allocation2 + $0xf40] sm:$0xff]
        %v871 = vld [vmem:[#allocation2 + $0xf48] sm:$0xff]
        %v872 = vld [vmem:[#allocation2 + $0xf50] sm:$0xff]
        %v873 = vld [vmem:[#allocation2 + $0xf58] sm:$0xff]
        %v874 = vld [vmem:[#allocation2 + $0xf60] sm:$0xff]
        %v875 = vld [vmem:[#allocation2 + $0xf68] sm:$0xff]
        %v876 = vld [vmem:[#allocation2 + $0xf70] sm:$0xff]
        %v877 = vld [vmem:[#allocation2 + $0xf78] sm:$0xff]
        %v878 = vld [vmem:[#allocation2 + $0xf80] sm:$0xff]
        %v879 = vld [vmem:[#allocation2 + $0xf88] sm:$0xff]
        %v880 = vld [vmem:[#allocation2 + $0xf90] sm:$0xff]
        %v881 = vld [vmem:[#allocation2 + $0xf98] sm:$0xff]
        %v882 = vld [vmem:[#allocation2 + $0xfa0] sm:$0xff]
        %v883 = vld [vmem:[#allocation2 + $0xfa8] sm:$0xff]
        %v884 = vld [vmem:[#allocation2 + $0xfb0] sm:$0xff]
        %v885 = vld [vmem:[#allocation2 + $0xfb8] sm:$0xff]
        %v886 = vld [vmem:[#allocation2 + $0xfc0] sm:$0xff]
        %v887 = vld [vmem:[#allocation2 + $0xfc8] sm:$0xff]
        %v888 = vld [vmem:[#allocation2 + $0xfd0] sm:$0xff]
        %v889 = vld [vmem:[#allocation2 + $0xfd8] sm:$0xff]
        %v890 = vld [vmem:[#allocation2 + $0xfe0] sm:$0xff]
        %v891 = vld [vmem:[#allocation2 + $0xfe8] sm:$0xff]
        %v892 = vld [vmem:[#allocation2 + $0xff0] sm:$0xff]
        %v893 = vld [vmem:[#allocation2 + $0xff8] sm:$0xff]
        %v894 = vld [vmem:[#allocation2 + $0x1000] sm:$0xff]
        %v895 = vld [vmem:[#allocation2 + $0x1008] sm:$0xff]
        %v896 = vld [vmem:[#allocation2 + $0x1010] sm:$0xff]
        %v897 = vld [vmem:[#allocation2 + $0x1018] sm:$0xff]
        %v898 = vld [vmem:[#allocation2 + $0x1020] sm:$0xff]
        %v899 = vld [vmem:[#allocation2 + $0x1028] sm:$0xff]
        %v900 = vld [vmem:[#allocation2 + $0x1030] sm:$0xff]
        %v901 = vld [vmem:[#allocation2 + $0x1038] sm:$0xff]
        %v902 = vld [vmem:[#allocation2 + $0x1040] sm:$0xff]
        %v903 = vld [vmem:[#allocation2 + $0x1048] sm:$0xff]
        %v904 = vld [vmem:[#allocation2 + $0x1050] sm:$0xff]
        %v905 = vld [vmem:[#allocation2 + $0x1058] sm:$0xff]
        %v906 = vld [vmem:[#allocation2 + $0x1060] sm:$0xff]
        %v907 = vld [vmem:[#allocation2 + $0x1068] sm:$0xff]
        %v908 = vld [vmem:[#allocation2 + $0x1070] sm:$0xff]
        %v909 = vld [vmem:[#allocation2 + $0x1078] sm:$0xff]
        %v910 = vld [vmem:[#allocation2 + $0x1080] sm:$0xff]
        %v911 = vld [vmem:[#allocation2 + $0x1088] sm:$0xff]
        %v912 = vld [vmem:[#allocation2 + $0x1090] sm:$0xff]
        %v913 = vld [vmem:[#allocation2 + $0x1098] sm:$0xff]
        %v914 = vld [vmem:[#allocation2 + $0x10a0] sm:$0xff]
        %v915 = vld [vmem:[#allocation2 + $0x10a8] sm:$0xff]
        %v916 = vld [vmem:[#allocation2 + $0x10b0] sm:$0xff]
        %v917 = vld [vmem:[#allocation2 + $0x10b8] sm:$0xff]
        %v918 = vld [vmem:[#allocation2 + $0x10c0] sm:$0xff]
        %v919 = vld [vmem:[#allocation2 + $0x10c8] sm:$0xff]
        %v920 = vld [vmem:[#allocation2 + $0x10d0] sm:$0xff]
        %v921 = vld [vmem:[#allocation2 + $0x10d8] sm:$0xff]
        %v922 = vld [vmem:[#allocation2 + $0x10e0] sm:$0xff]
        %v923 = vld [vmem:[#allocation2 + $0x10e8] sm:$0xff]
        %v924 = vld [vmem:[#allocation2 + $0x10f0] sm:$0xff]
        %v925 = vld [vmem:[#allocation2 + $0x10f8] sm:$0xff]
        %v926 = vld [vmem:[#allocation2 + $0x1100] sm:$0xff]
        %v927 = vld [vmem:[#allocation2 + $0x1108] sm:$0xff]
        %v928 = vld [vmem:[#allocation2 + $0x1110] sm:$0xff]
        %v929 = vld [vmem:[#allocation2 + $0x1118] sm:$0xff]
        %v930 = vld [vmem:[#allocation2 + $0x1120] sm:$0xff]
        %v931 = vld [vmem:[#allocation2 + $0x1128] sm:$0xff]
        %v932 = vld [vmem:[#allocation2 + $0x1130] sm:$0xff]
        %v933 = vld [vmem:[#allocation2 + $0x1138] sm:$0xff]
        %v934 = vld [vmem:[#allocation2 + $0x1140] sm:$0xff]
        %v935 = vld [vmem:[#allocation2 + $0x1148] sm:$0xff]
        %v936 = vld [vmem:[#allocation2 + $0x1150] sm:$0xff]
        %v937 = vld [vmem:[#allocation2 + $0x1158] sm:$0xff]
        %v938 = vld [vmem:[#allocation2 + $0x1160] sm:$0xff]
        %v939 = vld [vmem:[#allocation2 + $0x1168] sm:$0xff]
        %v940 = vld [vmem:[#allocation2 + $0x1170] sm:$0xff]
        %v941 = vld [vmem:[#allocation2 + $0x1178] sm:$0xff]
        %v942 = vld [vmem:[#allocation2 + $0x1180] sm:$0xff]
        %v943 = vld [vmem:[#allocation2 + $0x1188] sm:$0xff]
        %v944 = vld [vmem:[#allocation2 + $0x1190] sm:$0xff]
        %v945 = vld [vmem:[#allocation2 + $0x1198] sm:$0xff]
        %v946 = vld [vmem:[#allocation2 + $0x11a0] sm:$0xff]
        %v947 = vld [vmem:[#allocation2 + $0x11a8] sm:$0xff]
        %v948 = vld [vmem:[#allocation2 + $0x11b0] sm:$0xff]
        %v949 = vld [vmem:[#allocation2 + $0x11b8] sm:$0xff]
        %v950 = vld [vmem:[#allocation2 + $0x11c0] sm:$0xff]
        %v951 = vld [vmem:[#allocation2 + $0x11c8] sm:$0xff]
        %v952 = vld [vmem:[#allocation2 + $0x11d0] sm:$0xff]
        %v953 = vld [vmem:[#allocation2 + $0x11d8] sm:$0xff]
        %v954 = vld [vmem:[#allocation2 + $0x11e0] sm:$0xff]
        %v955 = vld [vmem:[#allocation2 + $0x11e8] sm:$0xff]
        %v956 = vld [vmem:[#allocation2 + $0x11f0] sm:$0xff]
        %v957 = vld [vmem:[#allocation2 + $0x11f8] sm:$0xff]
        %v958 = vld [vmem:[%s2] sm:$0xff]
        %v959 = vld [vmem:[%s2 + $0x8] sm:$0xff]
        %v960 = vld [vmem:[%s2 + $0x10] sm:$0xff]
        %v961 = vld [vmem:[%s2 + $0x18] sm:$0xff]
        %v962 = vld [vmem:[%s2 + $0x20] sm:$0xff]
        %v963 = vld [vmem:[%s2 + $0x28] sm:$0xff]
        %v964 = vld [vmem:[%s2 + $0x30] sm:$0xff]
        %v965 = vld [vmem:[%s2 + $0x38] sm:$0xff]
        %v966 = vld [vmem:[%s2 + $0x40] sm:$0xff]
        %v967 = vld [vmem:[%s2 + $0x48] sm:$0xff]
        %v968 = vld [vmem:[%s2 + $0x50] sm:$0xff]
        %v969 = vld [vmem:[%s2 + $0x58] sm:$0xff]
        %v970 = vld [vmem:[%s2 + $0x60] sm:$0xff]
        %v971 = vld [vmem:[%s2 + $0x68] sm:$0xff]
        %v972 = vld [vmem:[%s2 + $0x70] sm:$0xff]
        %v973 = vld [vmem:[%s2 + $0x78] sm:$0xff]
        %v974 = vld [vmem:[%s2 + $0x80] sm:$0xff]
        %v975 = vld [vmem:[%s2 + $0x88] sm:$0xff]
        %v976 = vld [vmem:[%s2 + $0x90] sm:$0xff]
        %v977 = vld [vmem:[%s2 + $0x98] sm:$0xff]
        %v978 = vld [vmem:[%s2 + $0xa0] sm:$0xff]
        %v979 = vld [vmem:[%s2 + $0xa8] sm:$0xff]
        %v980 = vld [vmem:[%s2 + $0xb0] sm:$0xff]
        %v981 = vld [vmem:[%s2 + $0xb8] sm:$0xff]
        %v982 = vld [vmem:[%s2 + $0xc0] sm:$0xff]
        %v983 = vld [vmem:[%s2 + $0xc8] sm:$0xff]
        %v984 = vld [vmem:[%s2 + $0xd0] sm:$0xff]
        %v985 = vld [vmem:[%s2 + $0xd8] sm:$0xff]
        %v986 = vld [vmem:[%s2 + $0xe0] sm:$0xff]
        %v987 = vld [vmem:[%s2 + $0xe8] sm:$0xff]
        %v988 = vld [vmem:[%s2 + $0xf0] sm:$0xff]
        %v989 = vld [vmem:[%s2 + $0xf8] sm:$0xff]
        %v990 = vld [vmem:[%s2 + $0x100] sm:$0xff]
        %v991 = vld [vmem:[%s2 + $0x108] sm:$0xff]
        %v992 = vld [vmem:[%s2 + $0x110] sm:$0xff]
        %v993 = vld [vmem:[%s2 + $0x118] sm:$0xff]
        %v994 = vld [vmem:[%s2 + $0x120] sm:$0xff]
        %v995 = vld [vmem:[%s2 + $0x128] sm:$0xff]
        %v996 = vld [vmem:[%s2 + $0x130] sm:$0xff]
        %v997 = vld [vmem:[%s2 + $0x138] sm:$0xff]
        %v998 = vld [vmem:[%s2 + $0x140] sm:$0xff]
        %v999 = vld [vmem:[%s2 + $0x148] sm:$0xff]
        %v1000 = vld [vmem:[%s2 + $0x150] sm:$0xff]
        %v1001 = vld [vmem:[%s2 + $0x158] sm:$0xff]
        %v1002 = vld [vmem:[%s2 + $0x160] sm:$0xff]
        %v1003 = vld [vmem:[%s2 + $0x168] sm:$0xff]
        %v1004 = vld [vmem:[%s2 + $0x170] sm:$0xff]
        %v1005 = vld [vmem:[%s2 + $0x178] sm:$0xff]
        %v1006 = vld [vmem:[%s2 + $0x180] sm:$0xff]
        %v1007 = vld [vmem:[%s2 + $0x188] sm:$0xff]
        %v1008 = vld [vmem:[%s2 + $0x190] sm:$0xff]
        %v1009 = vld [vmem:[%s2 + $0x198] sm:$0xff]
        %v1010 = vld [vmem:[%s2 + $0x1a0] sm:$0xff]
        %v1011 = vld [vmem:[%s2 + $0x1a8] sm:$0xff]
        %v1012 = vld [vmem:[%s2 + $0x1b0] sm:$0xff]
        %v1013 = vld [vmem:[%s2 + $0x1b8] sm:$0xff]
        %v1014 = vld [vmem:[%s2 + $0x1c0] sm:$0xff]
        %v1015 = vld [vmem:[%s2 + $0x1c8] sm:$0xff]
        %v1016 = vld [vmem:[%s2 + $0x1d0] sm:$0xff]
        %v1017 = vld [vmem:[%s2 + $0x1d8] sm:$0xff]
        %v1018 = vld [vmem:[%s2 + $0x1e0] sm:$0xff]
        %v1019 = vld [vmem:[%s2 + $0x1e8] sm:$0xff]
        %v1020 = vld [vmem:[%s2 + $0x1f0] sm:$0xff]
        %v1021 = vld [vmem:[%s2 + $0x1f8] sm:$0xff]
        %v1022 = vld [vmem:[%s2 + $0x200] sm:$0xff]
        %v1023 = vld [vmem:[%s2 + $0x208] sm:$0xff]
        %v1024 = vld [vmem:[%s2 + $0x210] sm:$0xff]
        %v1025 = vld [vmem:[%s2 + $0x218] sm:$0xff]
        %v1026 = vld [vmem:[%s2 + $0x220] sm:$0xff]
        %v1027 = vld [vmem:[%s2 + $0x228] sm:$0xff]
        %v1028 = vld [vmem:[%s2 + $0x230] sm:$0xff]
        %v1029 = vld [vmem:[%s2 + $0x238] sm:$0xff]
        %v1030 = vld [vmem:[%s2 + $0x240] sm:$0xff]
        %v1031 = vld [vmem:[%s2 + $0x248] sm:$0xff]
        %v1032 = vld [vmem:[%s2 + $0x250] sm:$0xff]
        %v1033 = vld [vmem:[%s2 + $0x258] sm:$0xff]
        %v1034 = vld [vmem:[%s2 + $0x260] sm:$0xff]
        %v1035 = vld [vmem:[%s2 + $0x268] sm:$0xff]
        %v1036 = vld [vmem:[%s2 + $0x270] sm:$0xff]
        %v1037 = vld [vmem:[%s2 + $0x278] sm:$0xff]
        %v1038 = vld [vmem:[%s2 + $0x280] sm:$0xff]
        %v1039 = vld [vmem:[%s2 + $0x288] sm:$0xff]
        %v1040 = vld [vmem:[%s2 + $0x290] sm:$0xff]
        %v1041 = vld [vmem:[%s2 + $0x298] sm:$0xff]
        %v1042 = vld [vmem:[%s2 + $0x2a0] sm:$0xff]
        %v1043 = vld [vmem:[%s2 + $0x2a8] sm:$0xff]
        %v1044 = vld [vmem:[%s2 + $0x2b0] sm:$0xff]
        %v1045 = vld [vmem:[%s2 + $0x2b8] sm:$0xff]
        %v1046 = vld [vmem:[%s2 + $0x2c0] sm:$0xff]
        %v1047 = vld [vmem:[%s2 + $0x2c8] sm:$0xff]
        %v1048 = vld [vmem:[%s2 + $0x2d0] sm:$0xff]
        %v1049 = vld [vmem:[%s2 + $0x2d8] sm:$0xff]
        %v1050 = vld [vmem:[%s2 + $0x2e0] sm:$0xff]
        %v1051 = vld [vmem:[%s2 + $0x2e8] sm:$0xff]
        %v1052 = vld [vmem:[%s2 + $0x2f0] sm:$0xff]
        %v1053 = vld [vmem:[%s2 + $0x2f8] sm:$0xff]
        %1055 = vset.pattern.permute.xlu0 0
        %1056 = vperm.xlu0 %1055, %v958
        %v1057 = vpop.permute.xlu0 %1056
        %1060 = vset.pattern.permute.xlu0 0
        %1061 = vperm.xlu0 %1060, %v959
        %v1062 = vpop.permute.xlu0 %1061
        %1065 = vset.pattern.permute.xlu0 0
        %1066 = vperm.xlu0 %1065, %v960
        %v1067 = vpop.permute.xlu0 %1066
        %1070 = vset.pattern.permute.xlu0 0
        %1071 = vperm.xlu0 %1070, %v961
        %v1072 = vpop.permute.xlu0 %1071
        %1075 = vset.pattern.permute.xlu0 0
        %1076 = vperm.xlu0 %1075, %v962
        %v1077 = vpop.permute.xlu0 %1076
        %1080 = vset.pattern.permute.xlu0 0
        %1081 = vperm.xlu0 %1080, %v963
        %v1082 = vpop.permute.xlu0 %1081
        %1085 = vset.pattern.permute.xlu0 0
        %1086 = vperm.xlu0 %1085, %v964
        %v1087 = vpop.permute.xlu0 %1086
        %1090 = vset.pattern.permute.xlu0 0
        %1091 = vperm.xlu0 %1090, %v965
        %v1092 = vpop.permute.xlu0 %1091
        %1095 = vset.pattern.permute.xlu0 0
        %1096 = vperm.xlu0 %1095, %v966
        %v1097 = vpop.permute.xlu0 %1096
        %1100 = vset.pattern.permute.xlu0 0
        %1101 = vperm.xlu0 %1100, %v967
        %v1102 = vpop.permute.xlu0 %1101
        %1105 = vset.pattern.permute.xlu0 0
        %1106 = vperm.xlu0 %1105, %v968
        %v1107 = vpop.permute.xlu0 %1106
        %1110 = vset.pattern.permute.xlu0 0
        %1111 = vperm.xlu0 %1110, %v969
        %v1112 = vpop.permute.xlu0 %1111
        %1115 = vset.pattern.permute.xlu0 0
        %1116 = vperm.xlu0 %1115, %v970
        %v1117 = vpop.permute.xlu0 %1116
        %1120 = vset.pattern.permute.xlu0 0
        %1121 = vperm.xlu0 %1120, %v971
        %v1122 = vpop.permute.xlu0 %1121
        %1125 = vset.pattern.permute.xlu0 0
        %1126 = vperm.xlu0 %1125, %v972
        %v1127 = vpop.permute.xlu0 %1126
        %1130 = vset.pattern.permute.xlu0 0
        %1131 = vperm.xlu0 %1130, %v973
        %v1132 = vpop.permute.xlu0 %1131
        %1135 = vset.pattern.permute.xlu0 0
        %1136 = vperm.xlu0 %1135, %v974
        %v1137 = vpop.permute.xlu0 %1136
        %1140 = vset.pattern.permute.xlu0 0
        %1141 = vperm.xlu0 %1140, %v975
        %v1142 = vpop.permute.xlu0 %1141
        %1145 = vset.pattern.permute.xlu0 0
        %1146 = vperm.xlu0 %1145, %v976
        %v1147 = vpop.permute.xlu0 %1146
        %1150 = vset.pattern.permute.xlu0 0
        %1151 = vperm.xlu0 %1150, %v977
        %v1152 = vpop.permute.xlu0 %1151
        %1155 = vset.pattern.permute.xlu0 0
        %1156 = vperm.xlu0 %1155, %v978
        %v1157 = vpop.permute.xlu0 %1156
        %1160 = vset.pattern.permute.xlu0 0
        %1161 = vperm.xlu0 %1160, %v979
        %v1162 = vpop.permute.xlu0 %1161
        %1165 = vset.pattern.permute.xlu0 0
        %1166 = vperm.xlu0 %1165, %v980
        %v1167 = vpop.permute.xlu0 %1166
        %1170 = vset.pattern.permute.xlu0 0
        %1171 = vperm.xlu0 %1170, %v981
        %v1172 = vpop.permute.xlu0 %1171
        %1175 = vset.pattern.permute.xlu0 0
        %1176 = vperm.xlu0 %1175, %v982
        %v1177 = vpop.permute.xlu0 %1176
        %1180 = vset.pattern.permute.xlu0 0
        %1181 = vperm.xlu0 %1180, %v983
        %v1182 = vpop.permute.xlu0 %1181
        %1185 = vset.pattern.permute.xlu0 0
        %1186 = vperm.xlu0 %1185, %v984
        %v1187 = vpop.permute.xlu0 %1186
        %1190 = vset.pattern.permute.xlu0 0
        %1191 = vperm.xlu0 %1190, %v985
        %v1192 = vpop.permute.xlu0 %1191
        %1195 = vset.pattern.permute.xlu0 0
        %1196 = vperm.xlu0 %1195, %v986
        %v1197 = vpop.permute.xlu0 %1196
        %1200 = vset.pattern.permute.xlu0 0
        %1201 = vperm.xlu0 %1200, %v987
        %v1202 = vpop.permute.xlu0 %1201
        %1205 = vset.pattern.permute.xlu0 0
        %1206 = vperm.xlu0 %1205, %v988
        %v1207 = vpop.permute.xlu0 %1206
        %1210 = vset.pattern.permute.xlu0 0
        %1211 = vperm.xlu0 %1210, %v989
        %v1212 = vpop.permute.xlu0 %1211
        %1215 = vset.pattern.permute.xlu0 0
        %1216 = vperm.xlu0 %1215, %v990
        %v1217 = vpop.permute.xlu0 %1216
        %1220 = vset.pattern.permute.xlu0 0
        %1221 = vperm.xlu0 %1220, %v991
        %v1222 = vpop.permute.xlu0 %1221
        %1225 = vset.pattern.permute.xlu0 0
        %1226 = vperm.xlu0 %1225, %v992
        %v1227 = vpop.permute.xlu0 %1226
        %1230 = vset.pattern.permute.xlu0 0
        %1231 = vperm.xlu0 %1230, %v993
        %v1232 = vpop.permute.xlu0 %1231
        %1235 = vset.pattern.permute.xlu0 0
        %1236 = vperm.xlu0 %1235, %v994
        %v1237 = vpop.permute.xlu0 %1236
        %1240 = vset.pattern.permute.xlu0 0
        %1241 = vperm.xlu0 %1240, %v995
        %v1242 = vpop.permute.xlu0 %1241
        %1245 = vset.pattern.permute.xlu0 0
        %1246 = vperm.xlu0 %1245, %v996
        %v1247 = vpop.permute.xlu0 %1246
        %1250 = vset.pattern.permute.xlu0 0
        %1251 = vperm.xlu0 %1250, %v997
        %v1252 = vpop.permute.xlu0 %1251
        %1255 = vset.pattern.permute.xlu0 0
        %1256 = vperm.xlu0 %1255, %v998
        %v1257 = vpop.permute.xlu0 %1256
        %1260 = vset.pattern.permute.xlu0 0
        %1261 = vperm.xlu0 %1260, %v999
        %v1262 = vpop.permute.xlu0 %1261
        %1265 = vset.pattern.permute.xlu0 0
        %1266 = vperm.xlu0 %1265, %v1000
        %v1267 = vpop.permute.xlu0 %1266
        %1270 = vset.pattern.permute.xlu0 0
        %1271 = vperm.xlu0 %1270, %v1001
        %v1272 = vpop.permute.xlu0 %1271
        %1275 = vset.pattern.permute.xlu0 0
        %1276 = vperm.xlu0 %1275, %v1002
        %v1277 = vpop.permute.xlu0 %1276
        %1280 = vset.pattern.permute.xlu0 0
        %1281 = vperm.xlu0 %1280, %v1003
        %v1282 = vpop.permute.xlu0 %1281
        %1285 = vset.pattern.permute.xlu0 0
        %1286 = vperm.xlu0 %1285, %v1004
        %v1287 = vpop.permute.xlu0 %1286
        %1290 = vset.pattern.permute.xlu0 0
        %1291 = vperm.xlu0 %1290, %v1005
        %v1292 = vpop.permute.xlu0 %1291
        %1295 = vset.pattern.permute.xlu0 0
        %1296 = vperm.xlu0 %1295, %v1006
        %v1297 = vpop.permute.xlu0 %1296
        %1300 = vset.pattern.permute.xlu0 0
        %1301 = vperm.xlu0 %1300, %v1007
        %v1302 = vpop.permute.xlu0 %1301
        %1305 = vset.pattern.permute.xlu0 0
        %1306 = vperm.xlu0 %1305, %v1008
        %v1307 = vpop.permute.xlu0 %1306
        %1310 = vset.pattern.permute.xlu0 0
        %1311 = vperm.xlu0 %1310, %v1009
        %v1312 = vpop.permute.xlu0 %1311
        %1315 = vset.pattern.permute.xlu0 0
        %1316 = vperm.xlu0 %1315, %v1010
        %v1317 = vpop.permute.xlu0 %1316
        %1320 = vset.pattern.permute.xlu0 0
        %1321 = vperm.xlu0 %1320, %v1011
        %v1322 = vpop.permute.xlu0 %1321
        %1325 = vset.pattern.permute.xlu0 0
        %1326 = vperm.xlu0 %1325, %v1012
        %v1327 = vpop.permute.xlu0 %1326
        %1330 = vset.pattern.permute.xlu0 0
        %1331 = vperm.xlu0 %1330, %v1013
        %v1332 = vpop.permute.xlu0 %1331
        %1335 = vset.pattern.permute.xlu0 0
        %1336 = vperm.xlu0 %1335, %v1014
        %v1337 = vpop.permute.xlu0 %1336
        %1340 = vset.pattern.permute.xlu0 0
        %1341 = vperm.xlu0 %1340, %v1015
        %v1342 = vpop.permute.xlu0 %1341
        %1345 = vset.pattern.permute.xlu0 0
        %1346 = vperm.xlu0 %1345, %v1016
        %v1347 = vpop.permute.xlu0 %1346
        %1350 = vset.pattern.permute.xlu0 0
        %1351 = vperm.xlu0 %1350, %v1017
        %v1352 = vpop.permute.xlu0 %1351
        %1355 = vset.pattern.permute.xlu0 0
        %1356 = vperm.xlu0 %1355, %v1018
        %v1357 = vpop.permute.xlu0 %1356
        %1360 = vset.pattern.permute.xlu0 0
        %1361 = vperm.xlu0 %1360, %v1019
        %v1362 = vpop.permute.xlu0 %1361
        %1365 = vset.pattern.permute.xlu0 0
        %1366 = vperm.xlu0 %1365, %v1020
        %v1367 = vpop.permute.xlu0 %1366
        %1370 = vset.pattern.permute.xlu0 0
        %1371 = vperm.xlu0 %1370, %v1021
        %v1372 = vpop.permute.xlu0 %1371
        %1375 = vset.pattern.permute.xlu0 0
        %1376 = vperm.xlu0 %1375, %v1022
        %v1377 = vpop.permute.xlu0 %1376
        %1380 = vset.pattern.permute.xlu0 0
        %1381 = vperm.xlu0 %1380, %v1023
        %v1382 = vpop.permute.xlu0 %1381
        %1385 = vset.pattern.permute.xlu0 0
        %1386 = vperm.xlu0 %1385, %v1024
        %v1387 = vpop.permute.xlu0 %1386
        %1390 = vset.pattern.permute.xlu0 0
        %1391 = vperm.xlu0 %1390, %v1025
        %v1392 = vpop.permute.xlu0 %1391
        %1395 = vset.pattern.permute.xlu0 0
        %1396 = vperm.xlu0 %1395, %v1026
        %v1397 = vpop.permute.xlu0 %1396
        %1400 = vset.pattern.permute.xlu0 0
        %1401 = vperm.xlu0 %1400, %v1027
        %v1402 = vpop.permute.xlu0 %1401
        %1405 = vset.pattern.permute.xlu0 0
        %1406 = vperm.xlu0 %1405, %v1028
        %v1407 = vpop.permute.xlu0 %1406
        %1410 = vset.pattern.permute.xlu0 0
        %1411 = vperm.xlu0 %1410, %v1029
        %v1412 = vpop.permute.xlu0 %1411
        %1415 = vset.pattern.permute.xlu0 0
        %1416 = vperm.xlu0 %1415, %v1030
        %v1417 = vpop.permute.xlu0 %1416
        %1420 = vset.pattern.permute.xlu0 0
        %1421 = vperm.xlu0 %1420, %v1031
        %v1422 = vpop.permute.xlu0 %1421
        %1425 = vset.pattern.permute.xlu0 0
        %1426 = vperm.xlu0 %1425, %v1032
        %v1427 = vpop.permute.xlu0 %1426
        %1430 = vset.pattern.permute.xlu0 0
        %1431 = vperm.xlu0 %1430, %v1033
        %v1432 = vpop.permute.xlu0 %1431
        %1435 = vset.pattern.permute.xlu0 0
        %1436 = vperm.xlu0 %1435, %v1034
        %v1437 = vpop.permute.xlu0 %1436
        %1440 = vset.pattern.permute.xlu0 0
        %1441 = vperm.xlu0 %1440, %v1035
        %v1442 = vpop.permute.xlu0 %1441
        %1445 = vset.pattern.permute.xlu0 0
        %1446 = vperm.xlu0 %1445, %v1036
        %v1447 = vpop.permute.xlu0 %1446
        %1450 = vset.pattern.permute.xlu0 0
        %1451 = vperm.xlu0 %1450, %v1037
        %v1452 = vpop.permute.xlu0 %1451
        %1455 = vset.pattern.permute.xlu0 0
        %1456 = vperm.xlu0 %1455, %v1038
        %v1457 = vpop.permute.xlu0 %1456
        %1460 = vset.pattern.permute.xlu0 0
        %1461 = vperm.xlu0 %1460, %v1039
        %v1462 = vpop.permute.xlu0 %1461
        %1465 = vset.pattern.permute.xlu0 0
        %1466 = vperm.xlu0 %1465, %v1040
        %v1467 = vpop.permute.xlu0 %1466
        %1470 = vset.pattern.permute.xlu0 0
        %1471 = vperm.xlu0 %1470, %v1041
        %v1472 = vpop.permute.xlu0 %1471
        %1475 = vset.pattern.permute.xlu0 0
        %1476 = vperm.xlu0 %1475, %v1042
        %v1477 = vpop.permute.xlu0 %1476
        %1480 = vset.pattern.permute.xlu0 0
        %1481 = vperm.xlu0 %1480, %v1043
        %v1482 = vpop.permute.xlu0 %1481
        %1485 = vset.pattern.permute.xlu0 0
        %1486 = vperm.xlu0 %1485, %v1044
        %v1487 = vpop.permute.xlu0 %1486
        %1490 = vset.pattern.permute.xlu0 0
        %1491 = vperm.xlu0 %1490, %v1045
        %v1492 = vpop.permute.xlu0 %1491
        %1495 = vset.pattern.permute.xlu0 0
        %1496 = vperm.xlu0 %1495, %v1046
        %v1497 = vpop.permute.xlu0 %1496
        %1500 = vset.pattern.permute.xlu0 0
        %1501 = vperm.xlu0 %1500, %v1047
        %v1502 = vpop.permute.xlu0 %1501
        %1505 = vset.pattern.permute.xlu0 0
        %1506 = vperm.xlu0 %1505, %v1048
        %v1507 = vpop.permute.xlu0 %1506
        %1510 = vset.pattern.permute.xlu0 0
        %1511 = vperm.xlu0 %1510, %v1049
        %v1512 = vpop.permute.xlu0 %1511
        %1515 = vset.pattern.permute.xlu0 0
        %1516 = vperm.xlu0 %1515, %v1050
        %v1517 = vpop.permute.xlu0 %1516
        %1520 = vset.pattern.permute.xlu0 0
        %1521 = vperm.xlu0 %1520, %v1051
        %v1522 = vpop.permute.xlu0 %1521
        %1525 = vset.pattern.permute.xlu0 0
        %1526 = vperm.xlu0 %1525, %v1052
        %v1527 = vpop.permute.xlu0 %1526
        %1530 = vset.pattern.permute.xlu0 0
        %1531 = vperm.xlu0 %1530, %v1053
        %v1532 = vpop.permute.xlu0 %1531
        %1534 = vmatprep.subr.mxu0 0.0
        %1535 = vmatpush1.msra.mxu0 %v301
        %1536 = vmatprep.subr.mxu0 0.0
        %1537 = vmatpush1.msra.mxu0 %v300
        %1538 = vmatprep.subr.mxu0 0.0
        %1539 = vmatpush1.msra.mxu0 %v299
        %1540 = vmatprep.subr.mxu0 0.0
        %1541 = vmatpush1.msra.mxu0 %v298
        %1542 = vmatprep.subr.mxu0 0.0
        %1543 = vmatpush1.msra.mxu0 %v297
        %1544 = vmatprep.subr.mxu0 0.0
        %1545 = vmatpush1.msra.mxu0 %v296
        %1546 = vmatprep.subr.mxu0 0.0
        %1547 = vmatpush1.msra.mxu0 %v295
        %1548 = vmatprep.subr.mxu0 0.0
        %1549 = vmatpush1.msra.mxu0 %v294
        %1550 = vmatprep.subr.mxu0 0.0
        %1551 = vmatpush1.msra.mxu0 %v293
        %1552 = vmatprep.subr.mxu0 0.0
        %1553 = vmatpush1.msra.mxu0 %v292
        %1554 = vmatprep.subr.mxu0 0.0
        %1555 = vmatpush1.msra.mxu0 %v291
        %1556 = vmatprep.subr.mxu0 0.0
        %1557 = vmatpush1.msra.mxu0 %v290
        %1558 = vmatprep.subr.mxu0 0.0
        %1559 = vmatpush1.msra.mxu0 %v289
        %1560 = vmatprep.subr.mxu0 0.0
        %1561 = vmatpush1.msra.mxu0 %v288
        %1562 = vmatprep.subr.mxu0 0.0
        %1563 = vmatpush1.msra.mxu0 %v287
        %1564 = vmatprep.subr.mxu0 0.0
        %1565 = vmatpush1.msra.mxu0 %v286
        %1566 = vmatprep.subr.mxu0 0.0
        %1567 = vmatpush2.msra.mxu0 %v317
        %1568 = vmatprep.subr.mxu0 0.0
        %1569 = vmatpush2.msra.mxu0 %v316
        %1570 = vmatprep.subr.mxu0 0.0
        %1571 = vmatpush2.msra.mxu0 %v315
        %1572 = vmatprep.subr.mxu0 0.0
        %1573 = vmatpush2.msra.mxu0 %v314
        %1574 = vmatprep.subr.mxu0 0.0
        %1575 = vmatpush2.msra.mxu0 %v313
        %1576 = vmatprep.subr.mxu0 0.0
        %1577 = vmatpush2.msra.mxu0 %v312
        %1578 = vmatprep.subr.mxu0 0.0
        %1579 = vmatpush2.msra.mxu0 %v311
        %1580 = vmatprep.subr.mxu0 0.0
        %1581 = vmatpush2.msra.mxu0 %v310
        %1582 = vmatprep.subr.mxu0 0.0
        %1583 = vmatpush2.msra.mxu0 %v309
        %1584 = vmatprep.subr.mxu0 0.0
        %1585 = vmatpush2.msra.mxu0 %v308
        %1586 = vmatprep.subr.mxu0 0.0
        %1587 = vmatpush2.msra.mxu0 %v307
        %1588 = vmatprep.subr.mxu0 0.0
        %1589 = vmatpush2.msra.mxu0 %v306
        %1590 = vmatprep.subr.mxu0 0.0
        %1591 = vmatpush2.msra.mxu0 %v305
        %1592 = vmatprep.subr.mxu0 0.0
        %1593 = vmatpush2.msra.mxu0 %v304
        %1594 = vmatprep.subr.mxu0 0.0
        %1595 = vmatpush2.msra.mxu0 %v303
        %1596 = vmatprep.subr.mxu0 0.0
        %1597 = vmatpush2.msra.mxu0 %v302
        %1598 = vmatprep.mubr.f32.mxu0 %v383
        %1599 = vmatmul.mubr.f32.gmra.mxu0 %v382
        %v1600 = vpop.f32.mrf.mxu0
        %v1601 = vadd.f32 %v1057, %v1600
        %v1602 = vpop.f32.mrf.mxu0
        %1603 = vmatprep.mubr.f32.mxu0 %v389
        %1604 = vmatmul.mubr.f32.gmra.mxu0 %v388
        %v1605 = vpop.f32.mrf.mxu0
        %v1606 = vadd.f32 %v1062, %v1605
        %v1607 = vpop.f32.mrf.mxu0
        %1608 = vmatprep.mubr.f32.mxu0 %v395
        %1609 = vmatmul.mubr.f32.gmra.mxu0 %v394
        %v1610 = vpop.f32.mrf.mxu0
        %v1611 = vadd.f32 %v1067, %v1610
        %v1612 = vpop.f32.mrf.mxu0
        %1613 = vmatprep.mubr.f32.mxu0 %v401
        %1614 = vmatmul.mubr.f32.gmra.mxu0 %v400
        %v1615 = vpop.f32.mrf.mxu0
        %v1616 = vadd.f32 %v1072, %v1615
        %v1617 = vpop.f32.mrf.mxu0
        %1618 = vmatprep.mubr.f32.mxu0 %v407
        %1619 = vmatmul.mubr.f32.gmra.mxu0 %v406
        %v1620 = vpop.f32.mrf.mxu0
        %v1621 = vadd.f32 %v1077, %v1620
        %v1622 = vpop.f32.mrf.mxu0
        %1623 = vmatprep.mubr.f32.mxu0 %v413
        %1624 = vmatmul.mubr.f32.gmra.mxu0 %v412
        %v1625 = vpop.f32.mrf.mxu0
        %v1626 = vadd.f32 %v1082, %v1625
        %v1627 = vpop.f32.mrf.mxu0
        %1628 = vmatprep.mubr.f32.mxu0 %v419
        %1629 = vmatmul.mubr.f32.gmra.mxu0 %v418
        %v1630 = vpop.f32.mrf.mxu0
        %v1631 = vadd.f32 %v1087, %v1630
        %v1632 = vpop.f32.mrf.mxu0
        %1633 = vmatprep.mubr.f32.mxu0 %v425
        %1634 = vmatmul.mubr.f32.gmra.mxu0 %v424
        %v1635 = vpop.f32.mrf.mxu0
        %v1636 = vadd.f32 %v1092, %v1635
        %v1637 = vpop.f32.mrf.mxu0
        %1638 = vmatprep.mubr.f32.mxu0 %v431
        %1639 = vmatmul.mubr.f32.gmra.mxu0 %v430
        %v1640 = vpop.f32.mrf.mxu0
        %v1641 = vadd.f32 %v1097, %v1640
        %v1642 = vpop.f32.mrf.mxu0
        %1643 = vmatprep.mubr.f32.mxu0 %v437
        %1644 = vmatmul.mubr.f32.gmra.mxu0 %v436
        %v1645 = vpop.f32.mrf.mxu0
        %v1646 = vadd.f32 %v1102, %v1645
        %v1647 = vpop.f32.mrf.mxu0
        %1648 = vmatprep.mubr.f32.mxu0 %v443
        %1649 = vmatmul.mubr.f32.gmra.mxu0 %v442
        %v1650 = vpop.f32.mrf.mxu0
        %v1651 = vadd.f32 %v1107, %v1650
        %v1652 = vpop.f32.mrf.mxu0
        %1653 = vmatprep.mubr.f32.mxu0 %v449
        %1654 = vmatmul.mubr.f32.gmra.mxu0 %v448
        %v1655 = vpop.f32.mrf.mxu0
        %v1656 = vadd.f32 %v1112, %v1655
        %v1657 = vpop.f32.mrf.mxu0
        %1658 = vmatprep.mubr.f32.mxu0 %v455
        %1659 = vmatmul.mubr.f32.gmra.mxu0 %v454
        %v1660 = vpop.f32.mrf.mxu0
        %v1661 = vadd.f32 %v1117, %v1660
        %v1662 = vpop.f32.mrf.mxu0
        %1663 = vmatprep.mubr.f32.mxu0 %v461
        %1664 = vmatmul.mubr.f32.gmra.mxu0 %v460
        %v1665 = vpop.f32.mrf.mxu0
        %v1666 = vadd.f32 %v1122, %v1665
        %v1667 = vpop.f32.mrf.mxu0
        %1668 = vmatprep.mubr.f32.mxu0 %v467
        %1669 = vmatmul.mubr.f32.gmra.mxu0 %v466
        %v1670 = vpop.f32.mrf.mxu0
        %v1671 = vadd.f32 %v1127, %v1670
        %v1672 = vpop.f32.mrf.mxu0
        %1673 = vmatprep.mubr.f32.mxu0 %v473
        %1674 = vmatmul.mubr.f32.gmra.mxu0 %v472
        %v1675 = vpop.f32.mrf.mxu0
        %v1676 = vadd.f32 %v1132, %v1675
        %v1677 = vpop.f32.mrf.mxu0
        %1678 = vmatprep.mubr.f32.mxu0 %v479
        %1679 = vmatmul.mubr.f32.gmra.mxu0 %v478
        %v1680 = vpop.f32.mrf.mxu0
        %v1681 = vadd.f32 %v1137, %v1680
        %v1682 = vpop.f32.mrf.mxu0
        %1683 = vmatprep.mubr.f32.mxu0 %v485
        %1684 = vmatmul.mubr.f32.gmra.mxu0 %v484
        %v1685 = vpop.f32.mrf.mxu0
        %v1686 = vadd.f32 %v1142, %v1685
        %v1687 = vpop.f32.mrf.mxu0
        %1688 = vmatprep.mubr.f32.mxu0 %v491
        %1689 = vmatmul.mubr.f32.gmra.mxu0 %v490
        %v1690 = vpop.f32.mrf.mxu0
        %v1691 = vadd.f32 %v1147, %v1690
        %v1692 = vpop.f32.mrf.mxu0
        %1693 = vmatprep.mubr.f32.mxu0 %v497
        %1694 = vmatmul.mubr.f32.gmra.mxu0 %v496
        %v1695 = vpop.f32.mrf.mxu0
        %v1696 = vadd.f32 %v1152, %v1695
        %v1697 = vpop.f32.mrf.mxu0
        %1698 = vmatprep.mubr.f32.mxu0 %v503
        %1699 = vmatmul.mubr.f32.gmra.mxu0 %v502
        %v1700 = vpop.f32.mrf.mxu0
        %v1701 = vadd.f32 %v1157, %v1700
        %v1702 = vpop.f32.mrf.mxu0
        %1703 = vmatprep.mubr.f32.mxu0 %v509
        %1704 = vmatmul.mubr.f32.gmra.mxu0 %v508
        %v1705 = vpop.f32.mrf.mxu0
        %v1706 = vadd.f32 %v1162, %v1705
        %v1707 = vpop.f32.mrf.mxu0
        %1708 = vmatprep.mubr.f32.mxu0 %v515
        %1709 = vmatmul.mubr.f32.gmra.mxu0 %v514
        %v1710 = vpop.f32.mrf.mxu0
        %v1711 = vadd.f32 %v1167, %v1710
        %v1712 = vpop.f32.mrf.mxu0
        %1713 = vmatprep.mubr.f32.mxu0 %v521
        %1714 = vmatmul.mubr.f32.gmra.mxu0 %v520
        %v1715 = vpop.f32.mrf.mxu0
        %v1716 = vadd.f32 %v1172, %v1715
        %v1717 = vpop.f32.mrf.mxu0
        %1718 = vmatprep.mubr.f32.mxu0 %v527
        %1719 = vmatmul.mubr.f32.gmra.mxu0 %v526
        %v1720 = vpop.f32.mrf.mxu0
        %v1721 = vadd.f32 %v1177, %v1720
        %v1722 = vpop.f32.mrf.mxu0
        %1723 = vmatprep.mubr.f32.mxu0 %v533
        %1724 = vmatmul.mubr.f32.gmra.mxu0 %v532
        %v1725 = vpop.f32.mrf.mxu0
        %v1726 = vadd.f32 %v1182, %v1725
        %v1727 = vpop.f32.mrf.mxu0
        %1728 = vmatprep.mubr.f32.mxu0 %v539
        %1729 = vmatmul.mubr.f32.gmra.mxu0 %v538
        %v1730 = vpop.f32.mrf.mxu0
        %v1731 = vadd.f32 %v1187, %v1730
        %v1732 = vpop.f32.mrf.mxu0
        %1733 = vmatprep.mubr.f32.mxu0 %v545
        %1734 = vmatmul.mubr.f32.gmra.mxu0 %v544
        %v1735 = vpop.f32.mrf.mxu0
        %v1736 = vadd.f32 %v1192, %v1735
        %v1737 = vpop.f32.mrf.mxu0
        %1738 = vmatprep.mubr.f32.mxu0 %v551
        %1739 = vmatmul.mubr.f32.gmra.mxu0 %v550
        %v1740 = vpop.f32.mrf.mxu0
        %v1741 = vadd.f32 %v1197, %v1740
        %v1742 = vpop.f32.mrf.mxu0
        %1743 = vmatprep.mubr.f32.mxu0 %v557
        %1744 = vmatmul.mubr.f32.gmra.mxu0 %v556
        %v1745 = vpop.f32.mrf.mxu0
        %v1746 = vadd.f32 %v1202, %v1745
        %v1747 = vpop.f32.mrf.mxu0
        %1748 = vmatprep.mubr.f32.mxu0 %v563
        %1749 = vmatmul.mubr.f32.gmra.mxu0 %v562
        %v1750 = vpop.f32.mrf.mxu0
        %v1751 = vadd.f32 %v1207, %v1750
        %v1752 = vpop.f32.mrf.mxu0
        %1753 = vmatprep.mubr.f32.mxu0 %v569
        %1754 = vmatmul.mubr.f32.gmra.mxu0 %v568
        %v1755 = vpop.f32.mrf.mxu0
        %v1756 = vadd.f32 %v1212, %v1755
        %v1757 = vpop.f32.mrf.mxu0
        %1758 = vmatprep.mubr.f32.mxu0 %v575
        %1759 = vmatmul.mubr.f32.gmra.mxu0 %v574
        %v1760 = vpop.f32.mrf.mxu0
        %v1761 = vadd.f32 %v1217, %v1760
        %v1762 = vpop.f32.mrf.mxu0
        %1763 = vmatprep.mubr.f32.mxu0 %v581
        %1764 = vmatmul.mubr.f32.gmra.mxu0 %v580
        %v1765 = vpop.f32.mrf.mxu0
        %v1766 = vadd.f32 %v1222, %v1765
        %v1767 = vpop.f32.mrf.mxu0
        %1768 = vmatprep.mubr.f32.mxu0 %v587
        %1769 = vmatmul.mubr.f32.gmra.mxu0 %v586
        %v1770 = vpop.f32.mrf.mxu0
        %v1771 = vadd.f32 %v1227, %v1770
        %v1772 = vpop.f32.mrf.mxu0
        %1773 = vmatprep.mubr.f32.mxu0 %v593
        %1774 = vmatmul.mubr.f32.gmra.mxu0 %v592
        %v1775 = vpop.f32.mrf.mxu0
        %v1776 = vadd.f32 %v1232, %v1775
        %v1777 = vpop.f32.mrf.mxu0
        %1778 = vmatprep.mubr.f32.mxu0 %v599
        %1779 = vmatmul.mubr.f32.gmra.mxu0 %v598
        %v1780 = vpop.f32.mrf.mxu0
        %v1781 = vadd.f32 %v1237, %v1780
        %v1782 = vpop.f32.mrf.mxu0
        %1783 = vmatprep.mubr.f32.mxu0 %v605
        %1784 = vmatmul.mubr.f32.gmra.mxu0 %v604
        %v1785 = vpop.f32.mrf.mxu0
        %v1786 = vadd.f32 %v1242, %v1785
        %v1787 = vpop.f32.mrf.mxu0
        %1788 = vmatprep.mubr.f32.mxu0 %v611
        %1789 = vmatmul.mubr.f32.gmra.mxu0 %v610
        %v1790 = vpop.f32.mrf.mxu0
        %v1791 = vadd.f32 %v1247, %v1790
        %v1792 = vpop.f32.mrf.mxu0
        %1793 = vmatprep.mubr.f32.mxu0 %v617
        %1794 = vmatmul.mubr.f32.gmra.mxu0 %v616
        %v1795 = vpop.f32.mrf.mxu0
        %v1796 = vadd.f32 %v1252, %v1795
        %v1797 = vpop.f32.mrf.mxu0
        %1798 = vmatprep.mubr.f32.mxu0 %v623
        %1799 = vmatmul.mubr.f32.gmra.mxu0 %v622
        %v1800 = vpop.f32.mrf.mxu0
        %v1801 = vadd.f32 %v1257, %v1800
        %v1802 = vpop.f32.mrf.mxu0
        %1803 = vmatprep.mubr.f32.mxu0 %v629
        %1804 = vmatmul.mubr.f32.gmra.mxu0 %v628
        %v1805 = vpop.f32.mrf.mxu0
        %v1806 = vadd.f32 %v1262, %v1805
        %v1807 = vpop.f32.mrf.mxu0
        %1808 = vmatprep.mubr.f32.mxu0 %v635
        %1809 = vmatmul.mubr.f32.gmra.mxu0 %v634
        %v1810 = vpop.f32.mrf.mxu0
        %v1811 = vadd.f32 %v1267, %v1810
        %v1812 = vpop.f32.mrf.mxu0
        %1813 = vmatprep.mubr.f32.mxu0 %v641
        %1814 = vmatmul.mubr.f32.gmra.mxu0 %v640
        %v1815 = vpop.f32.mrf.mxu0
        %v1816 = vadd.f32 %v1272, %v1815
        %v1817 = vpop.f32.mrf.mxu0
        %1818 = vmatprep.mubr.f32.mxu0 %v647
        %1819 = vmatmul.mubr.f32.gmra.mxu0 %v646
        %v1820 = vpop.f32.mrf.mxu0
        %v1821 = vadd.f32 %v1277, %v1820
        %v1822 = vpop.f32.mrf.mxu0
        %1823 = vmatprep.mubr.f32.mxu0 %v653
        %1824 = vmatmul.mubr.f32.gmra.mxu0 %v652
        %v1825 = vpop.f32.mrf.mxu0
        %v1826 = vadd.f32 %v1282, %v1825
        %v1827 = vpop.f32.mrf.mxu0
        %1828 = vmatprep.mubr.f32.mxu0 %v659
        %1829 = vmatmul.mubr.f32.gmra.mxu0 %v658
        %v1830 = vpop.f32.mrf.mxu0
        %v1831 = vadd.f32 %v1287, %v1830
        %v1832 = vpop.f32.mrf.mxu0
        %1833 = vmatprep.mubr.f32.mxu0 %v665
        %1834 = vmatmul.mubr.f32.gmra.mxu0 %v664
        %v1835 = vpop.f32.mrf.mxu0
        %v1836 = vadd.f32 %v1292, %v1835
        %v1837 = vpop.f32.mrf.mxu0
        %1838 = vmatprep.mubr.f32.mxu0 %v671
        %1839 = vmatmul.mubr.f32.gmra.mxu0 %v670
        %v1840 = vpop.f32.mrf.mxu0
        %v1841 = vadd.f32 %v1297, %v1840
        %v1842 = vpop.f32.mrf.mxu0
        %1843 = vmatprep.mubr.f32.mxu0 %v677
        %1844 = vmatmul.mubr.f32.gmra.mxu0 %v676
        %v1845 = vpop.f32.mrf.mxu0
        %v1846 = vadd.f32 %v1302, %v1845
        %v1847 = vpop.f32.mrf.mxu0
        %1848 = vmatprep.mubr.f32.mxu0 %v683
        %1849 = vmatmul.mubr.f32.gmra.mxu0 %v682
        %v1850 = vpop.f32.mrf.mxu0
        %v1851 = vadd.f32 %v1307, %v1850
        %v1852 = vpop.f32.mrf.mxu0
        %1853 = vmatprep.mubr.f32.mxu0 %v689
        %1854 = vmatmul.mubr.f32.gmra.mxu0 %v688
        %v1855 = vpop.f32.mrf.mxu0
        %v1856 = vadd.f32 %v1312, %v1855
        %v1857 = vpop.f32.mrf.mxu0
        %1858 = vmatprep.mubr.f32.mxu0 %v695
        %1859 = vmatmul.mubr.f32.gmra.mxu0 %v694
        %v1860 = vpop.f32.mrf.mxu0
        %v1861 = vadd.f32 %v1317, %v1860
        %v1862 = vpop.f32.mrf.mxu0
        %1863 = vmatprep.mubr.f32.mxu0 %v701
        %1864 = vmatmul.mubr.f32.gmra.mxu0 %v700
        %v1865 = vpop.f32.mrf.mxu0
        %v1866 = vadd.f32 %v1322, %v1865
        %v1867 = vpop.f32.mrf.mxu0
        %1868 = vmatprep.mubr.f32.mxu0 %v707
        %1869 = vmatmul.mubr.f32.gmra.mxu0 %v706
        %v1870 = vpop.f32.mrf.mxu0
        %v1871 = vadd.f32 %v1327, %v1870
        %v1872 = vpop.f32.mrf.mxu0
        %1873 = vmatprep.mubr.f32.mxu0 %v713
        %1874 = vmatmul.mubr.f32.gmra.mxu0 %v712
        %v1875 = vpop.f32.mrf.mxu0
        %v1876 = vadd.f32 %v1332, %v1875
        %v1877 = vpop.f32.mrf.mxu0
        %1878 = vmatprep.mubr.f32.mxu0 %v719
        %1879 = vmatmul.mubr.f32.gmra.mxu0 %v718
        %v1880 = vpop.f32.mrf.mxu0
        %v1881 = vadd.f32 %v1337, %v1880
        %v1882 = vpop.f32.mrf.mxu0
        %1883 = vmatprep.mubr.f32.mxu0 %v725
        %1884 = vmatmul.mubr.f32.gmra.mxu0 %v724
        %v1885 = vpop.f32.mrf.mxu0
        %v1886 = vadd.f32 %v1342, %v1885
        %v1887 = vpop.f32.mrf.mxu0
        %1888 = vmatprep.mubr.f32.mxu0 %v731
        %1889 = vmatmul.mubr.f32.gmra.mxu0 %v730
        %v1890 = vpop.f32.mrf.mxu0
        %v1891 = vadd.f32 %v1347, %v1890
        %v1892 = vpop.f32.mrf.mxu0
        %1893 = vmatprep.mubr.f32.mxu0 %v737
        %1894 = vmatmul.mubr.f32.gmra.mxu0 %v736
        %v1895 = vpop.f32.mrf.mxu0
        %v1896 = vadd.f32 %v1352, %v1895
        %v1897 = vpop.f32.mrf.mxu0
        %1898 = vmatprep.mubr.f32.mxu0 %v743
        %1899 = vmatmul.mubr.f32.gmra.mxu0 %v742
        %v1900 = vpop.f32.mrf.mxu0
        %v1901 = vadd.f32 %v1357, %v1900
        %v1902 = vpop.f32.mrf.mxu0
        %1903 = vmatprep.mubr.f32.mxu0 %v749
        %1904 = vmatmul.mubr.f32.gmra.mxu0 %v748
        %v1905 = vpop.f32.mrf.mxu0
        %v1906 = vadd.f32 %v1362, %v1905
        %v1907 = vpop.f32.mrf.mxu0
        %1908 = vmatprep.mubr.f32.mxu0 %v755
        %1909 = vmatmul.mubr.f32.gmra.mxu0 %v754
        %v1910 = vpop.f32.mrf.mxu0
        %v1911 = vadd.f32 %v1367, %v1910
        %v1912 = vpop.f32.mrf.mxu0
        %1913 = vmatprep.mubr.f32.mxu0 %v761
        %1914 = vmatmul.mubr.f32.gmra.mxu0 %v760
        %v1915 = vpop.f32.mrf.mxu0
        %v1916 = vadd.f32 %v1372, %v1915
        %v1917 = vpop.f32.mrf.mxu0
        %1918 = vmatprep.mubr.f32.mxu0 %v767
        %1919 = vmatmul.mubr.f32.gmra.mxu0 %v766
        %v1920 = vpop.f32.mrf.mxu0
        %v1921 = vadd.f32 %v1377, %v1920
        %v1922 = vpop.f32.mrf.mxu0
        %1923 = vmatprep.mubr.f32.mxu0 %v773
        %1924 = vmatmul.mubr.f32.gmra.mxu0 %v772
        %v1925 = vpop.f32.mrf.mxu0
        %v1926 = vadd.f32 %v1382, %v1925
        %v1927 = vpop.f32.mrf.mxu0
        %1928 = vmatprep.mubr.f32.mxu0 %v779
        %1929 = vmatmul.mubr.f32.gmra.mxu0 %v778
        %v1930 = vpop.f32.mrf.mxu0
        %v1931 = vadd.f32 %v1387, %v1930
        %v1932 = vpop.f32.mrf.mxu0
        %1933 = vmatprep.mubr.f32.mxu0 %v785
        %1934 = vmatmul.mubr.f32.gmra.mxu0 %v784
        %v1935 = vpop.f32.mrf.mxu0
        %v1936 = vadd.f32 %v1392, %v1935
        %v1937 = vpop.f32.mrf.mxu0
        %1938 = vmatprep.mubr.f32.mxu0 %v791
        %1939 = vmatmul.mubr.f32.gmra.mxu0 %v790
        %v1940 = vpop.f32.mrf.mxu0
        %v1941 = vadd.f32 %v1397, %v1940
        %v1942 = vpop.f32.mrf.mxu0
        %1943 = vmatprep.mubr.f32.mxu0 %v797
        %1944 = vmatmul.mubr.f32.gmra.mxu0 %v796
        %v1945 = vpop.f32.mrf.mxu0
        %v1946 = vadd.f32 %v1402, %v1945
        %v1947 = vpop.f32.mrf.mxu0
        %1948 = vmatprep.mubr.f32.mxu0 %v803
        %1949 = vmatmul.mubr.f32.gmra.mxu0 %v802
        %v1950 = vpop.f32.mrf.mxu0
        %v1951 = vadd.f32 %v1407, %v1950
        %v1952 = vpop.f32.mrf.mxu0
        %1953 = vmatprep.mubr.f32.mxu0 %v809
        %1954 = vmatmul.mubr.f32.gmra.mxu0 %v808
        %v1955 = vpop.f32.mrf.mxu0
        %v1956 = vadd.f32 %v1412, %v1955
        %v1957 = vpop.f32.mrf.mxu0
        %1958 = vmatprep.mubr.f32.mxu0 %v815
        %1959 = vmatmul.mubr.f32.gmra.mxu0 %v814
        %v1960 = vpop.f32.mrf.mxu0
        %v1961 = vadd.f32 %v1417, %v1960
        %v1962 = vpop.f32.mrf.mxu0
        %1963 = vmatprep.mubr.f32.mxu0 %v821
        %1964 = vmatmul.mubr.f32.gmra.mxu0 %v820
        %v1965 = vpop.f32.mrf.mxu0
        %v1966 = vadd.f32 %v1422, %v1965
        %v1967 = vpop.f32.mrf.mxu0
        %1968 = vmatprep.mubr.f32.mxu0 %v827
        %1969 = vmatmul.mubr.f32.gmra.mxu0 %v826
        %v1970 = vpop.f32.mrf.mxu0
        %v1971 = vadd.f32 %v1427, %v1970
        %v1972 = vpop.f32.mrf.mxu0
        %1973 = vmatprep.mubr.f32.mxu0 %v833
        %1974 = vmatmul.mubr.f32.gmra.mxu0 %v832
        %v1975 = vpop.f32.mrf.mxu0
        %v1976 = vadd.f32 %v1432, %v1975
        %v1977 = vpop.f32.mrf.mxu0
        %1978 = vmatprep.mubr.f32.mxu0 %v839
        %1979 = vmatmul.mubr.f32.gmra.mxu0 %v838
        %v1980 = vpop.f32.mrf.mxu0
        %v1981 = vadd.f32 %v1437, %v1980
        %v1982 = vpop.f32.mrf.mxu0
        %1983 = vmatprep.mubr.f32.mxu0 %v845
        %1984 = vmatmul.mubr.f32.gmra.mxu0 %v844
        %v1985 = vpop.f32.mrf.mxu0
        %v1986 = vadd.f32 %v1442, %v1985
        %v1987 = vpop.f32.mrf.mxu0
        %1988 = vmatprep.mubr.f32.mxu0 %v851
        %1989 = vmatmul.mubr.f32.gmra.mxu0 %v850
        %v1990 = vpop.f32.mrf.mxu0
        %v1991 = vadd.f32 %v1447, %v1990
        %v1992 = vpop.f32.mrf.mxu0
        %1993 = vmatprep.mubr.f32.mxu0 %v857
        %1994 = vmatmul.mubr.f32.gmra.mxu0 %v856
        %v1995 = vpop.f32.mrf.mxu0
        %v1996 = vadd.f32 %v1452, %v1995
        %v1997 = vpop.f32.mrf.mxu0
        %1998 = vmatprep.mubr.f32.mxu0 %v863
        %1999 = vmatmul.mubr.f32.gmra.mxu0 %v862
        %v2000 = vpop.f32.mrf.mxu0
        %v2001 = vadd.f32 %v1457, %v2000
        %v2002 = vpop.f32.mrf.mxu0
        %2003 = vmatprep.mubr.f32.mxu0 %v869
        %2004 = vmatmul.mubr.f32.gmra.mxu0 %v868
        %v2005 = vpop.f32.mrf.mxu0
        %v2006 = vadd.f32 %v1462, %v2005
        %v2007 = vpop.f32.mrf.mxu0
        %2008 = vmatprep.mubr.f32.mxu0 %v875
        %2009 = vmatmul.mubr.f32.gmra.mxu0 %v874
        %v2010 = vpop.f32.mrf.mxu0
        %v2011 = vadd.f32 %v1467, %v2010
        %v2012 = vpop.f32.mrf.mxu0
        %2013 = vmatprep.mubr.f32.mxu0 %v881
        %2014 = vmatmul.mubr.f32.gmra.mxu0 %v880
        %v2015 = vpop.f32.mrf.mxu0
        %v2016 = vadd.f32 %v1472, %v2015
        %v2017 = vpop.f32.mrf.mxu0
        %2018 = vmatprep.mubr.f32.mxu0 %v887
        %2019 = vmatmul.mubr.f32.gmra.mxu0 %v886
        %v2020 = vpop.f32.mrf.mxu0
        %v2021 = vadd.f32 %v1477, %v2020
        %v2022 = vpop.f32.mrf.mxu0
        %2023 = vmatprep.mubr.f32.mxu0 %v893
        %2024 = vmatmul.mubr.f32.gmra.mxu0 %v892
        %v2025 = vpop.f32.mrf.mxu0
        %v2026 = vadd.f32 %v1482, %v2025
        %v2027 = vpop.f32.mrf.mxu0
        %2028 = vmatprep.mubr.f32.mxu0 %v899
        %2029 = vmatmul.mubr.f32.gmra.mxu0 %v898
        %v2030 = vpop.f32.mrf.mxu0
        %v2031 = vadd.f32 %v1487, %v2030
        %v2032 = vpop.f32.mrf.mxu0
        %2033 = vmatprep.mubr.f32.mxu0 %v905
        %2034 = vmatmul.mubr.f32.gmra.mxu0 %v904
        %v2035 = vpop.f32.mrf.mxu0
        %v2036 = vadd.f32 %v1492, %v2035
        %v2037 = vpop.f32.mrf.mxu0
        %2038 = vmatprep.mubr.f32.mxu0 %v911
        %2039 = vmatmul.mubr.f32.gmra.mxu0 %v910
        %v2040 = vpop.f32.mrf.mxu0
        %v2041 = vadd.f32 %v1497, %v2040
        %v2042 = vpop.f32.mrf.mxu0
        %2043 = vmatprep.mubr.f32.mxu0 %v917
        %2044 = vmatmul.mubr.f32.gmra.mxu0 %v916
        %v2045 = vpop.f32.mrf.mxu0
        %v2046 = vadd.f32 %v1502, %v2045
        %v2047 = vpop.f32.mrf.mxu0
        %2048 = vmatprep.mubr.f32.mxu0 %v923
        %2049 = vmatmul.mubr.f32.gmra.mxu0 %v922
        %v2050 = vpop.f32.mrf.mxu0
        %v2051 = vadd.f32 %v1507, %v2050
        %v2052 = vpop.f32.mrf.mxu0
        %2053 = vmatprep.mubr.f32.mxu0 %v929
        %2054 = vmatmul.mubr.f32.gmra.mxu0 %v928
        %v2055 = vpop.f32.mrf.mxu0
        %v2056 = vadd.f32 %v1512, %v2055
        %v2057 = vpop.f32.mrf.mxu0
        %2058 = vmatprep.mubr.f32.mxu0 %v935
        %2059 = vmatmul.mubr.f32.gmra.mxu0 %v934
        %v2060 = vpop.f32.mrf.mxu0
        %v2061 = vadd.f32 %v1517, %v2060
        %v2062 = vpop.f32.mrf.mxu0
        %2063 = vmatprep.mubr.f32.mxu0 %v941
        %2064 = vmatmul.mubr.f32.gmra.mxu0 %v940
        %v2065 = vpop.f32.mrf.mxu0
        %v2066 = vadd.f32 %v1522, %v2065
        %v2067 = vpop.f32.mrf.mxu0
        %2068 = vmatprep.mubr.f32.mxu0 %v947
        %2069 = vmatmul.mubr.f32.gmra.mxu0 %v946
        %v2070 = vpop.f32.mrf.mxu0
        %v2071 = vadd.f32 %v1527, %v2070
        %v2072 = vpop.f32.mrf.mxu0
        %2073 = vmatprep.mubr.f32.mxu0 %v953
        %2074 = vmatmul.mubr.f32.gmra.mxu0 %v952
        %v2075 = vpop.f32.mrf.mxu0
        %v2076 = vadd.f32 %v1532, %v2075
        %v2077 = vpop.f32.mrf.mxu0
        %2078 = vdwg.mxu0
        %2079 = vmatprep.subr.mxu0 0.0
        %2080 = vmatpush1.msra.mxu0 %v333
        %2081 = vmatprep.subr.mxu0 0.0
        %2082 = vmatpush1.msra.mxu0 %v332
        %2083 = vmatprep.subr.mxu0 0.0
        %2084 = vmatpush1.msra.mxu0 %v331
        %2085 = vmatprep.subr.mxu0 0.0
        %2086 = vmatpush1.msra.mxu0 %v330
        %2087 = vmatprep.subr.mxu0 0.0
        %2088 = vmatpush1.msra.mxu0 %v329
        %2089 = vmatprep.subr.mxu0 0.0
        %2090 = vmatpush1.msra.mxu0 %v328
        %2091 = vmatprep.subr.mxu0 0.0
        %2092 = vmatpush1.msra.mxu0 %v327
        %2093 = vmatprep.subr.mxu0 0.0
        %2094 = vmatpush1.msra.mxu0 %v326
        %2095 = vmatprep.subr.mxu0 0.0
        %2096 = vmatpush1.msra.mxu0 %v325
        %2097 = vmatprep.subr.mxu0 0.0
        %2098 = vmatpush1.msra.mxu0 %v324
        %2099 = vmatprep.subr.mxu0 0.0
        %2100 = vmatpush1.msra.mxu0 %v323
        %2101 = vmatprep.subr.mxu0 0.0
        %2102 = vmatpush1.msra.mxu0 %v322
        %2103 = vmatprep.subr.mxu0 0.0
        %2104 = vmatpush1.msra.mxu0 %v321
        %2105 = vmatprep.subr.mxu0 0.0
        %2106 = vmatpush1.msra.mxu0 %v320
        %2107 = vmatprep.subr.mxu0 0.0
        %2108 = vmatpush1.msra.mxu0 %v319
        %2109 = vmatprep.subr.mxu0 0.0
        %2110 = vmatpush1.msra.mxu0 %v318
        %2111 = vmatprep.subr.mxu0 0.0
        %2112 = vmatpush2.msra.mxu0 %v349
        %2113 = vmatprep.subr.mxu0 0.0
        %2114 = vmatpush2.msra.mxu0 %v348
        %2115 = vmatprep.subr.mxu0 0.0
        %2116 = vmatpush2.msra.mxu0 %v347
        %2117 = vmatprep.subr.mxu0 0.0
        %2118 = vmatpush2.msra.mxu0 %v346
        %2119 = vmatprep.subr.mxu0 0.0
        %2120 = vmatpush2.msra.mxu0 %v345
        %2121 = vmatprep.subr.mxu0 0.0
        %2122 = vmatpush2.msra.mxu0 %v344
        %2123 = vmatprep.subr.mxu0 0.0
        %2124 = vmatpush2.msra.mxu0 %v343
        %2125 = vmatprep.subr.mxu0 0.0
        %2126 = vmatpush2.msra.mxu0 %v342
        %2127 = vmatprep.subr.mxu0 0.0
        %2128 = vmatpush2.msra.mxu0 %v341
        %2129 = vmatprep.subr.mxu0 0.0
        %2130 = vmatpush2.msra.mxu0 %v340
        %2131 = vmatprep.subr.mxu0 0.0
        %2132 = vmatpush2.msra.mxu0 %v339
        %2133 = vmatprep.subr.mxu0 0.0
        %2134 = vmatpush2.msra.mxu0 %v338
        %2135 = vmatprep.subr.mxu0 0.0
        %2136 = vmatpush2.msra.mxu0 %v337
        %2137 = vmatprep.subr.mxu0 0.0
        %2138 = vmatpush2.msra.mxu0 %v336
        %2139 = vmatprep.subr.mxu0 0.0
        %2140 = vmatpush2.msra.mxu0 %v335
        %2141 = vmatprep.subr.mxu0 0.0
        %2142 = vmatpush2.msra.mxu0 %v334
        %2143 = vmatprep.mubr.f32.mxu0 %v385
        %2144 = vmatmul.mubr.f32.gmra.mxu0 %v384
        %v2145 = vpop.f32.mrf.mxu0
        %v2146 = vadd.f32 %v1601, %v2145
        %v2147 = vpop.f32.mrf.mxu0
        %2148 = vmatprep.mubr.f32.mxu0 %v391
        %2149 = vmatmul.mubr.f32.gmra.mxu0 %v390
        %v2150 = vpop.f32.mrf.mxu0
        %v2151 = vadd.f32 %v1606, %v2150
        %v2152 = vpop.f32.mrf.mxu0
        %2153 = vmatprep.mubr.f32.mxu0 %v397
        %2154 = vmatmul.mubr.f32.gmra.mxu0 %v396
        %v2155 = vpop.f32.mrf.mxu0
        %v2156 = vadd.f32 %v1611, %v2155
        %v2157 = vpop.f32.mrf.mxu0
        %2158 = vmatprep.mubr.f32.mxu0 %v403
        %2159 = vmatmul.mubr.f32.gmra.mxu0 %v402
        %v2160 = vpop.f32.mrf.mxu0
        %v2161 = vadd.f32 %v1616, %v2160
        %v2162 = vpop.f32.mrf.mxu0
        %2163 = vmatprep.mubr.f32.mxu0 %v409
        %2164 = vmatmul.mubr.f32.gmra.mxu0 %v408
        %v2165 = vpop.f32.mrf.mxu0
        %v2166 = vadd.f32 %v1621, %v2165
        %v2167 = vpop.f32.mrf.mxu0
        %2168 = vmatprep.mubr.f32.mxu0 %v415
        %2169 = vmatmul.mubr.f32.gmra.mxu0 %v414
        %v2170 = vpop.f32.mrf.mxu0
        %v2171 = vadd.f32 %v1626, %v2170
        %v2172 = vpop.f32.mrf.mxu0
        %2173 = vmatprep.mubr.f32.mxu0 %v421
        %2174 = vmatmul.mubr.f32.gmra.mxu0 %v420
        %v2175 = vpop.f32.mrf.mxu0
        %v2176 = vadd.f32 %v1631, %v2175
        %v2177 = vpop.f32.mrf.mxu0
        %2178 = vmatprep.mubr.f32.mxu0 %v427
        %2179 = vmatmul.mubr.f32.gmra.mxu0 %v426
        %v2180 = vpop.f32.mrf.mxu0
        %v2181 = vadd.f32 %v1636, %v2180
        %v2182 = vpop.f32.mrf.mxu0
        %2183 = vmatprep.mubr.f32.mxu0 %v433
        %2184 = vmatmul.mubr.f32.gmra.mxu0 %v432
        %v2185 = vpop.f32.mrf.mxu0
        %v2186 = vadd.f32 %v1641, %v2185
        %v2187 = vpop.f32.mrf.mxu0
        %2188 = vmatprep.mubr.f32.mxu0 %v439
        %2189 = vmatmul.mubr.f32.gmra.mxu0 %v438
        %v2190 = vpop.f32.mrf.mxu0
        %v2191 = vadd.f32 %v1646, %v2190
        %v2192 = vpop.f32.mrf.mxu0
        %2193 = vmatprep.mubr.f32.mxu0 %v445
        %2194 = vmatmul.mubr.f32.gmra.mxu0 %v444
        %v2195 = vpop.f32.mrf.mxu0
        %v2196 = vadd.f32 %v1651, %v2195
        %v2197 = vpop.f32.mrf.mxu0
        %2198 = vmatprep.mubr.f32.mxu0 %v451
        %2199 = vmatmul.mubr.f32.gmra.mxu0 %v450
        %v2200 = vpop.f32.mrf.mxu0
        %v2201 = vadd.f32 %v1656, %v2200
        %v2202 = vpop.f32.mrf.mxu0
        %2203 = vmatprep.mubr.f32.mxu0 %v457
        %2204 = vmatmul.mubr.f32.gmra.mxu0 %v456
        %v2205 = vpop.f32.mrf.mxu0
        %v2206 = vadd.f32 %v1661, %v2205
        %v2207 = vpop.f32.mrf.mxu0
        %2208 = vmatprep.mubr.f32.mxu0 %v463
        %2209 = vmatmul.mubr.f32.gmra.mxu0 %v462
        %v2210 = vpop.f32.mrf.mxu0
        %v2211 = vadd.f32 %v1666, %v2210
        %v2212 = vpop.f32.mrf.mxu0
        %2213 = vmatprep.mubr.f32.mxu0 %v469
        %2214 = vmatmul.mubr.f32.gmra.mxu0 %v468
        %v2215 = vpop.f32.mrf.mxu0
        %v2216 = vadd.f32 %v1671, %v2215
        %v2217 = vpop.f32.mrf.mxu0
        %2218 = vmatprep.mubr.f32.mxu0 %v475
        %2219 = vmatmul.mubr.f32.gmra.mxu0 %v474
        %v2220 = vpop.f32.mrf.mxu0
        %v2221 = vadd.f32 %v1676, %v2220
        %v2222 = vpop.f32.mrf.mxu0
        %2223 = vmatprep.mubr.f32.mxu0 %v481
        %2224 = vmatmul.mubr.f32.gmra.mxu0 %v480
        %v2225 = vpop.f32.mrf.mxu0
        %v2226 = vadd.f32 %v1681, %v2225
        %v2227 = vpop.f32.mrf.mxu0
        %2228 = vmatprep.mubr.f32.mxu0 %v487
        %2229 = vmatmul.mubr.f32.gmra.mxu0 %v486
        %v2230 = vpop.f32.mrf.mxu0
        %v2231 = vadd.f32 %v1686, %v2230
        %v2232 = vpop.f32.mrf.mxu0
        %2233 = vmatprep.mubr.f32.mxu0 %v493
        %2234 = vmatmul.mubr.f32.gmra.mxu0 %v492
        %v2235 = vpop.f32.mrf.mxu0
        %v2236 = vadd.f32 %v1691, %v2235
        %v2237 = vpop.f32.mrf.mxu0
        %2238 = vmatprep.mubr.f32.mxu0 %v499
        %2239 = vmatmul.mubr.f32.gmra.mxu0 %v498
        %v2240 = vpop.f32.mrf.mxu0
        %v2241 = vadd.f32 %v1696, %v2240
        %v2242 = vpop.f32.mrf.mxu0
        %2243 = vmatprep.mubr.f32.mxu0 %v505
        %2244 = vmatmul.mubr.f32.gmra.mxu0 %v504
        %v2245 = vpop.f32.mrf.mxu0
        %v2246 = vadd.f32 %v1701, %v2245
        %v2247 = vpop.f32.mrf.mxu0
        %2248 = vmatprep.mubr.f32.mxu0 %v511
        %2249 = vmatmul.mubr.f32.gmra.mxu0 %v510
        %v2250 = vpop.f32.mrf.mxu0
        %v2251 = vadd.f32 %v1706, %v2250
        %v2252 = vpop.f32.mrf.mxu0
        %2253 = vmatprep.mubr.f32.mxu0 %v517
        %2254 = vmatmul.mubr.f32.gmra.mxu0 %v516
        %v2255 = vpop.f32.mrf.mxu0
        %v2256 = vadd.f32 %v1711, %v2255
        %v2257 = vpop.f32.mrf.mxu0
        %2258 = vmatprep.mubr.f32.mxu0 %v523
        %2259 = vmatmul.mubr.f32.gmra.mxu0 %v522
        %v2260 = vpop.f32.mrf.mxu0
        %v2261 = vadd.f32 %v1716, %v2260
        %v2262 = vpop.f32.mrf.mxu0
        %2263 = vmatprep.mubr.f32.mxu0 %v529
        %2264 = vmatmul.mubr.f32.gmra.mxu0 %v528
        %v2265 = vpop.f32.mrf.mxu0
        %v2266 = vadd.f32 %v1721, %v2265
        %v2267 = vpop.f32.mrf.mxu0
        %2268 = vmatprep.mubr.f32.mxu0 %v535
        %2269 = vmatmul.mubr.f32.gmra.mxu0 %v534
        %v2270 = vpop.f32.mrf.mxu0
        %v2271 = vadd.f32 %v1726, %v2270
        %v2272 = vpop.f32.mrf.mxu0
        %2273 = vmatprep.mubr.f32.mxu0 %v541
        %2274 = vmatmul.mubr.f32.gmra.mxu0 %v540
        %v2275 = vpop.f32.mrf.mxu0
        %v2276 = vadd.f32 %v1731, %v2275
        %v2277 = vpop.f32.mrf.mxu0
        %2278 = vmatprep.mubr.f32.mxu0 %v547
        %2279 = vmatmul.mubr.f32.gmra.mxu0 %v546
        %v2280 = vpop.f32.mrf.mxu0
        %v2281 = vadd.f32 %v1736, %v2280
        %v2282 = vpop.f32.mrf.mxu0
        %2283 = vmatprep.mubr.f32.mxu0 %v553
        %2284 = vmatmul.mubr.f32.gmra.mxu0 %v552
        %v2285 = vpop.f32.mrf.mxu0
        %v2286 = vadd.f32 %v1741, %v2285
        %v2287 = vpop.f32.mrf.mxu0
        %2288 = vmatprep.mubr.f32.mxu0 %v559
        %2289 = vmatmul.mubr.f32.gmra.mxu0 %v558
        %v2290 = vpop.f32.mrf.mxu0
        %v2291 = vadd.f32 %v1746, %v2290
        %v2292 = vpop.f32.mrf.mxu0
        %2293 = vmatprep.mubr.f32.mxu0 %v565
        %2294 = vmatmul.mubr.f32.gmra.mxu0 %v564
        %v2295 = vpop.f32.mrf.mxu0
        %v2296 = vadd.f32 %v1751, %v2295
        %v2297 = vpop.f32.mrf.mxu0
        %2298 = vmatprep.mubr.f32.mxu0 %v571
        %2299 = vmatmul.mubr.f32.gmra.mxu0 %v570
        %v2300 = vpop.f32.mrf.mxu0
        %v2301 = vadd.f32 %v1756, %v2300
        %v2302 = vpop.f32.mrf.mxu0
        %2303 = vmatprep.mubr.f32.mxu0 %v577
        %2304 = vmatmul.mubr.f32.gmra.mxu0 %v576
        %v2305 = vpop.f32.mrf.mxu0
        %v2306 = vadd.f32 %v1761, %v2305
        %v2307 = vpop.f32.mrf.mxu0
        %2308 = vmatprep.mubr.f32.mxu0 %v583
        %2309 = vmatmul.mubr.f32.gmra.mxu0 %v582
        %v2310 = vpop.f32.mrf.mxu0
        %v2311 = vadd.f32 %v1766, %v2310
        %v2312 = vpop.f32.mrf.mxu0
        %2313 = vmatprep.mubr.f32.mxu0 %v589
        %2314 = vmatmul.mubr.f32.gmra.mxu0 %v588
        %v2315 = vpop.f32.mrf.mxu0
        %v2316 = vadd.f32 %v1771, %v2315
        %v2317 = vpop.f32.mrf.mxu0
        %2318 = vmatprep.mubr.f32.mxu0 %v595
        %2319 = vmatmul.mubr.f32.gmra.mxu0 %v594
        %v2320 = vpop.f32.mrf.mxu0
        %v2321 = vadd.f32 %v1776, %v2320
        %v2322 = vpop.f32.mrf.mxu0
        %2323 = vmatprep.mubr.f32.mxu0 %v601
        %2324 = vmatmul.mubr.f32.gmra.mxu0 %v600
        %v2325 = vpop.f32.mrf.mxu0
        %v2326 = vadd.f32 %v1781, %v2325
        %v2327 = vpop.f32.mrf.mxu0
        %2328 = vmatprep.mubr.f32.mxu0 %v607
        %2329 = vmatmul.mubr.f32.gmra.mxu0 %v606
        %v2330 = vpop.f32.mrf.mxu0
        %v2331 = vadd.f32 %v1786, %v2330
        %v2332 = vpop.f32.mrf.mxu0
        %2333 = vmatprep.mubr.f32.mxu0 %v613
        %2334 = vmatmul.mubr.f32.gmra.mxu0 %v612
        %v2335 = vpop.f32.mrf.mxu0
        %v2336 = vadd.f32 %v1791, %v2335
        %v2337 = vpop.f32.mrf.mxu0
        %2338 = vmatprep.mubr.f32.mxu0 %v619
        %2339 = vmatmul.mubr.f32.gmra.mxu0 %v618
        %v2340 = vpop.f32.mrf.mxu0
        %v2341 = vadd.f32 %v1796, %v2340
        %v2342 = vpop.f32.mrf.mxu0
        %2343 = vmatprep.mubr.f32.mxu0 %v625
        %2344 = vmatmul.mubr.f32.gmra.mxu0 %v624
        %v2345 = vpop.f32.mrf.mxu0
        %v2346 = vadd.f32 %v1801, %v2345
        %v2347 = vpop.f32.mrf.mxu0
        %2348 = vmatprep.mubr.f32.mxu0 %v631
        %2349 = vmatmul.mubr.f32.gmra.mxu0 %v630
        %v2350 = vpop.f32.mrf.mxu0
        %v2351 = vadd.f32 %v1806, %v2350
        %v2352 = vpop.f32.mrf.mxu0
        %2353 = vmatprep.mubr.f32.mxu0 %v637
        %2354 = vmatmul.mubr.f32.gmra.mxu0 %v636
        %v2355 = vpop.f32.mrf.mxu0
        %v2356 = vadd.f32 %v1811, %v2355
        %v2357 = vpop.f32.mrf.mxu0
        %2358 = vmatprep.mubr.f32.mxu0 %v643
        %2359 = vmatmul.mubr.f32.gmra.mxu0 %v642
        %v2360 = vpop.f32.mrf.mxu0
        %v2361 = vadd.f32 %v1816, %v2360
        %v2362 = vpop.f32.mrf.mxu0
        %2363 = vmatprep.mubr.f32.mxu0 %v649
        %2364 = vmatmul.mubr.f32.gmra.mxu0 %v648
        %v2365 = vpop.f32.mrf.mxu0
        %v2366 = vadd.f32 %v1821, %v2365
        %v2367 = vpop.f32.mrf.mxu0
        %2368 = vmatprep.mubr.f32.mxu0 %v655
        %2369 = vmatmul.mubr.f32.gmra.mxu0 %v654
        %v2370 = vpop.f32.mrf.mxu0
        %v2371 = vadd.f32 %v1826, %v2370
        %v2372 = vpop.f32.mrf.mxu0
        %2373 = vmatprep.mubr.f32.mxu0 %v661
        %2374 = vmatmul.mubr.f32.gmra.mxu0 %v660
        %v2375 = vpop.f32.mrf.mxu0
        %v2376 = vadd.f32 %v1831, %v2375
        %v2377 = vpop.f32.mrf.mxu0
        %2378 = vmatprep.mubr.f32.mxu0 %v667
        %2379 = vmatmul.mubr.f32.gmra.mxu0 %v666
        %v2380 = vpop.f32.mrf.mxu0
        %v2381 = vadd.f32 %v1836, %v2380
        %v2382 = vpop.f32.mrf.mxu0
        %2383 = vmatprep.mubr.f32.mxu0 %v673
        %2384 = vmatmul.mubr.f32.gmra.mxu0 %v672
        %v2385 = vpop.f32.mrf.mxu0
        %v2386 = vadd.f32 %v1841, %v2385
        %v2387 = vpop.f32.mrf.mxu0
        %2388 = vmatprep.mubr.f32.mxu0 %v679
        %2389 = vmatmul.mubr.f32.gmra.mxu0 %v678
        %v2390 = vpop.f32.mrf.mxu0
        %v2391 = vadd.f32 %v1846, %v2390
        %v2392 = vpop.f32.mrf.mxu0
        %2393 = vmatprep.mubr.f32.mxu0 %v685
        %2394 = vmatmul.mubr.f32.gmra.mxu0 %v684
        %v2395 = vpop.f32.mrf.mxu0
        %v2396 = vadd.f32 %v1851, %v2395
        %v2397 = vpop.f32.mrf.mxu0
        %2398 = vmatprep.mubr.f32.mxu0 %v691
        %2399 = vmatmul.mubr.f32.gmra.mxu0 %v690
        %v2400 = vpop.f32.mrf.mxu0
        %v2401 = vadd.f32 %v1856, %v2400
        %v2402 = vpop.f32.mrf.mxu0
        %2403 = vmatprep.mubr.f32.mxu0 %v697
        %2404 = vmatmul.mubr.f32.gmra.mxu0 %v696
        %v2405 = vpop.f32.mrf.mxu0
        %v2406 = vadd.f32 %v1861, %v2405
        %v2407 = vpop.f32.mrf.mxu0
        %2408 = vmatprep.mubr.f32.mxu0 %v703
        %2409 = vmatmul.mubr.f32.gmra.mxu0 %v702
        %v2410 = vpop.f32.mrf.mxu0
        %v2411 = vadd.f32 %v1866, %v2410
        %v2412 = vpop.f32.mrf.mxu0
        %2413 = vmatprep.mubr.f32.mxu0 %v709
        %2414 = vmatmul.mubr.f32.gmra.mxu0 %v708
        %v2415 = vpop.f32.mrf.mxu0
        %v2416 = vadd.f32 %v1871, %v2415
        %v2417 = vpop.f32.mrf.mxu0
        %2418 = vmatprep.mubr.f32.mxu0 %v715
        %2419 = vmatmul.mubr.f32.gmra.mxu0 %v714
        %v2420 = vpop.f32.mrf.mxu0
        %v2421 = vadd.f32 %v1876, %v2420
        %v2422 = vpop.f32.mrf.mxu0
        %2423 = vmatprep.mubr.f32.mxu0 %v721
        %2424 = vmatmul.mubr.f32.gmra.mxu0 %v720
        %v2425 = vpop.f32.mrf.mxu0
        %v2426 = vadd.f32 %v1881, %v2425
        %v2427 = vpop.f32.mrf.mxu0
        %2428 = vmatprep.mubr.f32.mxu0 %v727
        %2429 = vmatmul.mubr.f32.gmra.mxu0 %v726
        %v2430 = vpop.f32.mrf.mxu0
        %v2431 = vadd.f32 %v1886, %v2430
        %v2432 = vpop.f32.mrf.mxu0
        %2433 = vmatprep.mubr.f32.mxu0 %v733
        %2434 = vmatmul.mubr.f32.gmra.mxu0 %v732
        %v2435 = vpop.f32.mrf.mxu0
        %v2436 = vadd.f32 %v1891, %v2435
        %v2437 = vpop.f32.mrf.mxu0
        %2438 = vmatprep.mubr.f32.mxu0 %v739
        %2439 = vmatmul.mubr.f32.gmra.mxu0 %v738
        %v2440 = vpop.f32.mrf.mxu0
        %v2441 = vadd.f32 %v1896, %v2440
        %v2442 = vpop.f32.mrf.mxu0
        %2443 = vmatprep.mubr.f32.mxu0 %v745
        %2444 = vmatmul.mubr.f32.gmra.mxu0 %v744
        %v2445 = vpop.f32.mrf.mxu0
        %v2446 = vadd.f32 %v1901, %v2445
        %v2447 = vpop.f32.mrf.mxu0
        %2448 = vmatprep.mubr.f32.mxu0 %v751
        %2449 = vmatmul.mubr.f32.gmra.mxu0 %v750
        %v2450 = vpop.f32.mrf.mxu0
        %v2451 = vadd.f32 %v1906, %v2450
        %v2452 = vpop.f32.mrf.mxu0
        %2453 = vmatprep.mubr.f32.mxu0 %v757
        %2454 = vmatmul.mubr.f32.gmra.mxu0 %v756
        %v2455 = vpop.f32.mrf.mxu0
        %v2456 = vadd.f32 %v1911, %v2455
        %v2457 = vpop.f32.mrf.mxu0
        %2458 = vmatprep.mubr.f32.mxu0 %v763
        %2459 = vmatmul.mubr.f32.gmra.mxu0 %v762
        %v2460 = vpop.f32.mrf.mxu0
        %v2461 = vadd.f32 %v1916, %v2460
        %v2462 = vpop.f32.mrf.mxu0
        %2463 = vmatprep.mubr.f32.mxu0 %v769
        %2464 = vmatmul.mubr.f32.gmra.mxu0 %v768
        %v2465 = vpop.f32.mrf.mxu0
        %v2466 = vadd.f32 %v1921, %v2465
        %v2467 = vpop.f32.mrf.mxu0
        %2468 = vmatprep.mubr.f32.mxu0 %v775
        %2469 = vmatmul.mubr.f32.gmra.mxu0 %v774
        %v2470 = vpop.f32.mrf.mxu0
        %v2471 = vadd.f32 %v1926, %v2470
        %v2472 = vpop.f32.mrf.mxu0
        %2473 = vmatprep.mubr.f32.mxu0 %v781
        %2474 = vmatmul.mubr.f32.gmra.mxu0 %v780
        %v2475 = vpop.f32.mrf.mxu0
        %v2476 = vadd.f32 %v1931, %v2475
        %v2477 = vpop.f32.mrf.mxu0
        %2478 = vmatprep.mubr.f32.mxu0 %v787
        %2479 = vmatmul.mubr.f32.gmra.mxu0 %v786
        %v2480 = vpop.f32.mrf.mxu0
        %v2481 = vadd.f32 %v1936, %v2480
        %v2482 = vpop.f32.mrf.mxu0
        %2483 = vmatprep.mubr.f32.mxu0 %v793
        %2484 = vmatmul.mubr.f32.gmra.mxu0 %v792
        %v2485 = vpop.f32.mrf.mxu0
        %v2486 = vadd.f32 %v1941, %v2485
        %v2487 = vpop.f32.mrf.mxu0
        %2488 = vmatprep.mubr.f32.mxu0 %v799
        %2489 = vmatmul.mubr.f32.gmra.mxu0 %v798
        %v2490 = vpop.f32.mrf.mxu0
        %v2491 = vadd.f32 %v1946, %v2490
        %v2492 = vpop.f32.mrf.mxu0
        %2493 = vmatprep.mubr.f32.mxu0 %v805
        %2494 = vmatmul.mubr.f32.gmra.mxu0 %v804
        %v2495 = vpop.f32.mrf.mxu0
        %v2496 = vadd.f32 %v1951, %v2495
        %v2497 = vpop.f32.mrf.mxu0
        %2498 = vmatprep.mubr.f32.mxu0 %v811
        %2499 = vmatmul.mubr.f32.gmra.mxu0 %v810
        %v2500 = vpop.f32.mrf.mxu0
        %v2501 = vadd.f32 %v1956, %v2500
        %v2502 = vpop.f32.mrf.mxu0
        %2503 = vmatprep.mubr.f32.mxu0 %v817
        %2504 = vmatmul.mubr.f32.gmra.mxu0 %v816
        %v2505 = vpop.f32.mrf.mxu0
        %v2506 = vadd.f32 %v1961, %v2505
        %v2507 = vpop.f32.mrf.mxu0
        %2508 = vmatprep.mubr.f32.mxu0 %v823
        %2509 = vmatmul.mubr.f32.gmra.mxu0 %v822
        %v2510 = vpop.f32.mrf.mxu0
        %v2511 = vadd.f32 %v1966, %v2510
        %v2512 = vpop.f32.mrf.mxu0
        %2513 = vmatprep.mubr.f32.mxu0 %v829
        %2514 = vmatmul.mubr.f32.gmra.mxu0 %v828
        %v2515 = vpop.f32.mrf.mxu0
        %v2516 = vadd.f32 %v1971, %v2515
        %v2517 = vpop.f32.mrf.mxu0
        %2518 = vmatprep.mubr.f32.mxu0 %v835
        %2519 = vmatmul.mubr.f32.gmra.mxu0 %v834
        %v2520 = vpop.f32.mrf.mxu0
        %v2521 = vadd.f32 %v1976, %v2520
        %v2522 = vpop.f32.mrf.mxu0
        %2523 = vmatprep.mubr.f32.mxu0 %v841
        %2524 = vmatmul.mubr.f32.gmra.mxu0 %v840
        %v2525 = vpop.f32.mrf.mxu0
        %v2526 = vadd.f32 %v1981, %v2525
        %v2527 = vpop.f32.mrf.mxu0
        %2528 = vmatprep.mubr.f32.mxu0 %v847
        %2529 = vmatmul.mubr.f32.gmra.mxu0 %v846
        %v2530 = vpop.f32.mrf.mxu0
        %v2531 = vadd.f32 %v1986, %v2530
        %v2532 = vpop.f32.mrf.mxu0
        %2533 = vmatprep.mubr.f32.mxu0 %v853
        %2534 = vmatmul.mubr.f32.gmra.mxu0 %v852
        %v2535 = vpop.f32.mrf.mxu0
        %v2536 = vadd.f32 %v1991, %v2535
        %v2537 = vpop.f32.mrf.mxu0
        %2538 = vmatprep.mubr.f32.mxu0 %v859
        %2539 = vmatmul.mubr.f32.gmra.mxu0 %v858
        %v2540 = vpop.f32.mrf.mxu0
        %v2541 = vadd.f32 %v1996, %v2540
        %v2542 = vpop.f32.mrf.mxu0
        %2543 = vmatprep.mubr.f32.mxu0 %v865
        %2544 = vmatmul.mubr.f32.gmra.mxu0 %v864
        %v2545 = vpop.f32.mrf.mxu0
        %v2546 = vadd.f32 %v2001, %v2545
        %v2547 = vpop.f32.mrf.mxu0
        %2548 = vmatprep.mubr.f32.mxu0 %v871
        %2549 = vmatmul.mubr.f32.gmra.mxu0 %v870
        %v2550 = vpop.f32.mrf.mxu0
        %v2551 = vadd.f32 %v2006, %v2550
        %v2552 = vpop.f32.mrf.mxu0
        %2553 = vmatprep.mubr.f32.mxu0 %v877
        %2554 = vmatmul.mubr.f32.gmra.mxu0 %v876
        %v2555 = vpop.f32.mrf.mxu0
        %v2556 = vadd.f32 %v2011, %v2555
        %v2557 = vpop.f32.mrf.mxu0
        %2558 = vmatprep.mubr.f32.mxu0 %v883
        %2559 = vmatmul.mubr.f32.gmra.mxu0 %v882
        %v2560 = vpop.f32.mrf.mxu0
        %v2561 = vadd.f32 %v2016, %v2560
        %v2562 = vpop.f32.mrf.mxu0
        %2563 = vmatprep.mubr.f32.mxu0 %v889
        %2564 = vmatmul.mubr.f32.gmra.mxu0 %v888
        %v2565 = vpop.f32.mrf.mxu0
        %v2566 = vadd.f32 %v2021, %v2565
        %v2567 = vpop.f32.mrf.mxu0
        %2568 = vmatprep.mubr.f32.mxu0 %v895
        %2569 = vmatmul.mubr.f32.gmra.mxu0 %v894
        %v2570 = vpop.f32.mrf.mxu0
        %v2571 = vadd.f32 %v2026, %v2570
        %v2572 = vpop.f32.mrf.mxu0
        %2573 = vmatprep.mubr.f32.mxu0 %v901
        %2574 = vmatmul.mubr.f32.gmra.mxu0 %v900
        %v2575 = vpop.f32.mrf.mxu0
        %v2576 = vadd.f32 %v2031, %v2575
        %v2577 = vpop.f32.mrf.mxu0
        %2578 = vmatprep.mubr.f32.mxu0 %v907
        %2579 = vmatmul.mubr.f32.gmra.mxu0 %v906
        %v2580 = vpop.f32.mrf.mxu0
        %v2581 = vadd.f32 %v2036, %v2580
        %v2582 = vpop.f32.mrf.mxu0
        %2583 = vmatprep.mubr.f32.mxu0 %v913
        %2584 = vmatmul.mubr.f32.gmra.mxu0 %v912
        %v2585 = vpop.f32.mrf.mxu0
        %v2586 = vadd.f32 %v2041, %v2585
        %v2587 = vpop.f32.mrf.mxu0
        %2588 = vmatprep.mubr.f32.mxu0 %v919
        %2589 = vmatmul.mubr.f32.gmra.mxu0 %v918
        %v2590 = vpop.f32.mrf.mxu0
        %v2591 = vadd.f32 %v2046, %v2590
        %v2592 = vpop.f32.mrf.mxu0
        %2593 = vmatprep.mubr.f32.mxu0 %v925
        %2594 = vmatmul.mubr.f32.gmra.mxu0 %v924
        %v2595 = vpop.f32.mrf.mxu0
        %v2596 = vadd.f32 %v2051, %v2595
        %v2597 = vpop.f32.mrf.mxu0
        %2598 = vmatprep.mubr.f32.mxu0 %v931
        %2599 = vmatmul.mubr.f32.gmra.mxu0 %v930
        %v2600 = vpop.f32.mrf.mxu0
        %v2601 = vadd.f32 %v2056, %v2600
        %v2602 = vpop.f32.mrf.mxu0
        %2603 = vmatprep.mubr.f32.mxu0 %v937
        %2604 = vmatmul.mubr.f32.gmra.mxu0 %v936
        %v2605 = vpop.f32.mrf.mxu0
        %v2606 = vadd.f32 %v2061, %v2605
        %v2607 = vpop.f32.mrf.mxu0
        %2608 = vmatprep.mubr.f32.mxu0 %v943
        %2609 = vmatmul.mubr.f32.gmra.mxu0 %v942
        %v2610 = vpop.f32.mrf.mxu0
        %v2611 = vadd.f32 %v2066, %v2610
        %v2612 = vpop.f32.mrf.mxu0
        %2613 = vmatprep.mubr.f32.mxu0 %v949
        %2614 = vmatmul.mubr.f32.gmra.mxu0 %v948
        %v2615 = vpop.f32.mrf.mxu0
        %v2616 = vadd.f32 %v2071, %v2615
        %v2617 = vpop.f32.mrf.mxu0
        %2618 = vmatprep.mubr.f32.mxu0 %v955
        %2619 = vmatmul.mubr.f32.gmra.mxu0 %v954
        %v2620 = vpop.f32.mrf.mxu0
        %v2621 = vadd.f32 %v2076, %v2620
        %v2622 = vpop.f32.mrf.mxu0
        %2623 = vdwg.mxu0
        %2624 = vmatprep.subr.mxu0 0.0
        %2625 = vmatpush1.msra.mxu0 %v365
        %2626 = vmatprep.subr.mxu0 0.0
        %2627 = vmatpush1.msra.mxu0 %v364
        %2628 = vmatprep.subr.mxu0 0.0
        %2629 = vmatpush1.msra.mxu0 %v363
        %2630 = vmatprep.subr.mxu0 0.0
        %2631 = vmatpush1.msra.mxu0 %v362
        %2632 = vmatprep.subr.mxu0 0.0
        %2633 = vmatpush1.msra.mxu0 %v361
        %2634 = vmatprep.subr.mxu0 0.0
        %2635 = vmatpush1.msra.mxu0 %v360
        %2636 = vmatprep.subr.mxu0 0.0
        %2637 = vmatpush1.msra.mxu0 %v359
        %2638 = vmatprep.subr.mxu0 0.0
        %2639 = vmatpush1.msra.mxu0 %v358
        %2640 = vmatprep.subr.mxu0 0.0
        %2641 = vmatpush1.msra.mxu0 %v357
        %2642 = vmatprep.subr.mxu0 0.0
        %2643 = vmatpush1.msra.mxu0 %v356
        %2644 = vmatprep.subr.mxu0 0.0
        %2645 = vmatpush1.msra.mxu0 %v355
        %2646 = vmatprep.subr.mxu0 0.0
        %2647 = vmatpush1.msra.mxu0 %v354
        %2648 = vmatprep.subr.mxu0 0.0
        %2649 = vmatpush1.msra.mxu0 %v353
        %2650 = vmatprep.subr.mxu0 0.0
        %2651 = vmatpush1.msra.mxu0 %v352
        %2652 = vmatprep.subr.mxu0 0.0
        %2653 = vmatpush1.msra.mxu0 %v351
        %2654 = vmatprep.subr.mxu0 0.0
        %2655 = vmatpush1.msra.mxu0 %v350
        %2656 = vmatprep.subr.mxu0 0.0
        %2657 = vmatpush2.msra.mxu0 %v381
        %2658 = vmatprep.subr.mxu0 0.0
        %2659 = vmatpush2.msra.mxu0 %v380
        %2660 = vmatprep.subr.mxu0 0.0
        %2661 = vmatpush2.msra.mxu0 %v379
        %2662 = vmatprep.subr.mxu0 0.0
        %2663 = vmatpush2.msra.mxu0 %v378
        %2664 = vmatprep.subr.mxu0 0.0
        %2665 = vmatpush2.msra.mxu0 %v377
        %2666 = vmatprep.subr.mxu0 0.0
        %2667 = vmatpush2.msra.mxu0 %v376
        %2668 = vmatprep.subr.mxu0 0.0
        %2669 = vmatpush2.msra.mxu0 %v375
        %2670 = vmatprep.subr.mxu0 0.0
        %2671 = vmatpush2.msra.mxu0 %v374
        %2672 = vmatprep.subr.mxu0 0.0
        %2673 = vmatpush2.msra.mxu0 %v373
        %2674 = vmatprep.subr.mxu0 0.0
        %2675 = vmatpush2.msra.mxu0 %v372
        %2676 = vmatprep.subr.mxu0 0.0
        %2677 = vmatpush2.msra.mxu0 %v371
        %2678 = vmatprep.subr.mxu0 0.0
        %2679 = vmatpush2.msra.mxu0 %v370
        %2680 = vmatprep.subr.mxu0 0.0
        %2681 = vmatpush2.msra.mxu0 %v369
        %2682 = vmatprep.subr.mxu0 0.0
        %2683 = vmatpush2.msra.mxu0 %v368
        %2684 = vmatprep.subr.mxu0 0.0
        %2685 = vmatpush2.msra.mxu0 %v367
        %2686 = vmatprep.subr.mxu0 0.0
        %2687 = vmatpush2.msra.mxu0 %v366
        %2688 = vmatprep.mubr.f32.mxu0 %v387
        %2689 = vmatmul.mubr.f32.gmra.mxu0 %v386
        %v2690 = vpop.f32.mrf.mxu0
        %v2691 = vadd.f32 %v2146, %v2690
        %v2692 = vpop.f32.mrf.mxu0
        %2693 = vmatprep.mubr.f32.mxu0 %v393
        %2694 = vmatmul.mubr.f32.gmra.mxu0 %v392
        %v2695 = vpop.f32.mrf.mxu0
        %v2696 = vadd.f32 %v2151, %v2695
        %v2697 = vpop.f32.mrf.mxu0
        %2698 = vmatprep.mubr.f32.mxu0 %v399
        %2699 = vmatmul.mubr.f32.gmra.mxu0 %v398
        %v2700 = vpop.f32.mrf.mxu0
        %v2701 = vadd.f32 %v2156, %v2700
        %v2702 = vpop.f32.mrf.mxu0
        %2703 = vmatprep.mubr.f32.mxu0 %v405
        %2704 = vmatmul.mubr.f32.gmra.mxu0 %v404
        %v2705 = vpop.f32.mrf.mxu0
        %v2706 = vadd.f32 %v2161, %v2705
        %v2707 = vpop.f32.mrf.mxu0
        %2708 = vmatprep.mubr.f32.mxu0 %v411
        %2709 = vmatmul.mubr.f32.gmra.mxu0 %v410
        %v2710 = vpop.f32.mrf.mxu0
        %v2711 = vadd.f32 %v2166, %v2710
        %v2712 = vpop.f32.mrf.mxu0
        %2713 = vmatprep.mubr.f32.mxu0 %v417
        %2714 = vmatmul.mubr.f32.gmra.mxu0 %v416
        %v2715 = vpop.f32.mrf.mxu0
        %v2716 = vadd.f32 %v2171, %v2715
        %v2717 = vpop.f32.mrf.mxu0
        %2718 = vmatprep.mubr.f32.mxu0 %v423
        %2719 = vmatmul.mubr.f32.gmra.mxu0 %v422
        %v2720 = vpop.f32.mrf.mxu0
        %v2721 = vadd.f32 %v2176, %v2720
        %v2722 = vpop.f32.mrf.mxu0
        %2723 = vmatprep.mubr.f32.mxu0 %v429
        %2724 = vmatmul.mubr.f32.gmra.mxu0 %v428
        %v2725 = vpop.f32.mrf.mxu0
        %v2726 = vadd.f32 %v2181, %v2725
        %v2727 = vpop.f32.mrf.mxu0
        %2728 = vmatprep.mubr.f32.mxu0 %v435
        %2729 = vmatmul.mubr.f32.gmra.mxu0 %v434
        %v2730 = vpop.f32.mrf.mxu0
        %v2731 = vadd.f32 %v2186, %v2730
        %v2732 = vpop.f32.mrf.mxu0
        %2733 = vmatprep.mubr.f32.mxu0 %v441
        %2734 = vmatmul.mubr.f32.gmra.mxu0 %v440
        %v2735 = vpop.f32.mrf.mxu0
        %v2736 = vadd.f32 %v2191, %v2735
        %v2737 = vpop.f32.mrf.mxu0
        %2738 = vmatprep.mubr.f32.mxu0 %v447
        %2739 = vmatmul.mubr.f32.gmra.mxu0 %v446
        %v2740 = vpop.f32.mrf.mxu0
        %v2741 = vadd.f32 %v2196, %v2740
        %v2742 = vpop.f32.mrf.mxu0
        %2743 = vmatprep.mubr.f32.mxu0 %v453
        %2744 = vmatmul.mubr.f32.gmra.mxu0 %v452
        %v2745 = vpop.f32.mrf.mxu0
        %v2746 = vadd.f32 %v2201, %v2745
        %v2747 = vpop.f32.mrf.mxu0
        %2748 = vmatprep.mubr.f32.mxu0 %v459
        %2749 = vmatmul.mubr.f32.gmra.mxu0 %v458
        %v2750 = vpop.f32.mrf.mxu0
        %v2751 = vadd.f32 %v2206, %v2750
        %v2752 = vpop.f32.mrf.mxu0
        %2753 = vmatprep.mubr.f32.mxu0 %v465
        %2754 = vmatmul.mubr.f32.gmra.mxu0 %v464
        %v2755 = vpop.f32.mrf.mxu0
        %v2756 = vadd.f32 %v2211, %v2755
        %v2757 = vpop.f32.mrf.mxu0
        %2758 = vmatprep.mubr.f32.mxu0 %v471
        %2759 = vmatmul.mubr.f32.gmra.mxu0 %v470
        %v2760 = vpop.f32.mrf.mxu0
        %v2761 = vadd.f32 %v2216, %v2760
        %v2762 = vpop.f32.mrf.mxu0
        %2763 = vmatprep.mubr.f32.mxu0 %v477
        %2764 = vmatmul.mubr.f32.gmra.mxu0 %v476
        %v2765 = vpop.f32.mrf.mxu0
        %v2766 = vadd.f32 %v2221, %v2765
        %v2767 = vpop.f32.mrf.mxu0
        %2768 = vmatprep.mubr.f32.mxu0 %v483
        %2769 = vmatmul.mubr.f32.gmra.mxu0 %v482
        %v2770 = vpop.f32.mrf.mxu0
        %v2771 = vadd.f32 %v2226, %v2770
        %v2772 = vpop.f32.mrf.mxu0
        %2773 = vmatprep.mubr.f32.mxu0 %v489
        %2774 = vmatmul.mubr.f32.gmra.mxu0 %v488
        %v2775 = vpop.f32.mrf.mxu0
        %v2776 = vadd.f32 %v2231, %v2775
        %v2777 = vpop.f32.mrf.mxu0
        %2778 = vmatprep.mubr.f32.mxu0 %v495
        %2779 = vmatmul.mubr.f32.gmra.mxu0 %v494
        %v2780 = vpop.f32.mrf.mxu0
        %v2781 = vadd.f32 %v2236, %v2780
        %v2782 = vpop.f32.mrf.mxu0
        %2783 = vmatprep.mubr.f32.mxu0 %v501
        %2784 = vmatmul.mubr.f32.gmra.mxu0 %v500
        %v2785 = vpop.f32.mrf.mxu0
        %v2786 = vadd.f32 %v2241, %v2785
        %v2787 = vpop.f32.mrf.mxu0
        %2788 = vmatprep.mubr.f32.mxu0 %v507
        %2789 = vmatmul.mubr.f32.gmra.mxu0 %v506
        %v2790 = vpop.f32.mrf.mxu0
        %v2791 = vadd.f32 %v2246, %v2790
        %v2792 = vpop.f32.mrf.mxu0
        %2793 = vmatprep.mubr.f32.mxu0 %v513
        %2794 = vmatmul.mubr.f32.gmra.mxu0 %v512
        %v2795 = vpop.f32.mrf.mxu0
        %v2796 = vadd.f32 %v2251, %v2795
        %v2797 = vpop.f32.mrf.mxu0
        %2798 = vmatprep.mubr.f32.mxu0 %v519
        %2799 = vmatmul.mubr.f32.gmra.mxu0 %v518
        %v2800 = vpop.f32.mrf.mxu0
        %v2801 = vadd.f32 %v2256, %v2800
        %v2802 = vpop.f32.mrf.mxu0
        %2803 = vmatprep.mubr.f32.mxu0 %v525
        %2804 = vmatmul.mubr.f32.gmra.mxu0 %v524
        %v2805 = vpop.f32.mrf.mxu0
        %v2806 = vadd.f32 %v2261, %v2805
        %v2807 = vpop.f32.mrf.mxu0
        %2808 = vmatprep.mubr.f32.mxu0 %v531
        %2809 = vmatmul.mubr.f32.gmra.mxu0 %v530
        %v2810 = vpop.f32.mrf.mxu0
        %v2811 = vadd.f32 %v2266, %v2810
        %v2812 = vpop.f32.mrf.mxu0
        %2813 = vmatprep.mubr.f32.mxu0 %v537
        %2814 = vmatmul.mubr.f32.gmra.mxu0 %v536
        %v2815 = vpop.f32.mrf.mxu0
        %v2816 = vadd.f32 %v2271, %v2815
        %v2817 = vpop.f32.mrf.mxu0
        %2818 = vmatprep.mubr.f32.mxu0 %v543
        %2819 = vmatmul.mubr.f32.gmra.mxu0 %v542
        %v2820 = vpop.f32.mrf.mxu0
        %v2821 = vadd.f32 %v2276, %v2820
        %v2822 = vpop.f32.mrf.mxu0
        %2823 = vmatprep.mubr.f32.mxu0 %v549
        %2824 = vmatmul.mubr.f32.gmra.mxu0 %v548
        %v2825 = vpop.f32.mrf.mxu0
        %v2826 = vadd.f32 %v2281, %v2825
        %v2827 = vpop.f32.mrf.mxu0
        %2828 = vmatprep.mubr.f32.mxu0 %v555
        %2829 = vmatmul.mubr.f32.gmra.mxu0 %v554
        %v2830 = vpop.f32.mrf.mxu0
        %v2831 = vadd.f32 %v2286, %v2830
        %v2832 = vpop.f32.mrf.mxu0
        %2833 = vmatprep.mubr.f32.mxu0 %v561
        %2834 = vmatmul.mubr.f32.gmra.mxu0 %v560
        %v2835 = vpop.f32.mrf.mxu0
        %v2836 = vadd.f32 %v2291, %v2835
        %v2837 = vpop.f32.mrf.mxu0
        %2838 = vmatprep.mubr.f32.mxu0 %v567
        %2839 = vmatmul.mubr.f32.gmra.mxu0 %v566
        %v2840 = vpop.f32.mrf.mxu0
        %v2841 = vadd.f32 %v2296, %v2840
        %v2842 = vpop.f32.mrf.mxu0
        %2843 = vmatprep.mubr.f32.mxu0 %v573
        %2844 = vmatmul.mubr.f32.gmra.mxu0 %v572
        %v2845 = vpop.f32.mrf.mxu0
        %v2846 = vadd.f32 %v2301, %v2845
        %v2847 = vpop.f32.mrf.mxu0
        %2848 = vmatprep.mubr.f32.mxu0 %v579
        %2849 = vmatmul.mubr.f32.gmra.mxu0 %v578
        %v2850 = vpop.f32.mrf.mxu0
        %v2851 = vadd.f32 %v2306, %v2850
        %v2852 = vpop.f32.mrf.mxu0
        %2853 = vmatprep.mubr.f32.mxu0 %v585
        %2854 = vmatmul.mubr.f32.gmra.mxu0 %v584
        %v2855 = vpop.f32.mrf.mxu0
        %v2856 = vadd.f32 %v2311, %v2855
        %v2857 = vpop.f32.mrf.mxu0
        %2858 = vmatprep.mubr.f32.mxu0 %v591
        %2859 = vmatmul.mubr.f32.gmra.mxu0 %v590
        %v2860 = vpop.f32.mrf.mxu0
        %v2861 = vadd.f32 %v2316, %v2860
        %v2862 = vpop.f32.mrf.mxu0
        %2863 = vmatprep.mubr.f32.mxu0 %v597
        %2864 = vmatmul.mubr.f32.gmra.mxu0 %v596
        %v2865 = vpop.f32.mrf.mxu0
        %v2866 = vadd.f32 %v2321, %v2865
        %v2867 = vpop.f32.mrf.mxu0
        %2868 = vmatprep.mubr.f32.mxu0 %v603
        %2869 = vmatmul.mubr.f32.gmra.mxu0 %v602
        %v2870 = vpop.f32.mrf.mxu0
        %v2871 = vadd.f32 %v2326, %v2870
        %v2872 = vpop.f32.mrf.mxu0
        %2873 = vmatprep.mubr.f32.mxu0 %v609
        %2874 = vmatmul.mubr.f32.gmra.mxu0 %v608
        %v2875 = vpop.f32.mrf.mxu0
        %v2876 = vadd.f32 %v2331, %v2875
        %v2877 = vpop.f32.mrf.mxu0
        %2878 = vmatprep.mubr.f32.mxu0 %v615
        %2879 = vmatmul.mubr.f32.gmra.mxu0 %v614
        %v2880 = vpop.f32.mrf.mxu0
        %v2881 = vadd.f32 %v2336, %v2880
        %v2882 = vpop.f32.mrf.mxu0
        %2883 = vmatprep.mubr.f32.mxu0 %v621
        %2884 = vmatmul.mubr.f32.gmra.mxu0 %v620
        %v2885 = vpop.f32.mrf.mxu0
        %v2886 = vadd.f32 %v2341, %v2885
        %v2887 = vpop.f32.mrf.mxu0
        %2888 = vmatprep.mubr.f32.mxu0 %v627
        %2889 = vmatmul.mubr.f32.gmra.mxu0 %v626
        %v2890 = vpop.f32.mrf.mxu0
        %v2891 = vadd.f32 %v2346, %v2890
        %v2892 = vpop.f32.mrf.mxu0
        %2893 = vmatprep.mubr.f32.mxu0 %v633
        %2894 = vmatmul.mubr.f32.gmra.mxu0 %v632
        %v2895 = vpop.f32.mrf.mxu0
        %v2896 = vadd.f32 %v2351, %v2895
        %v2897 = vpop.f32.mrf.mxu0
        %2898 = vmatprep.mubr.f32.mxu0 %v639
        %2899 = vmatmul.mubr.f32.gmra.mxu0 %v638
        %v2900 = vpop.f32.mrf.mxu0
        %v2901 = vadd.f32 %v2356, %v2900
        %v2902 = vpop.f32.mrf.mxu0
        %2903 = vmatprep.mubr.f32.mxu0 %v645
        %2904 = vmatmul.mubr.f32.gmra.mxu0 %v644
        %v2905 = vpop.f32.mrf.mxu0
        %v2906 = vadd.f32 %v2361, %v2905
        %v2907 = vpop.f32.mrf.mxu0
        %2908 = vmatprep.mubr.f32.mxu0 %v651
        %2909 = vmatmul.mubr.f32.gmra.mxu0 %v650
        %v2910 = vpop.f32.mrf.mxu0
        %v2911 = vadd.f32 %v2366, %v2910
        %v2912 = vpop.f32.mrf.mxu0
        %2913 = vmatprep.mubr.f32.mxu0 %v657
        %2914 = vmatmul.mubr.f32.gmra.mxu0 %v656
        %v2915 = vpop.f32.mrf.mxu0
        %v2916 = vadd.f32 %v2371, %v2915
        %v2917 = vpop.f32.mrf.mxu0
        %2918 = vmatprep.mubr.f32.mxu0 %v663
        %2919 = vmatmul.mubr.f32.gmra.mxu0 %v662
        %v2920 = vpop.f32.mrf.mxu0
        %v2921 = vadd.f32 %v2376, %v2920
        %v2922 = vpop.f32.mrf.mxu0
        %2923 = vmatprep.mubr.f32.mxu0 %v669
        %2924 = vmatmul.mubr.f32.gmra.mxu0 %v668
        %v2925 = vpop.f32.mrf.mxu0
        %v2926 = vadd.f32 %v2381, %v2925
        %v2927 = vpop.f32.mrf.mxu0
        %2928 = vmatprep.mubr.f32.mxu0 %v675
        %2929 = vmatmul.mubr.f32.gmra.mxu0 %v674
        %v2930 = vpop.f32.mrf.mxu0
        %v2931 = vadd.f32 %v2386, %v2930
        %v2932 = vpop.f32.mrf.mxu0
        %2933 = vmatprep.mubr.f32.mxu0 %v681
        %2934 = vmatmul.mubr.f32.gmra.mxu0 %v680
        %v2935 = vpop.f32.mrf.mxu0
        %v2936 = vadd.f32 %v2391, %v2935
        %v2937 = vpop.f32.mrf.mxu0
        %2938 = vmatprep.mubr.f32.mxu0 %v687
        %2939 = vmatmul.mubr.f32.gmra.mxu0 %v686
        %v2940 = vpop.f32.mrf.mxu0
        %v2941 = vadd.f32 %v2396, %v2940
        %v2942 = vpop.f32.mrf.mxu0
        %2943 = vmatprep.mubr.f32.mxu0 %v693
        %2944 = vmatmul.mubr.f32.gmra.mxu0 %v692
        %v2945 = vpop.f32.mrf.mxu0
        %v2946 = vadd.f32 %v2401, %v2945
        %v2947 = vpop.f32.mrf.mxu0
        %2948 = vmatprep.mubr.f32.mxu0 %v699
        %2949 = vmatmul.mubr.f32.gmra.mxu0 %v698
        %v2950 = vpop.f32.mrf.mxu0
        %v2951 = vadd.f32 %v2406, %v2950
        %v2952 = vpop.f32.mrf.mxu0
        %2953 = vmatprep.mubr.f32.mxu0 %v705
        %2954 = vmatmul.mubr.f32.gmra.mxu0 %v704
        %v2955 = vpop.f32.mrf.mxu0
        %v2956 = vadd.f32 %v2411, %v2955
        %v2957 = vpop.f32.mrf.mxu0
        %2958 = vmatprep.mubr.f32.mxu0 %v711
        %2959 = vmatmul.mubr.f32.gmra.mxu0 %v710
        %v2960 = vpop.f32.mrf.mxu0
        %v2961 = vadd.f32 %v2416, %v2960
        %v2962 = vpop.f32.mrf.mxu0
        %2963 = vmatprep.mubr.f32.mxu0 %v717
        %2964 = vmatmul.mubr.f32.gmra.mxu0 %v716
        %v2965 = vpop.f32.mrf.mxu0
        %v2966 = vadd.f32 %v2421, %v2965
        %v2967 = vpop.f32.mrf.mxu0
        %2968 = vmatprep.mubr.f32.mxu0 %v723
        %2969 = vmatmul.mubr.f32.gmra.mxu0 %v722
        %v2970 = vpop.f32.mrf.mxu0
        %v2971 = vadd.f32 %v2426, %v2970
        %v2972 = vpop.f32.mrf.mxu0
        %2973 = vmatprep.mubr.f32.mxu0 %v729
        %2974 = vmatmul.mubr.f32.gmra.mxu0 %v728
        %v2975 = vpop.f32.mrf.mxu0
        %v2976 = vadd.f32 %v2431, %v2975
        %v2977 = vpop.f32.mrf.mxu0
        %2978 = vmatprep.mubr.f32.mxu0 %v735
        %2979 = vmatmul.mubr.f32.gmra.mxu0 %v734
        %v2980 = vpop.f32.mrf.mxu0
        %v2981 = vadd.f32 %v2436, %v2980
        %v2982 = vpop.f32.mrf.mxu0
        %2983 = vmatprep.mubr.f32.mxu0 %v741
        %2984 = vmatmul.mubr.f32.gmra.mxu0 %v740
        %v2985 = vpop.f32.mrf.mxu0
        %v2986 = vadd.f32 %v2441, %v2985
        %v2987 = vpop.f32.mrf.mxu0
        %2988 = vmatprep.mubr.f32.mxu0 %v747
        %2989 = vmatmul.mubr.f32.gmra.mxu0 %v746
        %v2990 = vpop.f32.mrf.mxu0
        %v2991 = vadd.f32 %v2446, %v2990
        %v2992 = vpop.f32.mrf.mxu0
        %2993 = vmatprep.mubr.f32.mxu0 %v753
        %2994 = vmatmul.mubr.f32.gmra.mxu0 %v752
        %v2995 = vpop.f32.mrf.mxu0
        %v2996 = vadd.f32 %v2451, %v2995
        %v2997 = vpop.f32.mrf.mxu0
        %2998 = vmatprep.mubr.f32.mxu0 %v759
        %2999 = vmatmul.mubr.f32.gmra.mxu0 %v758
        %v3000 = vpop.f32.mrf.mxu0
        %v3001 = vadd.f32 %v2456, %v3000
        %v3002 = vpop.f32.mrf.mxu0
        %3003 = vmatprep.mubr.f32.mxu0 %v765
        %3004 = vmatmul.mubr.f32.gmra.mxu0 %v764
        %v3005 = vpop.f32.mrf.mxu0
        %v3006 = vadd.f32 %v2461, %v3005
        %v3007 = vpop.f32.mrf.mxu0
        %3008 = vmatprep.mubr.f32.mxu0 %v771
        %3009 = vmatmul.mubr.f32.gmra.mxu0 %v770
        %v3010 = vpop.f32.mrf.mxu0
        %v3011 = vadd.f32 %v2466, %v3010
        %v3012 = vpop.f32.mrf.mxu0
        %3013 = vmatprep.mubr.f32.mxu0 %v777
        %3014 = vmatmul.mubr.f32.gmra.mxu0 %v776
        %v3015 = vpop.f32.mrf.mxu0
        %v3016 = vadd.f32 %v2471, %v3015
        %v3017 = vpop.f32.mrf.mxu0
        %3018 = vmatprep.mubr.f32.mxu0 %v783
        %3019 = vmatmul.mubr.f32.gmra.mxu0 %v782
        %v3020 = vpop.f32.mrf.mxu0
        %v3021 = vadd.f32 %v2476, %v3020
        %v3022 = vpop.f32.mrf.mxu0
        %3023 = vmatprep.mubr.f32.mxu0 %v789
        %3024 = vmatmul.mubr.f32.gmra.mxu0 %v788
        %v3025 = vpop.f32.mrf.mxu0
        %v3026 = vadd.f32 %v2481, %v3025
        %v3027 = vpop.f32.mrf.mxu0
        %3028 = vmatprep.mubr.f32.mxu0 %v795
        %3029 = vmatmul.mubr.f32.gmra.mxu0 %v794
        %v3030 = vpop.f32.mrf.mxu0
        %v3031 = vadd.f32 %v2486, %v3030
        %v3032 = vpop.f32.mrf.mxu0
        %3033 = vmatprep.mubr.f32.mxu0 %v801
        %3034 = vmatmul.mubr.f32.gmra.mxu0 %v800
        %v3035 = vpop.f32.mrf.mxu0
        %v3036 = vadd.f32 %v2491, %v3035
        %v3037 = vpop.f32.mrf.mxu0
        %3038 = vmatprep.mubr.f32.mxu0 %v807
        %3039 = vmatmul.mubr.f32.gmra.mxu0 %v806
        %v3040 = vpop.f32.mrf.mxu0
        %v3041 = vadd.f32 %v2496, %v3040
        %v3042 = vpop.f32.mrf.mxu0
        %3043 = vmatprep.mubr.f32.mxu0 %v813
        %3044 = vmatmul.mubr.f32.gmra.mxu0 %v812
        %v3045 = vpop.f32.mrf.mxu0
        %v3046 = vadd.f32 %v2501, %v3045
        %v3047 = vpop.f32.mrf.mxu0
        %3048 = vmatprep.mubr.f32.mxu0 %v819
        %3049 = vmatmul.mubr.f32.gmra.mxu0 %v818
        %v3050 = vpop.f32.mrf.mxu0
        %v3051 = vadd.f32 %v2506, %v3050
        %v3052 = vpop.f32.mrf.mxu0
        %3053 = vmatprep.mubr.f32.mxu0 %v825
        %3054 = vmatmul.mubr.f32.gmra.mxu0 %v824
        %v3055 = vpop.f32.mrf.mxu0
        %v3056 = vadd.f32 %v2511, %v3055
        %v3057 = vpop.f32.mrf.mxu0
        %3058 = vmatprep.mubr.f32.mxu0 %v831
        %3059 = vmatmul.mubr.f32.gmra.mxu0 %v830
        %v3060 = vpop.f32.mrf.mxu0
        %v3061 = vadd.f32 %v2516, %v3060
        %v3062 = vpop.f32.mrf.mxu0
        %3063 = vmatprep.mubr.f32.mxu0 %v837
        %3064 = vmatmul.mubr.f32.gmra.mxu0 %v836
        %v3065 = vpop.f32.mrf.mxu0
        %v3066 = vadd.f32 %v2521, %v3065
        %v3067 = vpop.f32.mrf.mxu0
        %3068 = vmatprep.mubr.f32.mxu0 %v843
        %3069 = vmatmul.mubr.f32.gmra.mxu0 %v842
        %v3070 = vpop.f32.mrf.mxu0
        %v3071 = vadd.f32 %v2526, %v3070
        %v3072 = vpop.f32.mrf.mxu0
        %3073 = vmatprep.mubr.f32.mxu0 %v849
        %3074 = vmatmul.mubr.f32.gmra.mxu0 %v848
        %v3075 = vpop.f32.mrf.mxu0
        %v3076 = vadd.f32 %v2531, %v3075
        %v3077 = vpop.f32.mrf.mxu0
        %3078 = vmatprep.mubr.f32.mxu0 %v855
        %3079 = vmatmul.mubr.f32.gmra.mxu0 %v854
        %v3080 = vpop.f32.mrf.mxu0
        %v3081 = vadd.f32 %v2536, %v3080
        %v3082 = vpop.f32.mrf.mxu0
        %3083 = vmatprep.mubr.f32.mxu0 %v861
        %3084 = vmatmul.mubr.f32.gmra.mxu0 %v860
        %v3085 = vpop.f32.mrf.mxu0
        %v3086 = vadd.f32 %v2541, %v3085
        %v3087 = vpop.f32.mrf.mxu0
        %3088 = vmatprep.mubr.f32.mxu0 %v867
        %3089 = vmatmul.mubr.f32.gmra.mxu0 %v866
        %v3090 = vpop.f32.mrf.mxu0
        %v3091 = vadd.f32 %v2546, %v3090
        %v3092 = vpop.f32.mrf.mxu0
        %3093 = vmatprep.mubr.f32.mxu0 %v873
        %3094 = vmatmul.mubr.f32.gmra.mxu0 %v872
        %v3095 = vpop.f32.mrf.mxu0
        %v3096 = vadd.f32 %v2551, %v3095
        %v3097 = vpop.f32.mrf.mxu0
        %3098 = vmatprep.mubr.f32.mxu0 %v879
        %3099 = vmatmul.mubr.f32.gmra.mxu0 %v878
        %v3100 = vpop.f32.mrf.mxu0
        %v3101 = vadd.f32 %v2556, %v3100
        %v3102 = vpop.f32.mrf.mxu0
        %3103 = vmatprep.mubr.f32.mxu0 %v885
        %3104 = vmatmul.mubr.f32.gmra.mxu0 %v884
        %v3105 = vpop.f32.mrf.mxu0
        %v3106 = vadd.f32 %v2561, %v3105
        %v3107 = vpop.f32.mrf.mxu0
        %3108 = vmatprep.mubr.f32.mxu0 %v891
        %3109 = vmatmul.mubr.f32.gmra.mxu0 %v890
        %v3110 = vpop.f32.mrf.mxu0
        %v3111 = vadd.f32 %v2566, %v3110
        %v3112 = vpop.f32.mrf.mxu0
        %3113 = vmatprep.mubr.f32.mxu0 %v897
        %3114 = vmatmul.mubr.f32.gmra.mxu0 %v896
        %v3115 = vpop.f32.mrf.mxu0
        %v3116 = vadd.f32 %v2571, %v3115
        %v3117 = vpop.f32.mrf.mxu0
        %3118 = vmatprep.mubr.f32.mxu0 %v903
        %3119 = vmatmul.mubr.f32.gmra.mxu0 %v902
        %v3120 = vpop.f32.mrf.mxu0
        %v3121 = vadd.f32 %v2576, %v3120
        %v3122 = vpop.f32.mrf.mxu0
        %3123 = vmatprep.mubr.f32.mxu0 %v909
        %3124 = vmatmul.mubr.f32.gmra.mxu0 %v908
        %v3125 = vpop.f32.mrf.mxu0
        %v3126 = vadd.f32 %v2581, %v3125
        %v3127 = vpop.f32.mrf.mxu0
        %3128 = vmatprep.mubr.f32.mxu0 %v915
        %3129 = vmatmul.mubr.f32.gmra.mxu0 %v914
        %v3130 = vpop.f32.mrf.mxu0
        %v3131 = vadd.f32 %v2586, %v3130
        %v3132 = vpop.f32.mrf.mxu0
        %3133 = vmatprep.mubr.f32.mxu0 %v921
        %3134 = vmatmul.mubr.f32.gmra.mxu0 %v920
        %v3135 = vpop.f32.mrf.mxu0
        %v3136 = vadd.f32 %v2591, %v3135
        %v3137 = vpop.f32.mrf.mxu0
        %3138 = vmatprep.mubr.f32.mxu0 %v927
        %3139 = vmatmul.mubr.f32.gmra.mxu0 %v926
        %v3140 = vpop.f32.mrf.mxu0
        %v3141 = vadd.f32 %v2596, %v3140
        %v3142 = vpop.f32.mrf.mxu0
        %3143 = vmatprep.mubr.f32.mxu0 %v933
        %3144 = vmatmul.mubr.f32.gmra.mxu0 %v932
        %v3145 = vpop.f32.mrf.mxu0
        %v3146 = vadd.f32 %v2601, %v3145
        %v3147 = vpop.f32.mrf.mxu0
        %3148 = vmatprep.mubr.f32.mxu0 %v939
        %3149 = vmatmul.mubr.f32.gmra.mxu0 %v938
        %v3150 = vpop.f32.mrf.mxu0
        %v3151 = vadd.f32 %v2606, %v3150
        %v3152 = vpop.f32.mrf.mxu0
        %3153 = vmatprep.mubr.f32.mxu0 %v945
        %3154 = vmatmul.mubr.f32.gmra.mxu0 %v944
        %v3155 = vpop.f32.mrf.mxu0
        %v3156 = vadd.f32 %v2611, %v3155
        %v3157 = vpop.f32.mrf.mxu0
        %3158 = vmatprep.mubr.f32.mxu0 %v951
        %3159 = vmatmul.mubr.f32.gmra.mxu0 %v950
        %v3160 = vpop.f32.mrf.mxu0
        %v3161 = vadd.f32 %v2616, %v3160
        %v3162 = vpop.f32.mrf.mxu0
        %3163 = vmatprep.mubr.f32.mxu0 %v957
        %3164 = vmatmul.mubr.f32.gmra.mxu0 %v956
        %v3165 = vpop.f32.mrf.mxu0
        %v3166 = vadd.f32 %v2621, %v3165
        %v3167 = vpop.f32.mrf.mxu0
        %3168 = vdwg.mxu0
        %v3169 = vmax.f32 %v2691, 0.0
        %v3170 = vmax.f32 %v2696, 0.0
        %v3171 = vmax.f32 %v2701, 0.0
        %v3172 = vmax.f32 %v2706, 0.0
        %v3173 = vmax.f32 %v2711, 0.0
        %v3174 = vmax.f32 %v2716, 0.0
        %v3175 = vmax.f32 %v2721, 0.0
        %v3176 = vmax.f32 %v2726, 0.0
        %v3177 = vmax.f32 %v2731, 0.0
        %v3178 = vmax.f32 %v2736, 0.0
        %v3179 = vmax.f32 %v2741, 0.0
        %v3180 = vmax.f32 %v2746, 0.0
        %v3181 = vmax.f32 %v2751, 0.0
        %v3182 = vmax.f32 %v2756, 0.0
        %v3183 = vmax.f32 %v2761, 0.0
        %v3184 = vmax.f32 %v2766, 0.0
        %v3185 = vmax.f32 %v2771, 0.0
        %v3186 = vmax.f32 %v2776, 0.0
        %v3187 = vmax.f32 %v2781, 0.0
        %v3188 = vmax.f32 %v2786, 0.0
        %v3189 = vmax.f32 %v2791, 0.0
        %v3190 = vmax.f32 %v2796, 0.0
        %v3191 = vmax.f32 %v2801, 0.0
        %v3192 = vmax.f32 %v2806, 0.0
        %v3193 = vmax.f32 %v2811, 0.0
        %v3194 = vmax.f32 %v2816, 0.0
        %v3195 = vmax.f32 %v2821, 0.0
        %v3196 = vmax.f32 %v2826, 0.0
        %v3197 = vmax.f32 %v2831, 0.0
        %v3198 = vmax.f32 %v2836, 0.0
        %v3199 = vmax.f32 %v2841, 0.0
        %v3200 = vmax.f32 %v2846, 0.0
        %v3201 = vmax.f32 %v2851, 0.0
        %v3202 = vmax.f32 %v2856, 0.0
        %v3203 = vmax.f32 %v2861, 0.0
        %v3204 = vmax.f32 %v2866, 0.0
        %v3205 = vmax.f32 %v2871, 0.0
        %v3206 = vmax.f32 %v2876, 0.0
        %v3207 = vmax.f32 %v2881, 0.0
        %v3208 = vmax.f32 %v2886, 0.0
        %v3209 = vmax.f32 %v2891, 0.0
        %v3210 = vmax.f32 %v2896, 0.0
        %v3211 = vmax.f32 %v2901, 0.0
        %v3212 = vmax.f32 %v2906, 0.0
        %v3213 = vmax.f32 %v2911, 0.0
        %v3214 = vmax.f32 %v2916, 0.0
        %v3215 = vmax.f32 %v2921, 0.0
        %v3216 = vmax.f32 %v2926, 0.0
        %v3217 = vmax.f32 %v2931, 0.0
        %v3218 = vmax.f32 %v2936, 0.0
        %v3219 = vmax.f32 %v2941, 0.0
        %v3220 = vmax.f32 %v2946, 0.0
        %v3221 = vmax.f32 %v2951, 0.0
        %v3222 = vmax.f32 %v2956, 0.0
        %v3223 = vmax.f32 %v2961, 0.0
        %v3224 = vmax.f32 %v2966, 0.0
        %v3225 = vmax.f32 %v2971, 0.0
        %v3226 = vmax.f32 %v2976, 0.0
        %v3227 = vmax.f32 %v2981, 0.0
        %v3228 = vmax.f32 %v2986, 0.0
        %v3229 = vmax.f32 %v2991, 0.0
        %v3230 = vmax.f32 %v2996, 0.0
        %v3231 = vmax.f32 %v3001, 0.0
        %v3232 = vmax.f32 %v3006, 0.0
        %v3233 = vmax.f32 %v3011, 0.0
        %v3234 = vmax.f32 %v3016, 0.0
        %v3235 = vmax.f32 %v3021, 0.0
        %v3236 = vmax.f32 %v3026, 0.0
        %v3237 = vmax.f32 %v3031, 0.0
        %v3238 = vmax.f32 %v3036, 0.0
        %v3239 = vmax.f32 %v3041, 0.0
        %v3240 = vmax.f32 %v3046, 0.0
        %v3241 = vmax.f32 %v3051, 0.0
        %v3242 = vmax.f32 %v3056, 0.0
        %v3243 = vmax.f32 %v3061, 0.0
        %v3244 = vmax.f32 %v3066, 0.0
        %v3245 = vmax.f32 %v3071, 0.0
        %v3246 = vmax.f32 %v3076, 0.0
        %v3247 = vmax.f32 %v3081, 0.0
        %v3248 = vmax.f32 %v3086, 0.0
        %v3249 = vmax.f32 %v3091, 0.0
        %v3250 = vmax.f32 %v3096, 0.0
        %v3251 = vmax.f32 %v3101, 0.0
        %v3252 = vmax.f32 %v3106, 0.0
        %v3253 = vmax.f32 %v3111, 0.0
        %v3254 = vmax.f32 %v3116, 0.0
        %v3255 = vmax.f32 %v3121, 0.0
        %v3256 = vmax.f32 %v3126, 0.0
        %v3257 = vmax.f32 %v3131, 0.0
        %v3258 = vmax.f32 %v3136, 0.0
        %v3259 = vmax.f32 %v3141, 0.0
        %v3260 = vmax.f32 %v3146, 0.0
        %v3261 = vmax.f32 %v3151, 0.0
        %v3262 = vmax.f32 %v3156, 0.0
        %v3263 = vmax.f32 %v3161, 0.0
        %v3264 = vmax.f32 %v3166, 0.0
        %v3265 = vld [vmem:[#allocation4] sm:$0xff]
        %v3266 = vld [vmem:[#allocation4 + $0x8] sm:$0xff]
        %v3267 = vld [vmem:[#allocation4 + $0x10] sm:$0xff]
        %v3268 = vld [vmem:[#allocation4 + $0x18] sm:$0xff]
        %v3269 = vld [vmem:[#allocation4 + $0x20] sm:$0xff]
        %v3270 = vld [vmem:[#allocation4 + $0x28] sm:$0xff]
        %v3271 = vld [vmem:[#allocation4 + $0x30] sm:$0xff]
        %v3272 = vld [vmem:[#allocation4 + $0x38] sm:$0xff]
        %v3273 = vld [vmem:[#allocation4 + $0x40] sm:$0xff]
        %v3274 = vld [vmem:[#allocation4 + $0x48] sm:$0xff]
        %v3275 = vld [vmem:[#allocation4 + $0x50] sm:$0xff]
        %v3276 = vld [vmem:[#allocation4 + $0x58] sm:$0xff]
        %v3277 = vld [vmem:[#allocation4 + $0x60] sm:$0xff]
        %v3278 = vld [vmem:[#allocation4 + $0x68] sm:$0xff]
        %v3279 = vld [vmem:[#allocation4 + $0x70] sm:$0xff]
        %v3280 = vld [vmem:[#allocation4 + $0x78] sm:$0xff]
        %v3281 = vld [vmem:[#allocation4 + $0x80] sm:$0xff]
        %v3282 = vld [vmem:[#allocation4 + $0x88] sm:$0xff]
        %v3283 = vld [vmem:[#allocation4 + $0x90] sm:$0xff]
        %v3284 = vld [vmem:[#allocation4 + $0x98] sm:$0xff]
        %v3285 = vld [vmem:[#allocation4 + $0xa0] sm:$0xff]
        %v3286 = vld [vmem:[#allocation4 + $0xa8] sm:$0xff]
        %v3287 = vld [vmem:[#allocation4 + $0xb0] sm:$0xff]
        %v3288 = vld [vmem:[#allocation4 + $0xb8] sm:$0xff]
        %v3289 = vld [vmem:[#allocation4 + $0xc0] sm:$0xff]
        %v3290 = vld [vmem:[#allocation4 + $0xc8] sm:$0xff]
        %v3291 = vld [vmem:[#allocation4 + $0xd0] sm:$0xff]
        %v3292 = vld [vmem:[#allocation4 + $0xd8] sm:$0xff]
        %v3293 = vld [vmem:[#allocation4 + $0xe0] sm:$0xff]
        %v3294 = vld [vmem:[#allocation4 + $0xe8] sm:$0xff]
        %v3295 = vld [vmem:[#allocation4 + $0xf0] sm:$0xff]
        %v3296 = vld [vmem:[#allocation4 + $0xf8] sm:$0xff]
        %v3297 = vld [vmem:[#allocation4 + $0x100] sm:$0xff]
        %v3298 = vld [vmem:[#allocation4 + $0x108] sm:$0xff]
        %v3299 = vld [vmem:[#allocation4 + $0x110] sm:$0xff]
        %v3300 = vld [vmem:[#allocation4 + $0x118] sm:$0xff]
        %v3301 = vld [vmem:[#allocation4 + $0x120] sm:$0xff]
        %v3302 = vld [vmem:[#allocation4 + $0x128] sm:$0xff]
        %v3303 = vld [vmem:[#allocation4 + $0x130] sm:$0xff]
        %v3304 = vld [vmem:[#allocation4 + $0x138] sm:$0xff]
        %v3305 = vld [vmem:[#allocation4 + $0x140] sm:$0xff]
        %v3306 = vld [vmem:[#allocation4 + $0x148] sm:$0xff]
        %v3307 = vld [vmem:[#allocation4 + $0x150] sm:$0xff]
        %v3308 = vld [vmem:[#allocation4 + $0x158] sm:$0xff]
        %v3309 = vld [vmem:[#allocation4 + $0x160] sm:$0xff]
        %v3310 = vld [vmem:[#allocation4 + $0x168] sm:$0xff]
        %v3311 = vld [vmem:[#allocation4 + $0x170] sm:$0xff]
        %v3312 = vld [vmem:[#allocation4 + $0x178] sm:$0xff]
        %v3313 = vld [vmem:[#allocation4 + $0x180] sm:$0xff]
        %v3314 = vld [vmem:[#allocation4 + $0x188] sm:$0xff]
        %v3315 = vld [vmem:[#allocation4 + $0x190] sm:$0xff]
        %v3316 = vld [vmem:[#allocation4 + $0x198] sm:$0xff]
        %v3317 = vld [vmem:[#allocation4 + $0x1a0] sm:$0xff]
        %v3318 = vld [vmem:[#allocation4 + $0x1a8] sm:$0xff]
        %v3319 = vld [vmem:[#allocation4 + $0x1b0] sm:$0xff]
        %v3320 = vld [vmem:[#allocation4 + $0x1b8] sm:$0xff]
        %v3321 = vld [vmem:[#allocation4 + $0x1c0] sm:$0xff]
        %v3322 = vld [vmem:[#allocation4 + $0x1c8] sm:$0xff]
        %v3323 = vld [vmem:[#allocation4 + $0x1d0] sm:$0xff]
        %v3324 = vld [vmem:[#allocation4 + $0x1d8] sm:$0xff]
        %v3325 = vld [vmem:[#allocation4 + $0x1e0] sm:$0xff]
        %v3326 = vld [vmem:[#allocation4 + $0x1e8] sm:$0xff]
        %v3327 = vld [vmem:[#allocation4 + $0x1f0] sm:$0xff]
        %v3328 = vld [vmem:[#allocation4 + $0x1f8] sm:$0xff]
        %v3329 = vld [vmem:[#allocation4 + $0x200] sm:$0xff]
        %v3330 = vld [vmem:[#allocation4 + $0x208] sm:$0xff]
        %v3331 = vld [vmem:[#allocation4 + $0x210] sm:$0xff]
        %v3332 = vld [vmem:[#allocation4 + $0x218] sm:$0xff]
        %v3333 = vld [vmem:[#allocation4 + $0x220] sm:$0xff]
        %v3334 = vld [vmem:[#allocation4 + $0x228] sm:$0xff]
        %v3335 = vld [vmem:[#allocation4 + $0x230] sm:$0xff]
        %v3336 = vld [vmem:[#allocation4 + $0x238] sm:$0xff]
        %v3337 = vld [vmem:[#allocation4 + $0x240] sm:$0xff]
        %v3338 = vld [vmem:[#allocation4 + $0x248] sm:$0xff]
        %v3339 = vld [vmem:[#allocation4 + $0x250] sm:$0xff]
        %v3340 = vld [vmem:[#allocation4 + $0x258] sm:$0xff]
        %v3341 = vld [vmem:[#allocation4 + $0x260] sm:$0xff]
        %v3342 = vld [vmem:[#allocation4 + $0x268] sm:$0xff]
        %v3343 = vld [vmem:[#allocation4 + $0x270] sm:$0xff]
        %v3344 = vld [vmem:[#allocation4 + $0x278] sm:$0xff]
        %v3345 = vld [vmem:[#allocation4 + $0x280] sm:$0xff]
        %v3346 = vld [vmem:[#allocation4 + $0x288] sm:$0xff]
        %v3347 = vld [vmem:[#allocation4 + $0x290] sm:$0xff]
        %v3348 = vld [vmem:[#allocation4 + $0x298] sm:$0xff]
        %v3349 = vld [vmem:[#allocation4 + $0x2a0] sm:$0xff]
        %v3350 = vld [vmem:[#allocation4 + $0x2a8] sm:$0xff]
        %v3351 = vld [vmem:[#allocation4 + $0x2b0] sm:$0xff]
        %v3352 = vld [vmem:[#allocation4 + $0x2b8] sm:$0xff]
        %v3353 = vld [vmem:[#allocation4 + $0x2c0] sm:$0xff]
        %v3354 = vld [vmem:[#allocation4 + $0x2c8] sm:$0xff]
        %v3355 = vld [vmem:[#allocation4 + $0x2d0] sm:$0xff]
        %v3356 = vld [vmem:[#allocation4 + $0x2d8] sm:$0xff]
        %v3357 = vld [vmem:[#allocation4 + $0x2e0] sm:$0xff]
        %v3358 = vld [vmem:[#allocation4 + $0x2e8] sm:$0xff]
        %v3359 = vld [vmem:[#allocation4 + $0x2f0] sm:$0xff]
        %v3360 = vld [vmem:[#allocation4 + $0x2f8] sm:$0xff]
        %v3361 = vld [vmem:[%s4] sm:$0xff]
        %v3362 = vld [vmem:[%s4 + $0x8] sm:$0xff]
        %v3363 = vld [vmem:[%s4 + $0x10] sm:$0xff]
        %v3364 = vld [vmem:[%s4 + $0x18] sm:$0xff]
        %v3365 = vld [vmem:[%s4 + $0x20] sm:$0xff]
        %v3366 = vld [vmem:[%s4 + $0x28] sm:$0xff]
        %v3367 = vld [vmem:[%s4 + $0x30] sm:$0xff]
        %v3368 = vld [vmem:[%s4 + $0x38] sm:$0xff]
        %v3369 = vld [vmem:[%s4 + $0x40] sm:$0xff]
        %v3370 = vld [vmem:[%s4 + $0x48] sm:$0xff]
        %v3371 = vld [vmem:[%s4 + $0x50] sm:$0xff]
        %v3372 = vld [vmem:[%s4 + $0x58] sm:$0xff]
        %v3373 = vld [vmem:[%s4 + $0x60] sm:$0xff]
        %v3374 = vld [vmem:[%s4 + $0x68] sm:$0xff]
        %v3375 = vld [vmem:[%s4 + $0x70] sm:$0xff]
        %v3376 = vld [vmem:[%s4 + $0x78] sm:$0xff]
        %3378 = vset.pattern.permute.xlu0 0
        %3379 = vperm.xlu0 %3378, %v3361
        %v3380 = vpop.permute.xlu0 %3379
        %3383 = vset.pattern.permute.xlu0 0
        %3384 = vperm.xlu0 %3383, %v3362
        %v3385 = vpop.permute.xlu0 %3384
        %3388 = vset.pattern.permute.xlu0 0
        %3389 = vperm.xlu0 %3388, %v3363
        %v3390 = vpop.permute.xlu0 %3389
        %3393 = vset.pattern.permute.xlu0 0
        %3394 = vperm.xlu0 %3393, %v3364
        %v3395 = vpop.permute.xlu0 %3394
        %3398 = vset.pattern.permute.xlu0 0
        %3399 = vperm.xlu0 %3398, %v3365
        %v3400 = vpop.permute.xlu0 %3399
        %3403 = vset.pattern.permute.xlu0 0
        %3404 = vperm.xlu0 %3403, %v3366
        %v3405 = vpop.permute.xlu0 %3404
        %3408 = vset.pattern.permute.xlu0 0
        %3409 = vperm.xlu0 %3408, %v3367
        %v3410 = vpop.permute.xlu0 %3409
        %3413 = vset.pattern.permute.xlu0 0
        %3414 = vperm.xlu0 %3413, %v3368
        %v3415 = vpop.permute.xlu0 %3414
        %3418 = vset.pattern.permute.xlu0 0
        %3419 = vperm.xlu0 %3418, %v3369
        %v3420 = vpop.permute.xlu0 %3419
        %3423 = vset.pattern.permute.xlu0 0
        %3424 = vperm.xlu0 %3423, %v3370
        %v3425 = vpop.permute.xlu0 %3424
        %3428 = vset.pattern.permute.xlu0 0
        %3429 = vperm.xlu0 %3428, %v3371
        %v3430 = vpop.permute.xlu0 %3429
        %3433 = vset.pattern.permute.xlu0 0
        %3434 = vperm.xlu0 %3433, %v3372
        %v3435 = vpop.permute.xlu0 %3434
        %3438 = vset.pattern.permute.xlu0 0
        %3439 = vperm.xlu0 %3438, %v3373
        %v3440 = vpop.permute.xlu0 %3439
        %3443 = vset.pattern.permute.xlu0 0
        %3444 = vperm.xlu0 %3443, %v3374
        %v3445 = vpop.permute.xlu0 %3444
        %3448 = vset.pattern.permute.xlu0 0
        %3449 = vperm.xlu0 %3448, %v3375
        %v3450 = vpop.permute.xlu0 %3449
        %3453 = vset.pattern.permute.xlu0 0
        %3454 = vperm.xlu0 %3453, %v3376
        %v3455 = vpop.permute.xlu0 %3454
        %3457 = vmatprep.subr.mxu0 0.0
        %3458 = vmatpush1.msra.mxu0 %v3184
        %3459 = vmatprep.subr.mxu0 0.0
        %3460 = vmatpush1.msra.mxu0 %v3183
        %3461 = vmatprep.subr.mxu0 0.0
        %3462 = vmatpush1.msra.mxu0 %v3182
        %3463 = vmatprep.subr.mxu0 0.0
        %3464 = vmatpush1.msra.mxu0 %v3181
        %3465 = vmatprep.subr.mxu0 0.0
        %3466 = vmatpush1.msra.mxu0 %v3180
        %3467 = vmatprep.subr.mxu0 0.0
        %3468 = vmatpush1.msra.mxu0 %v3179
        %3469 = vmatprep.subr.mxu0 0.0
        %3470 = vmatpush1.msra.mxu0 %v3178
        %3471 = vmatprep.subr.mxu0 0.0
        %3472 = vmatpush1.msra.mxu0 %v3177
        %3473 = vmatprep.subr.mxu0 0.0
        %3474 = vmatpush1.msra.mxu0 %v3176
        %3475 = vmatprep.subr.mxu0 0.0
        %3476 = vmatpush1.msra.mxu0 %v3175
        %3477 = vmatprep.subr.mxu0 0.0
        %3478 = vmatpush1.msra.mxu0 %v3174
        %3479 = vmatprep.subr.mxu0 0.0
        %3480 = vmatpush1.msra.mxu0 %v3173
        %3481 = vmatprep.subr.mxu0 0.0
        %3482 = vmatpush1.msra.mxu0 %v3172
        %3483 = vmatprep.subr.mxu0 0.0
        %3484 = vmatpush1.msra.mxu0 %v3171
        %3485 = vmatprep.subr.mxu0 0.0
        %3486 = vmatpush1.msra.mxu0 %v3170
        %3487 = vmatprep.subr.mxu0 0.0
        %3488 = vmatpush1.msra.mxu0 %v3169
        %3489 = vmatprep.subr.mxu0 0.0
        %3490 = vmatpush2.msra.mxu0 %v3200
        %3491 = vmatprep.subr.mxu0 0.0
        %3492 = vmatpush2.msra.mxu0 %v3199
        %3493 = vmatprep.subr.mxu0 0.0
        %3494 = vmatpush2.msra.mxu0 %v3198
        %3495 = vmatprep.subr.mxu0 0.0
        %3496 = vmatpush2.msra.mxu0 %v3197
        %3497 = vmatprep.subr.mxu0 0.0
        %3498 = vmatpush2.msra.mxu0 %v3196
        %3499 = vmatprep.subr.mxu0 0.0
        %3500 = vmatpush2.msra.mxu0 %v3195
        %3501 = vmatprep.subr.mxu0 0.0
        %3502 = vmatpush2.msra.mxu0 %v3194
        %3503 = vmatprep.subr.mxu0 0.0
        %3504 = vmatpush2.msra.mxu0 %v3193
        %3505 = vmatprep.subr.mxu0 0.0
        %3506 = vmatpush2.msra.mxu0 %v3192
        %3507 = vmatprep.subr.mxu0 0.0
        %3508 = vmatpush2.msra.mxu0 %v3191
        %3509 = vmatprep.subr.mxu0 0.0
        %3510 = vmatpush2.msra.mxu0 %v3190
        %3511 = vmatprep.subr.mxu0 0.0
        %3512 = vmatpush2.msra.mxu0 %v3189
        %3513 = vmatprep.subr.mxu0 0.0
        %3514 = vmatpush2.msra.mxu0 %v3188
        %3515 = vmatprep.subr.mxu0 0.0
        %3516 = vmatpush2.msra.mxu0 %v3187
        %3517 = vmatprep.subr.mxu0 0.0
        %3518 = vmatpush2.msra.mxu0 %v3186
        %3519 = vmatprep.subr.mxu0 0.0
        %3520 = vmatpush2.msra.mxu0 %v3185
        %3521 = vmatprep.mubr.f32.mxu0 %v3266
        %3522 = vmatmul.mubr.f32.gmra.mxu0 %v3265
        %v3523 = vpop.f32.mrf.mxu0
        %v3524 = vadd.f32 %v3380, %v3523
        %v3525 = vpop.f32.mrf.mxu0
        %3526 = vmatprep.mubr.f32.mxu0 %v3272
        %3527 = vmatmul.mubr.f32.gmra.mxu0 %v3271
        %v3528 = vpop.f32.mrf.mxu0
        %v3529 = vadd.f32 %v3385, %v3528
        %v3530 = vpop.f32.mrf.mxu0
        %3531 = vmatprep.mubr.f32.mxu0 %v3278
        %3532 = vmatmul.mubr.f32.gmra.mxu0 %v3277
        %v3533 = vpop.f32.mrf.mxu0
        %v3534 = vadd.f32 %v3390, %v3533
        %v3535 = vpop.f32.mrf.mxu0
        %3536 = vmatprep.mubr.f32.mxu0 %v3284
        %3537 = vmatmul.mubr.f32.gmra.mxu0 %v3283
        %v3538 = vpop.f32.mrf.mxu0
        %v3539 = vadd.f32 %v3395, %v3538
        %v3540 = vpop.f32.mrf.mxu0
        %3541 = vmatprep.mubr.f32.mxu0 %v3290
        %3542 = vmatmul.mubr.f32.gmra.mxu0 %v3289
        %v3543 = vpop.f32.mrf.mxu0
        %v3544 = vadd.f32 %v3400, %v3543
        %v3545 = vpop.f32.mrf.mxu0
        %3546 = vmatprep.mubr.f32.mxu0 %v3296
        %3547 = vmatmul.mubr.f32.gmra.mxu0 %v3295
        %v3548 = vpop.f32.mrf.mxu0
        %v3549 = vadd.f32 %v3405, %v3548
        %v3550 = vpop.f32.mrf.mxu0
        %3551 = vmatprep.mubr.f32.mxu0 %v3302
        %3552 = vmatmul.mubr.f32.gmra.mxu0 %v3301
        %v3553 = vpop.f32.mrf.mxu0
        %v3554 = vadd.f32 %v3410, %v3553
        %v3555 = vpop.f32.mrf.mxu0
        %3556 = vmatprep.mubr.f32.mxu0 %v3308
        %3557 = vmatmul.mubr.f32.gmra.mxu0 %v3307
        %v3558 = vpop.f32.mrf.mxu0
        %v3559 = vadd.f32 %v3415, %v3558
        %v3560 = vpop.f32.mrf.mxu0
        %3561 = vmatprep.mubr.f32.mxu0 %v3314
        %3562 = vmatmul.mubr.f32.gmra.mxu0 %v3313
        %v3563 = vpop.f32.mrf.mxu0
        %v3564 = vadd.f32 %v3420, %v3563
        %v3565 = vpop.f32.mrf.mxu0
        %3566 = vmatprep.mubr.f32.mxu0 %v3320
        %3567 = vmatmul.mubr.f32.gmra.mxu0 %v3319
        %v3568 = vpop.f32.mrf.mxu0
        %v3569 = vadd.f32 %v3425, %v3568
        %v3570 = vpop.f32.mrf.mxu0
        %3571 = vmatprep.mubr.f32.mxu0 %v3326
        %3572 = vmatmul.mubr.f32.gmra.mxu0 %v3325
        %v3573 = vpop.f32.mrf.mxu0
        %v3574 = vadd.f32 %v3430, %v3573
        %v3575 = vpop.f32.mrf.mxu0
        %3576 = vmatprep.mubr.f32.mxu0 %v3332
        %3577 = vmatmul.mubr.f32.gmra.mxu0 %v3331
        %v3578 = vpop.f32.mrf.mxu0
        %v3579 = vadd.f32 %v3435, %v3578
        %v3580 = vpop.f32.mrf.mxu0
        %3581 = vmatprep.mubr.f32.mxu0 %v3338
        %3582 = vmatmul.mubr.f32.gmra.mxu0 %v3337
        %v3583 = vpop.f32.mrf.mxu0
        %v3584 = vadd.f32 %v3440, %v3583
        %v3585 = vpop.f32.mrf.mxu0
        %3586 = vmatprep.mubr.f32.mxu0 %v3344
        %3587 = vmatmul.mubr.f32.gmra.mxu0 %v3343
        %v3588 = vpop.f32.mrf.mxu0
        %v3589 = vadd.f32 %v3445, %v3588
        %v3590 = vpop.f32.mrf.mxu0
        %3591 = vmatprep.mubr.f32.mxu0 %v3350
        %3592 = vmatmul.mubr.f32.gmra.mxu0 %v3349
        %v3593 = vpop.f32.mrf.mxu0
        %v3594 = vadd.f32 %v3450, %v3593
        %v3595 = vpop.f32.mrf.mxu0
        %3596 = vmatprep.mubr.f32.mxu0 %v3356
        %3597 = vmatmul.mubr.f32.gmra.mxu0 %v3355
        %v3598 = vpop.f32.mrf.mxu0
        %v3599 = vadd.f32 %v3455, %v3598
        %v3600 = vpop.f32.mrf.mxu0
        %3601 = vdwg.mxu0
        %3602 = vmatprep.subr.mxu0 0.0
        %3603 = vmatpush1.msra.mxu0 %v3216
        %3604 = vmatprep.subr.mxu0 0.0
        %3605 = vmatpush1.msra.mxu0 %v3215
        %3606 = vmatprep.subr.mxu0 0.0
        %3607 = vmatpush1.msra.mxu0 %v3214
        %3608 = vmatprep.subr.mxu0 0.0
        %3609 = vmatpush1.msra.mxu0 %v3213
        %3610 = vmatprep.subr.mxu0 0.0
        %3611 = vmatpush1.msra.mxu0 %v3212
        %3612 = vmatprep.subr.mxu0 0.0
        %3613 = vmatpush1.msra.mxu0 %v3211
        %3614 = vmatprep.subr.mxu0 0.0
        %3615 = vmatpush1.msra.mxu0 %v3210
        %3616 = vmatprep.subr.mxu0 0.0
        %3617 = vmatpush1.msra.mxu0 %v3209
        %3618 = vmatprep.subr.mxu0 0.0
        %3619 = vmatpush1.msra.mxu0 %v3208
        %3620 = vmatprep.subr.mxu0 0.0
        %3621 = vmatpush1.msra.mxu0 %v3207
        %3622 = vmatprep.subr.mxu0 0.0
        %3623 = vmatpush1.msra.mxu0 %v3206
        %3624 = vmatprep.subr.mxu0 0.0
        %3625 = vmatpush1.msra.mxu0 %v3205
        %3626 = vmatprep.subr.mxu0 0.0
        %3627 = vmatpush1.msra.mxu0 %v3204
        %3628 = vmatprep.subr.mxu0 0.0
        %3629 = vmatpush1.msra.mxu0 %v3203
        %3630 = vmatprep.subr.mxu0 0.0
        %3631 = vmatpush1.msra.mxu0 %v3202
        %3632 = vmatprep.subr.mxu0 0.0
        %3633 = vmatpush1.msra.mxu0 %v3201
        %3634 = vmatprep.subr.mxu0 0.0
        %3635 = vmatpush2.msra.mxu0 %v3232
        %3636 = vmatprep.subr.mxu0 0.0
        %3637 = vmatpush2.msra.mxu0 %v3231
        %3638 = vmatprep.subr.mxu0 0.0
        %3639 = vmatpush2.msra.mxu0 %v3230
        %3640 = vmatprep.subr.mxu0 0.0
        %3641 = vmatpush2.msra.mxu0 %v3229
        %3642 = vmatprep.subr.mxu0 0.0
        %3643 = vmatpush2.msra.mxu0 %v3228
        %3644 = vmatprep.subr.mxu0 0.0
        %3645 = vmatpush2.msra.mxu0 %v3227
        %3646 = vmatprep.subr.mxu0 0.0
        %3647 = vmatpush2.msra.mxu0 %v3226
        %3648 = vmatprep.subr.mxu0 0.0
        %3649 = vmatpush2.msra.mxu0 %v3225
        %3650 = vmatprep.subr.mxu0 0.0
        %3651 = vmatpush2.msra.mxu0 %v3224
        %3652 = vmatprep.subr.mxu0 0.0
        %3653 = vmatpush2.msra.mxu0 %v3223
        %3654 = vmatprep.subr.mxu0 0.0
        %3655 = vmatpush2.msra.mxu0 %v3222
        %3656 = vmatprep.subr.mxu0 0.0
        %3657 = vmatpush2.msra.mxu0 %v3221
        %3658 = vmatprep.subr.mxu0 0.0
        %3659 = vmatpush2.msra.mxu0 %v3220
        %3660 = vmatprep.subr.mxu0 0.0
        %3661 = vmatpush2.msra.mxu0 %v3219
        %3662 = vmatprep.subr.mxu0 0.0
        %3663 = vmatpush2.msra.mxu0 %v3218
        %3664 = vmatprep.subr.mxu0 0.0
        %3665 = vmatpush2.msra.mxu0 %v3217
        %3666 = vmatprep.mubr.f32.mxu0 %v3268
        %3667 = vmatmul.mubr.f32.gmra.mxu0 %v3267
        %v3668 = vpop.f32.mrf.mxu0
        %v3669 = vadd.f32 %v3524, %v3668
        %v3670 = vpop.f32.mrf.mxu0
        %3671 = vmatprep.mubr.f32.mxu0 %v3274
        %3672 = vmatmul.mubr.f32.gmra.mxu0 %v3273
        %v3673 = vpop.f32.mrf.mxu0
        %v3674 = vadd.f32 %v3529, %v3673
        %v3675 = vpop.f32.mrf.mxu0
        %3676 = vmatprep.mubr.f32.mxu0 %v3280
        %3677 = vmatmul.mubr.f32.gmra.mxu0 %v3279
        %v3678 = vpop.f32.mrf.mxu0
        %v3679 = vadd.f32 %v3534, %v3678
        %v3680 = vpop.f32.mrf.mxu0
        %3681 = vmatprep.mubr.f32.mxu0 %v3286
        %3682 = vmatmul.mubr.f32.gmra.mxu0 %v3285
        %v3683 = vpop.f32.mrf.mxu0
        %v3684 = vadd.f32 %v3539, %v3683
        %v3685 = vpop.f32.mrf.mxu0
        %3686 = vmatprep.mubr.f32.mxu0 %v3292
        %3687 = vmatmul.mubr.f32.gmra.mxu0 %v3291
        %v3688 = vpop.f32.mrf.mxu0
        %v3689 = vadd.f32 %v3544, %v3688
        %v3690 = vpop.f32.mrf.mxu0
        %3691 = vmatprep.mubr.f32.mxu0 %v3298
        %3692 = vmatmul.mubr.f32.gmra.mxu0 %v3297
        %v3693 = vpop.f32.mrf.mxu0
        %v3694 = vadd.f32 %v3549, %v3693
        %v3695 = vpop.f32.mrf.mxu0
        %3696 = vmatprep.mubr.f32.mxu0 %v3304
        %3697 = vmatmul.mubr.f32.gmra.mxu0 %v3303
        %v3698 = vpop.f32.mrf.mxu0
        %v3699 = vadd.f32 %v3554, %v3698
        %v3700 = vpop.f32.mrf.mxu0
        %3701 = vmatprep.mubr.f32.mxu0 %v3310
        %3702 = vmatmul.mubr.f32.gmra.mxu0 %v3309
        %v3703 = vpop.f32.mrf.mxu0
        %v3704 = vadd.f32 %v3559, %v3703
        %v3705 = vpop.f32.mrf.mxu0
        %3706 = vmatprep.mubr.f32.mxu0 %v3316
        %3707 = vmatmul.mubr.f32.gmra.mxu0 %v3315
        %v3708 = vpop.f32.mrf.mxu0
        %v3709 = vadd.f32 %v3564, %v3708
        %v3710 = vpop.f32.mrf.mxu0
        %3711 = vmatprep.mubr.f32.mxu0 %v3322
        %3712 = vmatmul.mubr.f32.gmra.mxu0 %v3321
        %v3713 = vpop.f32.mrf.mxu0
        %v3714 = vadd.f32 %v3569, %v3713
        %v3715 = vpop.f32.mrf.mxu0
        %3716 = vmatprep.mubr.f32.mxu0 %v3328
        %3717 = vmatmul.mubr.f32.gmra.mxu0 %v3327
        %v3718 = vpop.f32.mrf.mxu0
        %v3719 = vadd.f32 %v3574, %v3718
        %v3720 = vpop.f32.mrf.mxu0
        %3721 = vmatprep.mubr.f32.mxu0 %v3334
        %3722 = vmatmul.mubr.f32.gmra.mxu0 %v3333
        %v3723 = vpop.f32.mrf.mxu0
        %v3724 = vadd.f32 %v3579, %v3723
        %v3725 = vpop.f32.mrf.mxu0
        %3726 = vmatprep.mubr.f32.mxu0 %v3340
        %3727 = vmatmul.mubr.f32.gmra.mxu0 %v3339
        %v3728 = vpop.f32.mrf.mxu0
        %v3729 = vadd.f32 %v3584, %v3728
        %v3730 = vpop.f32.mrf.mxu0
        %3731 = vmatprep.mubr.f32.mxu0 %v3346
        %3732 = vmatmul.mubr.f32.gmra.mxu0 %v3345
        %v3733 = vpop.f32.mrf.mxu0
        %v3734 = vadd.f32 %v3589, %v3733
        %v3735 = vpop.f32.mrf.mxu0
        %3736 = vmatprep.mubr.f32.mxu0 %v3352
        %3737 = vmatmul.mubr.f32.gmra.mxu0 %v3351
        %v3738 = vpop.f32.mrf.mxu0
        %v3739 = vadd.f32 %v3594, %v3738
        %v3740 = vpop.f32.mrf.mxu0
        %3741 = vmatprep.mubr.f32.mxu0 %v3358
        %3742 = vmatmul.mubr.f32.gmra.mxu0 %v3357
        %v3743 = vpop.f32.mrf.mxu0
        %v3744 = vadd.f32 %v3599, %v3743
        %v3745 = vpop.f32.mrf.mxu0
        %3746 = vdwg.mxu0
        %3747 = vmatprep.subr.mxu0 0.0
        %3748 = vmatpush1.msra.mxu0 %v3248
        %3749 = vmatprep.subr.mxu0 0.0
        %3750 = vmatpush1.msra.mxu0 %v3247
        %3751 = vmatprep.subr.mxu0 0.0
        %3752 = vmatpush1.msra.mxu0 %v3246
        %3753 = vmatprep.subr.mxu0 0.0
        %3754 = vmatpush1.msra.mxu0 %v3245
        %3755 = vmatprep.subr.mxu0 0.0
        %3756 = vmatpush1.msra.mxu0 %v3244
        %3757 = vmatprep.subr.mxu0 0.0
        %3758 = vmatpush1.msra.mxu0 %v3243
        %3759 = vmatprep.subr.mxu0 0.0
        %3760 = vmatpush1.msra.mxu0 %v3242
        %3761 = vmatprep.subr.mxu0 0.0
        %3762 = vmatpush1.msra.mxu0 %v3241
        %3763 = vmatprep.subr.mxu0 0.0
        %3764 = vmatpush1.msra.mxu0 %v3240
        %3765 = vmatprep.subr.mxu0 0.0
        %3766 = vmatpush1.msra.mxu0 %v3239
        %3767 = vmatprep.subr.mxu0 0.0
        %3768 = vmatpush1.msra.mxu0 %v3238
        %3769 = vmatprep.subr.mxu0 0.0
        %3770 = vmatpush1.msra.mxu0 %v3237
        %3771 = vmatprep.subr.mxu0 0.0
        %3772 = vmatpush1.msra.mxu0 %v3236
        %3773 = vmatprep.subr.mxu0 0.0
        %3774 = vmatpush1.msra.mxu0 %v3235
        %3775 = vmatprep.subr.mxu0 0.0
        %3776 = vmatpush1.msra.mxu0 %v3234
        %3777 = vmatprep.subr.mxu0 0.0
        %3778 = vmatpush1.msra.mxu0 %v3233
        %3779 = vmatprep.subr.mxu0 0.0
        %3780 = vmatpush2.msra.mxu0 %v3264
        %3781 = vmatprep.subr.mxu0 0.0
        %3782 = vmatpush2.msra.mxu0 %v3263
        %3783 = vmatprep.subr.mxu0 0.0
        %3784 = vmatpush2.msra.mxu0 %v3262
        %3785 = vmatprep.subr.mxu0 0.0
        %3786 = vmatpush2.msra.mxu0 %v3261
        %3787 = vmatprep.subr.mxu0 0.0
        %3788 = vmatpush2.msra.mxu0 %v3260
        %3789 = vmatprep.subr.mxu0 0.0
        %3790 = vmatpush2.msra.mxu0 %v3259
        %3791 = vmatprep.subr.mxu0 0.0
        %3792 = vmatpush2.msra.mxu0 %v3258
        %3793 = vmatprep.subr.mxu0 0.0
        %3794 = vmatpush2.msra.mxu0 %v3257
        %3795 = vmatprep.subr.mxu0 0.0
        %3796 = vmatpush2.msra.mxu0 %v3256
        %3797 = vmatprep.subr.mxu0 0.0
        %3798 = vmatpush2.msra.mxu0 %v3255
        %3799 = vmatprep.subr.mxu0 0.0
        %3800 = vmatpush2.msra.mxu0 %v3254
        %3801 = vmatprep.subr.mxu0 0.0
        %3802 = vmatpush2.msra.mxu0 %v3253
        %3803 = vmatprep.subr.mxu0 0.0
        %3804 = vmatpush2.msra.mxu0 %v3252
        %3805 = vmatprep.subr.mxu0 0.0
        %3806 = vmatpush2.msra.mxu0 %v3251
        %3807 = vmatprep.subr.mxu0 0.0
        %3808 = vmatpush2.msra.mxu0 %v3250
        %3809 = vmatprep.subr.mxu0 0.0
        %3810 = vmatpush2.msra.mxu0 %v3249
        %3811 = vmatprep.mubr.f32.mxu0 %v3270
        %3812 = vmatmul.mubr.f32.gmra.mxu0 %v3269
        %v3813 = vpop.f32.mrf.mxu0
        %v3814 = vadd.f32 %v3669, %v3813
        %v3815 = vpop.f32.mrf.mxu0
        %3816 = vmatprep.mubr.f32.mxu0 %v3276
        %3817 = vmatmul.mubr.f32.gmra.mxu0 %v3275
        %v3818 = vpop.f32.mrf.mxu0
        %v3819 = vadd.f32 %v3674, %v3818
        %v3820 = vpop.f32.mrf.mxu0
        %3821 = vmatprep.mubr.f32.mxu0 %v3282
        %3822 = vmatmul.mubr.f32.gmra.mxu0 %v3281
        %v3823 = vpop.f32.mrf.mxu0
        %v3824 = vadd.f32 %v3679, %v3823
        %v3825 = vpop.f32.mrf.mxu0
        %3826 = vmatprep.mubr.f32.mxu0 %v3288
        %3827 = vmatmul.mubr.f32.gmra.mxu0 %v3287
        %v3828 = vpop.f32.mrf.mxu0
        %v3829 = vadd.f32 %v3684, %v3828
        %v3830 = vpop.f32.mrf.mxu0
        %3831 = vmatprep.mubr.f32.mxu0 %v3294
        %3832 = vmatmul.mubr.f32.gmra.mxu0 %v3293
        %v3833 = vpop.f32.mrf.mxu0
        %v3834 = vadd.f32 %v3689, %v3833
        %v3835 = vpop.f32.mrf.mxu0
        %3836 = vmatprep.mubr.f32.mxu0 %v3300
        %3837 = vmatmul.mubr.f32.gmra.mxu0 %v3299
        %v3838 = vpop.f32.mrf.mxu0
        %v3839 = vadd.f32 %v3694, %v3838
        %v3840 = vpop.f32.mrf.mxu0
        %3841 = vmatprep.mubr.f32.mxu0 %v3306
        %3842 = vmatmul.mubr.f32.gmra.mxu0 %v3305
        %v3843 = vpop.f32.mrf.mxu0
        %v3844 = vadd.f32 %v3699, %v3843
        %v3845 = vpop.f32.mrf.mxu0
        %3846 = vmatprep.mubr.f32.mxu0 %v3312
        %3847 = vmatmul.mubr.f32.gmra.mxu0 %v3311
        %v3848 = vpop.f32.mrf.mxu0
        %v3849 = vadd.f32 %v3704, %v3848
        %v3850 = vpop.f32.mrf.mxu0
        %3851 = vmatprep.mubr.f32.mxu0 %v3318
        %3852 = vmatmul.mubr.f32.gmra.mxu0 %v3317
        %v3853 = vpop.f32.mrf.mxu0
        %v3854 = vadd.f32 %v3709, %v3853
        %v3855 = vpop.f32.mrf.mxu0
        %3856 = vmatprep.mubr.f32.mxu0 %v3324
        %3857 = vmatmul.mubr.f32.gmra.mxu0 %v3323
        %v3858 = vpop.f32.mrf.mxu0
        %v3859 = vadd.f32 %v3714, %v3858
        %v3860 = vpop.f32.mrf.mxu0
        %3861 = vmatprep.mubr.f32.mxu0 %v3330
        %3862 = vmatmul.mubr.f32.gmra.mxu0 %v3329
        %v3863 = vpop.f32.mrf.mxu0
        %v3864 = vadd.f32 %v3719, %v3863
        %v3865 = vpop.f32.mrf.mxu0
        %3866 = vmatprep.mubr.f32.mxu0 %v3336
        %3867 = vmatmul.mubr.f32.gmra.mxu0 %v3335
        %v3868 = vpop.f32.mrf.mxu0
        %v3869 = vadd.f32 %v3724, %v3868
        %v3870 = vpop.f32.mrf.mxu0
        %3871 = vmatprep.mubr.f32.mxu0 %v3342
        %3872 = vmatmul.mubr.f32.gmra.mxu0 %v3341
        %v3873 = vpop.f32.mrf.mxu0
        %v3874 = vadd.f32 %v3729, %v3873
        %v3875 = vpop.f32.mrf.mxu0
        %3876 = vmatprep.mubr.f32.mxu0 %v3348
        %3877 = vmatmul.mubr.f32.gmra.mxu0 %v3347
        %v3878 = vpop.f32.mrf.mxu0
        %v3879 = vadd.f32 %v3734, %v3878
        %v3880 = vpop.f32.mrf.mxu0
        %3881 = vmatprep.mubr.f32.mxu0 %v3354
        %3882 = vmatmul.mubr.f32.gmra.mxu0 %v3353
        %v3883 = vpop.f32.mrf.mxu0
        %v3884 = vadd.f32 %v3739, %v3883
        %v3885 = vpop.f32.mrf.mxu0
        %3886 = vmatprep.mubr.f32.mxu0 %v3360
        %3887 = vmatmul.mubr.f32.gmra.mxu0 %v3359
        %v3888 = vpop.f32.mrf.mxu0
        %v3889 = vadd.f32 %v3744, %v3888
        %v3890 = vpop.f32.mrf.mxu0
        %3891 = vdwg.mxu0
        %vm3892 = vcmask 523264
        %3893 = vst.msk [vmem:[%s285] sm:$0xff] %vm3892, %v3814
        %3894 = vst.msk [vmem:[%s285 + $0x8] sm:$0xff] %vm3892, %v3819
        %3895 = vst.msk [vmem:[%s285 + $0x10] sm:$0xff] %vm3892, %v3824
        %3896 = vst.msk [vmem:[%s285 + $0x18] sm:$0xff] %vm3892, %v3829
        %3897 = vst.msk [vmem:[%s285 + $0x20] sm:$0xff] %vm3892, %v3834
        %3898 = vst.msk [vmem:[%s285 + $0x28] sm:$0xff] %vm3892, %v3839
        %3899 = vst.msk [vmem:[%s285 + $0x30] sm:$0xff] %vm3892, %v3844
        %3900 = vst.msk [vmem:[%s285 + $0x38] sm:$0xff] %vm3892, %v3849
        %3901 = vst.msk [vmem:[%s285 + $0x40] sm:$0xff] %vm3892, %v3854
        %3902 = vst.msk [vmem:[%s285 + $0x48] sm:$0xff] %vm3892, %v3859
        %3903 = vst.msk [vmem:[%s285 + $0x50] sm:$0xff] %vm3892, %v3864
        %3904 = vst.msk [vmem:[%s285 + $0x58] sm:$0xff] %vm3892, %v3869
        %3905 = vst.msk [vmem:[%s285 + $0x60] sm:$0xff] %vm3892, %v3874
        %3906 = vst.msk [vmem:[%s285 + $0x68] sm:$0xff] %vm3892, %v3879
        %3907 = vst.msk [vmem:[%s285 + $0x70] sm:$0xff] %vm3892, %v3884
        %3908 = vst.msk [vmem:[%s285 + $0x78] sm:$0xff] %vm3892, %v3889
        %p3909 = scmp.lt.s32.totalorder %s22, 1
        %s3910 = scalar_select %p3909, %s22, 1
        %p3911 = scmp.lt.s32.totalorder %s23, 0
        %s3912 = scalar_select %p3911, %s23, 0
        %s3913 = smul.addr %s3910, 16
        %s3914 = sadd.s32 %s3912, %s3913
        %s3915 = smul.addr %s3914, 8
        %s3916 = scalar_lea.vmem %s5, %s3915
        // Predicated region
        $region49: #{tpu_custom_call.1} parent=39 // pred_check
          %p3917 = pneg %p162
        $region50: #{tpu_custom_call.1} parent=39 // pred_check_branch
          %3919 = sbr.rel (%p3917) target = $region52
        $region51: #{tpu_custom_call.1} parent=39 // pred_region
          _
        $region52: #{tpu_custom_call.1} parent=39 // pred_fallthru
          _
      $region40: #{tpu_custom_call.1} parent=5 // pred_fallthru
        _
      %p3920 = scmp.le.s32.totalorder 2, %s13
      // Predicated region
      $region53: #{tpu_custom_call.1} parent=5 // pred_check
        %p3921 = pneg %p3920
      $region54: #{tpu_custom_call.1} parent=5 // pred_check_branch
        %3923 = sbr.rel (%p3921) target = $region56
      $region55: #{tpu_custom_call.1} parent=5 // pred_region
        %s3924 = ssub.s32 %s13, 2
        // Predicated region
        $region57: #{tpu_custom_call.1} parent=55 // pred_check
          %p3925 = pneg %p168
        $region58: #{tpu_custom_call.1} parent=55 // pred_check_branch
          %3927 = sbr.rel (%p3925) target = $region60
        $region59: #{tpu_custom_call.1} parent=55 // pred_region
          %p3928 = scmp.lt.s32.totalorder %s24, 1
          %s3929 = scalar_select %p3928, %s24, 1
          %p3930 = scmp.lt.s32.totalorder %s25, 0
          %s3931 = scalar_select %p3930, %s25, 0
          %s3932 = smul.addr %s3929, 16
          %s3933 = sadd.s32 %s3931, %s3932
          %s3934 = smul.addr %s3933, 8
          %s3935 = scalar_lea.vmem %s5, %s3934
        $region60: #{tpu_custom_call.1} parent=55 // pred_fallthru
          _
      $region56: #{tpu_custom_call.1} parent=5 // pred_fallthru
        _
    $region6: #{tpu_custom_call.1} parent=1 // loop_footer
      %s17 = sadd.s32 1, %s13
    $region7: #{tpu_custom_call.1} parent=1 // loop_footer_branch
      %12 = sbr.rel target = $region3
    $region8: #{tpu_custom_call.1} parent=1 // loop_exit
      _
    %3936 = vsyncpa [#allocation3], 1
    %s3937 = scalar_lea.sflag [#allocation3], 1
    %3938 = vsyncpa %s3937, 1
    %3939 = vsyncpa [#allocation5], 1

</llo_original>
